<compile_context>
chip_gen: v7x
topology: tpu7x:2x2x1
jax: 0.10.0
libtpu: 0.0.40
codegen_flags: <defaults>
</compile_context>

<pallas_src>
import functools
import math

import jax
import jax.numpy as jnp
from jax import lax
from jax.experimental import pallas as pl
from jax.experimental.pallas import tpu as pltpu


# --------------------------------------------------------------------------
# Fused forward-pass kernel (single batch element, L rows resident in VMEM)
# --------------------------------------------------------------------------

def _fused_forward_kernel(x_ref, emb_w_ref, emb_b_ref,
                          wq_ref, bq_ref, wk_ref, bk_ref, wv_ref, bv_ref,
                          wo_ref, bo_ref, ln1w_ref, ln1b_ref,
                          w1_ref, b1_ref, w2_ref, b2_ref,
                          ln2w_ref, ln2b_ref, fc_w_ref, fc_b_ref,
                          o_ref, *, num_layers, num_heads, eps):
    """Entire TransformerModel forward for the single kept batch element.

    x_ref                : (L, input_dim)
    wq/wk/wv_ref         : (num_layers*H, E, dh)   per-head projections (in, out)
    bq/bk/bv_ref         : (num_layers*H, 1, dh)
    wo_ref               : (num_layers*H, dh, E)   per-head out-projection rows
    other per-layer refs : stacked along a leading num_layers axis
    fc_w/fc_b_ref        : (E, 128) / (1, 128)     lane-padded head (col 0 real)
    o_ref                : (L, 128)                lane-padded output
    """
    # ---- embedding (nn.Linear over the feature dim) ----
    h = jnp.dot(x_ref[...], emb_w_ref[...],
                preferred_element_type=jnp.float32) + emb_b_ref[...]
    L, E = h.shape
    dh = E // num_heads
    scale = 1.0 / math.sqrt(dh)

    # ---- encoder layers (static unroll; weights indexed by static ids) ----
    for l in range(num_layers):
        # multi-head self-attention: each head is independent 2-D matmuls,
        # out-projection accumulated over heads (== concat(ctx) @ Wo).
        attn = bo_ref[l]                                       # (1, E) -> broadcast
        for hh in range(num_heads):                            # static unroll
            idx = l * num_heads + hh
            qh = (jnp.dot(h, wq_ref[idx], preferred_element_type=jnp.float32)
                  + bq_ref[idx]) * scale                       # (L, dh)
            kh = jnp.dot(h, wk_ref[idx],
                         preferred_element_type=jnp.float32) + bk_ref[idx]
            vh = jnp.dot(h, wv_ref[idx],
                         preferred_element_type=jnp.float32) + bv_ref[idx]
            s = lax.dot_general(qh, kh, (((1,), (1,)), ((), ())),
                                preferred_element_type=jnp.float32)   # (L, L)
            s = s - jnp.max(s, axis=-1, keepdims=True)
            p = jnp.exp(s)
            denom = jnp.sum(p, axis=-1, keepdims=True)
            p = p * pl.reciprocal(denom, approx=True)          # EUP, not VALU divide
            ctx_h = jnp.dot(p, vh, preferred_element_type=jnp.float32)   # (L, dh)
            attn = attn + jnp.dot(ctx_h, wo_ref[idx],
                                  preferred_element_type=jnp.float32)    # (L, E)

        # residual + LayerNorm 1 (post-norm, PyTorch default norm_first=False)
        y = h + attn
        mu = jnp.mean(y, axis=-1, keepdims=True)
        var = jnp.mean((y - mu) ** 2, axis=-1, keepdims=True)
        y = (y - mu) * lax.rsqrt(var + eps) * ln1w_ref[l] + ln1b_ref[l]

        # feed-forward (ReLU)
        hid = jnp.dot(y, w1_ref[l], preferred_element_type=jnp.float32) + b1_ref[l]
        hid = jnp.maximum(hid, 0.0)
        ff = jnp.dot(hid, w2_ref[l], preferred_element_type=jnp.float32) + b2_ref[l]

        # residual + LayerNorm 2
        z = y + ff
        mu2 = jnp.mean(z, axis=-1, keepdims=True)
        var2 = jnp.mean((z - mu2) ** 2, axis=-1, keepdims=True)
        h = (z - mu2) * lax.rsqrt(var2 + eps) * ln2w_ref[l] + ln2b_ref[l]

    # ---- fc head, only on the kept rows; lane-padded to 128 for dense store ----
    out = jnp.dot(h, fc_w_ref[...],
                  preferred_element_type=jnp.float32) + fc_b_ref[...]
    o_ref[...] = out.astype(o_ref.dtype)


def _full_spec(arr):
    nd = arr.ndim
    return pl.BlockSpec(arr.shape, lambda nd=nd: (0,) * nd)


# --------------------------------------------------------------------------
# Model wrapper + deterministic parameter init
# --------------------------------------------------------------------------

def init_params(key, input_dim, embed_dim, num_heads, ff_dim, num_layers):
    """Weight matrices stored as (in, out) (PyTorch W transposed); per-layer
    tensors pre-stacked along a leading num_layers axis."""
    del num_heads
    ks = list(jax.random.split(key, 16))

    def w(shape, scale=0.05):
        return scale * jax.random.normal(ks.pop(), shape, dtype=jnp.float32)

    E, F, Lr = embed_dim, ff_dim, num_layers
    return {
        "emb_w": w((input_dim, E)),
        "emb_b": w((1, E)),
        "fc_w": w((E, 1)),
        "fc_b": w((1, 1)),
        "layers": {
            "wq": w((Lr, E, E)), "bq": w((Lr, 1, E)),
            "wk": w((Lr, E, E)), "bk": w((Lr, 1, E)),
            "wv": w((Lr, E, E)), "bv": w((Lr, 1, E)),
            "wo": w((Lr, E, E)), "bo": w((Lr, 1, E)),
            "ln1w": jnp.ones((Lr, 1, E), jnp.float32),
            "ln1b": jnp.zeros((Lr, 1, E), jnp.float32),
            "w1": w((Lr, E, F)), "b1": w((Lr, 1, F)),
            "w2": w((Lr, F, E)), "b2": w((Lr, 1, E)),
            "ln2w": jnp.ones((Lr, 1, E), jnp.float32),
            "ln2b": jnp.zeros((Lr, 1, E), jnp.float32),
        },
    }


def transformer_model_forward(x, params, *, num_heads):
    """x: (L, N, input_dim) -> (L, 1), matching the PyTorch module (eval mode)."""
    L, N, d_in = x.shape
    E = params["emb_w"].shape[1]
    LANES = 128

    lp = params["layers"]
    num_layers = lp["wq"].shape[0]
    dh = E // num_heads

    # Only batch element n = N-1 is consumed by the head (x[:, -1, :] in the
    # reference); batch elements never interact (attention is over the seq axis
    # for each n, LN/FFN are per-row), so slice it out before the kernel.
    x_last = x[:, N - 1, :]                                    # (L, d_in)

    # Wrapper-side layout plumbing: split the projection weights per head so
    # the kernel never lane-slices activations or concatenates head contexts.
    def split_qkv_w(w):    # (Lr, E, E) -> (Lr*H, E, dh)
        return (w.reshape(num_layers, E, num_heads, dh)
                 .transpose(0, 2, 1, 3)
                 .reshape(num_layers * num_heads, E, dh))

    def split_qkv_b(b):    # (Lr, 1, E) -> (Lr*H, 1, dh)
        return (b.reshape(num_layers, 1, num_heads, dh)
                 .transpose(0, 2, 1, 3)
                 .reshape(num_layers * num_heads, 1, dh))

    wo_h = lp["wo"].reshape(num_layers * num_heads, dh, E)     # row-blocks of Wo

    # lane-pad the (E, 1) fc head so the kernel's output store is lane-dense
    fc_w_pad = jnp.zeros((E, LANES), jnp.float32).at[:, :1].set(params["fc_w"])
    fc_b_pad = jnp.zeros((1, LANES), jnp.float32).at[:, :1].set(params["fc_b"])

    args = [x_last, params["emb_w"], params["emb_b"],
            split_qkv_w(lp["wq"]), split_qkv_b(lp["bq"]),
            split_qkv_w(lp["wk"]), split_qkv_b(lp["bk"]),
            split_qkv_w(lp["wv"]), split_qkv_b(lp["bv"]),
            wo_h, lp["bo"], lp["ln1w"], lp["ln1b"],
            lp["w1"], lp["b1"], lp["w2"], lp["b2"],
            lp["ln2w"], lp["ln2b"], fc_w_pad, fc_b_pad]

    kernel = functools.partial(_fused_forward_kernel,
                               num_layers=num_layers, num_heads=num_heads,
                               eps=1e-5)

    out_full = pl.pallas_call(
        kernel,
        out_shape=jax.ShapeDtypeStruct((L, LANES), jnp.float32),
        in_specs=[_full_spec(a) for a in args],
        out_specs=pl.BlockSpec((L, LANES), lambda: (0, 0)),
        compiler_params=pltpu.CompilerParams(
            vmem_limit_bytes=32 * 1024 * 1024),
    )(*args)

    # original: fc_out(x[:, -1, :]) -> (L, 1); real output lives in column 0
    return out_full[:, :1]


# --------------------------------------------------------------------------

if __name__ == "__main__":
    input_dim, embed_dim, num_heads, ff_dim, num_layers = 16, 32, 4, 64, 2
    L, N = 2, 8                       # x: (L=2, N=8, input_dim=16)

    key = jax.random.PRNGKey(0)
    kx, kp = jax.random.split(key)
    x = jax.random.normal(kx, (L, N, input_dim), dtype=jnp.float32)
    params = init_params(kp, input_dim, embed_dim, num_heads, ff_dim, num_layers)

    fwd = jax.jit(functools.partial(transformer_model_forward, num_heads=num_heads))
    out = fwd(x, params)
    jax.block_until_ready(out)

    assert out.shape == (L, 1), out.shape
    assert bool(jnp.all(jnp.isfinite(out)))
    print("KERNEL_OK")
</pallas_src>

<mosaic_0001>
module attributes {stable_mosaic.version = 11 : i64} {
  func.func @_fused_forward_kernel(%arg0: memref<2x16xf32, #tpu.memory_space<vmem>>, %arg1: memref<16x32xf32, #tpu.memory_space<vmem>>, %arg2: memref<1x32xf32, #tpu.memory_space<vmem>>, %arg3: memref<8x32x8xf32, #tpu.memory_space<vmem>>, %arg4: memref<8x1x8xf32, #tpu.memory_space<vmem>>, %arg5: memref<8x32x8xf32, #tpu.memory_space<vmem>>, %arg6: memref<8x1x8xf32, #tpu.memory_space<vmem>>, %arg7: memref<8x32x8xf32, #tpu.memory_space<vmem>>, %arg8: memref<8x1x8xf32, #tpu.memory_space<vmem>>, %arg9: memref<8x8x32xf32, #tpu.memory_space<vmem>>, %arg10: memref<2x1x32xf32, #tpu.memory_space<vmem>>, %arg11: memref<2x1x32xf32, #tpu.memory_space<vmem>>, %arg12: memref<2x1x32xf32, #tpu.memory_space<vmem>>, %arg13: memref<2x32x64xf32, #tpu.memory_space<vmem>>, %arg14: memref<2x1x64xf32, #tpu.memory_space<vmem>>, %arg15: memref<2x64x32xf32, #tpu.memory_space<vmem>>, %arg16: memref<2x1x32xf32, #tpu.memory_space<vmem>>, %arg17: memref<2x1x32xf32, #tpu.memory_space<vmem>>, %arg18: memref<2x1x32xf32, #tpu.memory_space<vmem>>, %arg19: memref<32x128xf32, #tpu.memory_space<vmem>>, %arg20: memref<1x128xf32, #tpu.memory_space<vmem>>, %arg21: memref<2x128xf32, #tpu.memory_space<vmem>>) attributes {dimension_semantics = [], scalar_prefetch = 0 : i64, scratch_operands = 0 : i64, tpu.core_type = #tpu.core_type<tc>} {
    %c0 = arith.constant 0 : index
    %c0_0 = arith.constant 0 : index
    %0 = vector.load %arg0[%c0, %c0_0] : memref<2x16xf32, #tpu.memory_space<vmem>>, vector<2x16xf32>
    %c0_1 = arith.constant 0 : index
    %c0_2 = arith.constant 0 : index
    %1 = vector.load %arg1[%c0_1, %c0_2] : memref<16x32xf32, #tpu.memory_space<vmem>>, vector<16x32xf32>
    %cst = arith.constant dense<0.000000e+00> : vector<2x32xf32>
    %2 = tpu.matmul %0, %1, %cst {dimension_numbers = #tpu.dot_dimension_numbers<[1], [0], [0], [1], [0, 0, 1, 1], [], []>} : vector<2x16xf32>, vector<16x32xf32>, vector<2x32xf32> -> vector<2x32xf32>
    %c0_3 = arith.constant 0 : index
    %c0_4 = arith.constant 0 : index
    %3 = vector.load %arg2[%c0_3, %c0_4] : memref<1x32xf32, #tpu.memory_space<vmem>>, vector<1x32xf32>
    %4 = vector.broadcast %3 : vector<1x32xf32> to vector<2x32xf32>
    %5 = arith.addf %2, %4 : vector<2x32xf32>
    %c0_5 = arith.constant 0 : index
    %c0_6 = arith.constant 0 : index
    %c0_7 = arith.constant 0 : index
    %6 = vector.load %arg10[%c0_5, %c0_6, %c0_7] : memref<2x1x32xf32, #tpu.memory_space<vmem>>, vector<1x1x32xf32>
    %7 = vector.shape_cast %6 : vector<1x1x32xf32> to vector<1x32xf32>
    %c0_8 = arith.constant 0 : index
    %c0_9 = arith.constant 0 : index
    %c0_10 = arith.constant 0 : index
    %8 = vector.load %arg3[%c0_8, %c0_9, %c0_10] : memref<8x32x8xf32, #tpu.memory_space<vmem>>, vector<1x32x8xf32>
    %9 = vector.shape_cast %8 : vector<1x32x8xf32> to vector<32x8xf32>
    %cst_11 = arith.constant dense<0.000000e+00> : vector<2x8xf32>
    %10 = tpu.matmul %5, %9, %cst_11 {dimension_numbers = #tpu.dot_dimension_numbers<[1], [0], [0], [1], [0, 0, 1, 1], [], []>} : vector<2x32xf32>, vector<32x8xf32>, vector<2x8xf32> -> vector<2x8xf32>
    %c0_12 = arith.constant 0 : index
    %c0_13 = arith.constant 0 : index
    %c0_14 = arith.constant 0 : index
    %11 = vector.load %arg4[%c0_12, %c0_13, %c0_14] : memref<8x1x8xf32, #tpu.memory_space<vmem>>, vector<1x1x8xf32>
    %12 = vector.shape_cast %11 : vector<1x1x8xf32> to vector<1x8xf32>
    %13 = vector.broadcast %12 : vector<1x8xf32> to vector<2x8xf32>
    %14 = arith.addf %10, %13 : vector<2x8xf32>
    %cst_15 = arith.constant 0.353553385 : f32
    %15 = vector.broadcast %cst_15 : f32 to vector<2x8xf32>
    %16 = arith.mulf %14, %15 : vector<2x8xf32>
    %c0_16 = arith.constant 0 : index
    %c0_17 = arith.constant 0 : index
    %c0_18 = arith.constant 0 : index
    %17 = vector.load %arg5[%c0_16, %c0_17, %c0_18] : memref<8x32x8xf32, #tpu.memory_space<vmem>>, vector<1x32x8xf32>
    %18 = vector.shape_cast %17 : vector<1x32x8xf32> to vector<32x8xf32>
    %cst_19 = arith.constant dense<0.000000e+00> : vector<2x8xf32>
    %19 = tpu.matmul %5, %18, %cst_19 {dimension_numbers = #tpu.dot_dimension_numbers<[1], [0], [0], [1], [0, 0, 1, 1], [], []>} : vector<2x32xf32>, vector<32x8xf32>, vector<2x8xf32> -> vector<2x8xf32>
    %c0_20 = arith.constant 0 : index
    %c0_21 = arith.constant 0 : index
    %c0_22 = arith.constant 0 : index
    %20 = vector.load %arg6[%c0_20, %c0_21, %c0_22] : memref<8x1x8xf32, #tpu.memory_space<vmem>>, vector<1x1x8xf32>
    %21 = vector.shape_cast %20 : vector<1x1x8xf32> to vector<1x8xf32>
    %22 = vector.broadcast %21 : vector<1x8xf32> to vector<2x8xf32>
    %23 = arith.addf %19, %22 : vector<2x8xf32>
    %c0_23 = arith.constant 0 : index
    %c0_24 = arith.constant 0 : index
    %c0_25 = arith.constant 0 : index
    %24 = vector.load %arg7[%c0_23, %c0_24, %c0_25] : memref<8x32x8xf32, #tpu.memory_space<vmem>>, vector<1x32x8xf32>
    %25 = vector.shape_cast %24 : vector<1x32x8xf32> to vector<32x8xf32>
    %cst_26 = arith.constant dense<0.000000e+00> : vector<2x8xf32>
    %26 = tpu.matmul %5, %25, %cst_26 {dimension_numbers = #tpu.dot_dimension_numbers<[1], [0], [0], [1], [0, 0, 1, 1], [], []>} : vector<2x32xf32>, vector<32x8xf32>, vector<2x8xf32> -> vector<2x8xf32>
    %c0_27 = arith.constant 0 : index
    %c0_28 = arith.constant 0 : index
    %c0_29 = arith.constant 0 : index
    %27 = vector.load %arg8[%c0_27, %c0_28, %c0_29] : memref<8x1x8xf32, #tpu.memory_space<vmem>>, vector<1x1x8xf32>
    %28 = vector.shape_cast %27 : vector<1x1x8xf32> to vector<1x8xf32>
    %29 = vector.broadcast %28 : vector<1x8xf32> to vector<2x8xf32>
    %30 = arith.addf %26, %29 : vector<2x8xf32>
    %cst_30 = arith.constant dense<0.000000e+00> : vector<2x2xf32>
    %31 = tpu.matmul %16, %23, %cst_30 {dimension_numbers = #tpu.dot_dimension_numbers<[1], [1], [0], [0], [0, 0, 1, 0], [], []>} : vector<2x8xf32>, vector<2x8xf32>, vector<2x2xf32> -> vector<2x2xf32>
    %cst_31 = arith.constant dense<0xFF800000> : vector<2xf32>
    %32 = vector.multi_reduction <maximumf>, %31, %cst_31 [1] : vector<2x2xf32> to vector<2xf32>
    %33 = vector.shape_cast %32 : vector<2xf32> to vector<2x1xf32>
    %34 = vector.broadcast %33 : vector<2x1xf32> to vector<2x2xf32>
    %35 = arith.subf %31, %34 : vector<2x2xf32>
    %36 = math.exp %35 : vector<2x2xf32>
    %cst_32 = arith.constant dense<0.000000e+00> : vector<2xf32>
    %37 = vector.multi_reduction <add>, %36, %cst_32 [1] : vector<2x2xf32> to vector<2xf32>
    %38 = vector.shape_cast %37 : vector<2xf32> to vector<2x1xf32>
    %39 = tpu.reciprocal %38 {approx = true} : vector<2x1xf32> -> vector<2x1xf32>
    %40 = vector.broadcast %39 : vector<2x1xf32> to vector<2x2xf32>
    %41 = arith.mulf %36, %40 : vector<2x2xf32>
    %cst_33 = arith.constant dense<0.000000e+00> : vector<2x8xf32>
    %42 = tpu.matmul %41, %30, %cst_33 {dimension_numbers = #tpu.dot_dimension_numbers<[1], [0], [0], [1], [0, 0, 1, 1], [], []>} : vector<2x2xf32>, vector<2x8xf32>, vector<2x8xf32> -> vector<2x8xf32>
    %c0_34 = arith.constant 0 : index
    %c0_35 = arith.constant 0 : index
    %c0_36 = arith.constant 0 : index
    %43 = vector.load %arg9[%c0_34, %c0_35, %c0_36] : memref<8x8x32xf32, #tpu.memory_space<vmem>>, vector<1x8x32xf32>
    %44 = vector.shape_cast %43 : vector<1x8x32xf32> to vector<8x32xf32>
    %cst_37 = arith.constant dense<0.000000e+00> : vector<2x32xf32>
    %45 = tpu.matmul %42, %44, %cst_37 {dimension_numbers = #tpu.dot_dimension_numbers<[1], [0], [0], [1], [0, 0, 1, 1], [], []>} : vector<2x8xf32>, vector<8x32xf32>, vector<2x32xf32> -> vector<2x32xf32>
    %46 = vector.broadcast %7 : vector<1x32xf32> to vector<2x32xf32>
    %47 = arith.addf %46, %45 : vector<2x32xf32>
    %c1 = arith.constant 1 : index
    %c0_38 = arith.constant 0 : index
    %c0_39 = arith.constant 0 : index
    %48 = vector.load %arg3[%c1, %c0_38, %c0_39] : memref<8x32x8xf32, #tpu.memory_space<vmem>>, vector<1x32x8xf32>
    %49 = vector.shape_cast %48 : vector<1x32x8xf32> to vector<32x8xf32>
    %cst_40 = arith.constant dense<0.000000e+00> : vector<2x8xf32>
    %50 = tpu.matmul %5, %49, %cst_40 {dimension_numbers = #tpu.dot_dimension_numbers<[1], [0], [0], [1], [0, 0, 1, 1], [], []>} : vector<2x32xf32>, vector<32x8xf32>, vector<2x8xf32> -> vector<2x8xf32>
    %c1_41 = arith.constant 1 : index
    %c0_42 = arith.constant 0 : index
    %c0_43 = arith.constant 0 : index
    %51 = vector.load %arg4[%c1_41, %c0_42, %c0_43] : memref<8x1x8xf32, #tpu.memory_space<vmem>>, vector<1x1x8xf32>
    %52 = vector.shape_cast %51 : vector<1x1x8xf32> to vector<1x8xf32>
    %53 = vector.broadcast %52 : vector<1x8xf32> to vector<2x8xf32>
    %54 = arith.addf %50, %53 : vector<2x8xf32>
    %cst_44 = arith.constant 0.353553385 : f32
    %55 = vector.broadcast %cst_44 : f32 to vector<2x8xf32>
    %56 = arith.mulf %54, %55 : vector<2x8xf32>
    %c1_45 = arith.constant 1 : index
    %c0_46 = arith.constant 0 : index
    %c0_47 = arith.constant 0 : index
    %57 = vector.load %arg5[%c1_45, %c0_46, %c0_47] : memref<8x32x8xf32, #tpu.memory_space<vmem>>, vector<1x32x8xf32>
    %58 = vector.shape_cast %57 : vector<1x32x8xf32> to vector<32x8xf32>
    %cst_48 = arith.constant dense<0.000000e+00> : vector<2x8xf32>
    %59 = tpu.matmul %5, %58, %cst_48 {dimension_numbers = #tpu.dot_dimension_numbers<[1], [0], [0], [1], [0, 0, 1, 1], [], []>} : vector<2x32xf32>, vector<32x8xf32>, vector<2x8xf32> -> vector<2x8xf32>
    %c1_49 = arith.constant 1 : index
    %c0_50 = arith.constant 0 : index
    %c0_51 = arith.constant 0 : index
    %60 = vector.load %arg6[%c1_49, %c0_50, %c0_51] : memref<8x1x8xf32, #tpu.memory_space<vmem>>, vector<1x1x8xf32>
    %61 = vector.shape_cast %60 : vector<1x1x8xf32> to vector<1x8xf32>
    %62 = vector.broadcast %61 : vector<1x8xf32> to vector<2x8xf32>
    %63 = arith.addf %59, %62 : vector<2x8xf32>
    %c1_52 = arith.constant 1 : index
    %c0_53 = arith.constant 0 : index
    %c0_54 = arith.constant 0 : index
    %64 = vector.load %arg7[%c1_52, %c0_53, %c0_54] : memref<8x32x8xf32, #tpu.memory_space<vmem>>, vector<1x32x8xf32>
    %65 = vector.shape_cast %64 : vector<1x32x8xf32> to vector<32x8xf32>
    %cst_55 = arith.constant dense<0.000000e+00> : vector<2x8xf32>
    %66 = tpu.matmul %5, %65, %cst_55 {dimension_numbers = #tpu.dot_dimension_numbers<[1], [0], [0], [1], [0, 0, 1, 1], [], []>} : vector<2x32xf32>, vector<32x8xf32>, vector<2x8xf32> -> vector<2x8xf32>
    %c1_56 = arith.constant 1 : index
    %c0_57 = arith.constant 0 : index
    %c0_58 = arith.constant 0 : index
    %67 = vector.load %arg8[%c1_56, %c0_57, %c0_58] : memref<8x1x8xf32, #tpu.memory_space<vmem>>, vector<1x1x8xf32>
    %68 = vector.shape_cast %67 : vector<1x1x8xf32> to vector<1x8xf32>
    %69 = vector.broadcast %68 : vector<1x8xf32> to vector<2x8xf32>
    %70 = arith.addf %66, %69 : vector<2x8xf32>
    %cst_59 = arith.constant dense<0.000000e+00> : vector<2x2xf32>
    %71 = tpu.matmul %56, %63, %cst_59 {dimension_numbers = #tpu.dot_dimension_numbers<[1], [1], [0], [0], [0, 0, 1, 0], [], []>} : vector<2x8xf32>, vector<2x8xf32>, vector<2x2xf32> -> vector<2x2xf32>
    %cst_60 = arith.constant dense<0xFF800000> : vector<2xf32>
    %72 = vector.multi_reduction <maximumf>, %71, %cst_60 [1] : vector<2x2xf32> to vector<2xf32>
    %73 = vector.shape_cast %72 : vector<2xf32> to vector<2x1xf32>
    %74 = vector.broadcast %73 : vector<2x1xf32> to vector<2x2xf32>
    %75 = arith.subf %71, %74 : vector<2x2xf32>
    %76 = math.exp %75 : vector<2x2xf32>
    %cst_61 = arith.constant dense<0.000000e+00> : vector<2xf32>
    %77 = vector.multi_reduction <add>, %76, %cst_61 [1] : vector<2x2xf32> to vector<2xf32>
    %78 = vector.shape_cast %77 : vector<2xf32> to vector<2x1xf32>
    %79 = tpu.reciprocal %78 {approx = true} : vector<2x1xf32> -> vector<2x1xf32>
    %80 = vector.broadcast %79 : vector<2x1xf32> to vector<2x2xf32>
    %81 = arith.mulf %76, %80 : vector<2x2xf32>
    %cst_62 = arith.constant dense<0.000000e+00> : vector<2x8xf32>
    %82 = tpu.matmul %81, %70, %cst_62 {dimension_numbers = #tpu.dot_dimension_numbers<[1], [0], [0], [1], [0, 0, 1, 1], [], []>} : vector<2x2xf32>, vector<2x8xf32>, vector<2x8xf32> -> vector<2x8xf32>
    %c1_63 = arith.constant 1 : index
    %c0_64 = arith.constant 0 : index
    %c0_65 = arith.constant 0 : index
    %83 = vector.load %arg9[%c1_63, %c0_64, %c0_65] : memref<8x8x32xf32, #tpu.memory_space<vmem>>, vector<1x8x32xf32>
    %84 = vector.shape_cast %83 : vector<1x8x32xf32> to vector<8x32xf32>
    %cst_66 = arith.constant dense<0.000000e+00> : vector<2x32xf32>
    %85 = tpu.matmul %82, %84, %cst_66 {dimension_numbers = #tpu.dot_dimension_numbers<[1], [0], [0], [1], [0, 0, 1, 1], [], []>} : vector<2x8xf32>, vector<8x32xf32>, vector<2x32xf32> -> vector<2x32xf32>
    %86 = arith.addf %47, %85 : vector<2x32xf32>
    %c2 = arith.constant 2 : index
    %c0_67 = arith.constant 0 : index
    %c0_68 = arith.constant 0 : index
    %87 = vector.load %arg3[%c2, %c0_67, %c0_68] : memref<8x32x8xf32, #tpu.memory_space<vmem>>, vector<1x32x8xf32>
    %88 = vector.shape_cast %87 : vector<1x32x8xf32> to vector<32x8xf32>
    %cst_69 = arith.constant dense<0.000000e+00> : vector<2x8xf32>
    %89 = tpu.matmul %5, %88, %cst_69 {dimension_numbers = #tpu.dot_dimension_numbers<[1], [0], [0], [1], [0, 0, 1, 1], [], []>} : vector<2x32xf32>, vector<32x8xf32>, vector<2x8xf32> -> vector<2x8xf32>
    %c2_70 = arith.constant 2 : index
    %c0_71 = arith.constant 0 : index
    %c0_72 = arith.constant 0 : index
    %90 = vector.load %arg4[%c2_70, %c0_71, %c0_72] : memref<8x1x8xf32, #tpu.memory_space<vmem>>, vector<1x1x8xf32>
    %91 = vector.shape_cast %90 : vector<1x1x8xf32> to vector<1x8xf32>
    %92 = vector.broadcast %91 : vector<1x8xf32> to vector<2x8xf32>
    %93 = arith.addf %89, %92 : vector<2x8xf32>
    %cst_73 = arith.constant 0.353553385 : f32
    %94 = vector.broadcast %cst_73 : f32 to vector<2x8xf32>
    %95 = arith.mulf %93, %94 : vector<2x8xf32>
    %c2_74 = arith.constant 2 : index
    %c0_75 = arith.constant 0 : index
    %c0_76 = arith.constant 0 : index
    %96 = vector.load %arg5[%c2_74, %c0_75, %c0_76] : memref<8x32x8xf32, #tpu.memory_space<vmem>>, vector<1x32x8xf32>
    %97 = vector.shape_cast %96 : vector<1x32x8xf32> to vector<32x8xf32>
    %cst_77 = arith.constant dense<0.000000e+00> : vector<2x8xf32>
    %98 = tpu.matmul %5, %97, %cst_77 {dimension_numbers = #tpu.dot_dimension_numbers<[1], [0], [0], [1], [0, 0, 1, 1], [], []>} : vector<2x32xf32>, vector<32x8xf32>, vector<2x8xf32> -> vector<2x8xf32>
    %c2_78 = arith.constant 2 : index
    %c0_79 = arith.constant 0 : index
    %c0_80 = arith.constant 0 : index
    %99 = vector.load %arg6[%c2_78, %c0_79, %c0_80] : memref<8x1x8xf32, #tpu.memory_space<vmem>>, vector<1x1x8xf32>
    %100 = vector.shape_cast %99 : vector<1x1x8xf32> to vector<1x8xf32>
    %101 = vector.broadcast %100 : vector<1x8xf32> to vector<2x8xf32>
    %102 = arith.addf %98, %101 : vector<2x8xf32>
    %c2_81 = arith.constant 2 : index
    %c0_82 = arith.constant 0 : index
    %c0_83 = arith.constant 0 : index
    %103 = vector.load %arg7[%c2_81, %c0_82, %c0_83] : memref<8x32x8xf32, #tpu.memory_space<vmem>>, vector<1x32x8xf32>
    %104 = vector.shape_cast %103 : vector<1x32x8xf32> to vector<32x8xf32>
    %cst_84 = arith.constant dense<0.000000e+00> : vector<2x8xf32>
    %105 = tpu.matmul %5, %104, %cst_84 {dimension_numbers = #tpu.dot_dimension_numbers<[1], [0], [0], [1], [0, 0, 1, 1], [], []>} : vector<2x32xf32>, vector<32x8xf32>, vector<2x8xf32> -> vector<2x8xf32>
    %c2_85 = arith.constant 2 : index
    %c0_86 = arith.constant 0 : index
    %c0_87 = arith.constant 0 : index
    %106 = vector.load %arg8[%c2_85, %c0_86, %c0_87] : memref<8x1x8xf32, #tpu.memory_space<vmem>>, vector<1x1x8xf32>
    %107 = vector.shape_cast %106 : vector<1x1x8xf32> to vector<1x8xf32>
    %108 = vector.broadcast %107 : vector<1x8xf32> to vector<2x8xf32>
    %109 = arith.addf %105, %108 : vector<2x8xf32>
    %cst_88 = arith.constant dense<0.000000e+00> : vector<2x2xf32>
    %110 = tpu.matmul %95, %102, %cst_88 {dimension_numbers = #tpu.dot_dimension_numbers<[1], [1], [0], [0], [0, 0, 1, 0], [], []>} : vector<2x8xf32>, vector<2x8xf32>, vector<2x2xf32> -> vector<2x2xf32>
    %cst_89 = arith.constant dense<0xFF800000> : vector<2xf32>
    %111 = vector.multi_reduction <maximumf>, %110, %cst_89 [1] : vector<2x2xf32> to vector<2xf32>
    %112 = vector.shape_cast %111 : vector<2xf32> to vector<2x1xf32>
    %113 = vector.broadcast %112 : vector<2x1xf32> to vector<2x2xf32>
    %114 = arith.subf %110, %113 : vector<2x2xf32>
    %115 = math.exp %114 : vector<2x2xf32>
    %cst_90 = arith.constant dense<0.000000e+00> : vector<2xf32>
    %116 = vector.multi_reduction <add>, %115, %cst_90 [1] : vector<2x2xf32> to vector<2xf32>
    %117 = vector.shape_cast %116 : vector<2xf32> to vector<2x1xf32>
    %118 = tpu.reciprocal %117 {approx = true} : vector<2x1xf32> -> vector<2x1xf32>
    %119 = vector.broadcast %118 : vector<2x1xf32> to vector<2x2xf32>
    %120 = arith.mulf %115, %119 : vector<2x2xf32>
    %cst_91 = arith.constant dense<0.000000e+00> : vector<2x8xf32>
    %121 = tpu.matmul %120, %109, %cst_91 {dimension_numbers = #tpu.dot_dimension_numbers<[1], [0], [0], [1], [0, 0, 1, 1], [], []>} : vector<2x2xf32>, vector<2x8xf32>, vector<2x8xf32> -> vector<2x8xf32>
    %c2_92 = arith.constant 2 : index
    %c0_93 = arith.constant 0 : index
    %c0_94 = arith.constant 0 : index
    %122 = vector.load %arg9[%c2_92, %c0_93, %c0_94] : memref<8x8x32xf32, #tpu.memory_space<vmem>>, vector<1x8x32xf32>
    %123 = vector.shape_cast %122 : vector<1x8x32xf32> to vector<8x32xf32>
    %cst_95 = arith.constant dense<0.000000e+00> : vector<2x32xf32>
    %124 = tpu.matmul %121, %123, %cst_95 {dimension_numbers = #tpu.dot_dimension_numbers<[1], [0], [0], [1], [0, 0, 1, 1], [], []>} : vector<2x8xf32>, vector<8x32xf32>, vector<2x32xf32> -> vector<2x32xf32>
    %125 = arith.addf %86, %124 : vector<2x32xf32>
    %c3 = arith.constant 3 : index
    %c0_96 = arith.constant 0 : index
    %c0_97 = arith.constant 0 : index
    %126 = vector.load %arg3[%c3, %c0_96, %c0_97] : memref<8x32x8xf32, #tpu.memory_space<vmem>>, vector<1x32x8xf32>
    %127 = vector.shape_cast %126 : vector<1x32x8xf32> to vector<32x8xf32>
    %cst_98 = arith.constant dense<0.000000e+00> : vector<2x8xf32>
    %128 = tpu.matmul %5, %127, %cst_98 {dimension_numbers = #tpu.dot_dimension_numbers<[1], [0], [0], [1], [0, 0, 1, 1], [], []>} : vector<2x32xf32>, vector<32x8xf32>, vector<2x8xf32> -> vector<2x8xf32>
    %c3_99 = arith.constant 3 : index
    %c0_100 = arith.constant 0 : index
    %c0_101 = arith.constant 0 : index
    %129 = vector.load %arg4[%c3_99, %c0_100, %c0_101] : memref<8x1x8xf32, #tpu.memory_space<vmem>>, vector<1x1x8xf32>
    %130 = vector.shape_cast %129 : vector<1x1x8xf32> to vector<1x8xf32>
    %131 = vector.broadcast %130 : vector<1x8xf32> to vector<2x8xf32>
    %132 = arith.addf %128, %131 : vector<2x8xf32>
    %cst_102 = arith.constant 0.353553385 : f32
    %133 = vector.broadcast %cst_102 : f32 to vector<2x8xf32>
    %134 = arith.mulf %132, %133 : vector<2x8xf32>
    %c3_103 = arith.constant 3 : index
    %c0_104 = arith.constant 0 : index
    %c0_105 = arith.constant 0 : index
    %135 = vector.load %arg5[%c3_103, %c0_104, %c0_105] : memref<8x32x8xf32, #tpu.memory_space<vmem>>, vector<1x32x8xf32>
    %136 = vector.shape_cast %135 : vector<1x32x8xf32> to vector<32x8xf32>
    %cst_106 = arith.constant dense<0.000000e+00> : vector<2x8xf32>
    %137 = tpu.matmul %5, %136, %cst_106 {dimension_numbers = #tpu.dot_dimension_numbers<[1], [0], [0], [1], [0, 0, 1, 1], [], []>} : vector<2x32xf32>, vector<32x8xf32>, vector<2x8xf32> -> vector<2x8xf32>
    %c3_107 = arith.constant 3 : index
    %c0_108 = arith.constant 0 : index
    %c0_109 = arith.constant 0 : index
    %138 = vector.load %arg6[%c3_107, %c0_108, %c0_109] : memref<8x1x8xf32, #tpu.memory_space<vmem>>, vector<1x1x8xf32>
    %139 = vector.shape_cast %138 : vector<1x1x8xf32> to vector<1x8xf32>
    %140 = vector.broadcast %139 : vector<1x8xf32> to vector<2x8xf32>
    %141 = arith.addf %137, %140 : vector<2x8xf32>
    %c3_110 = arith.constant 3 : index
    %c0_111 = arith.constant 0 : index
    %c0_112 = arith.constant 0 : index
    %142 = vector.load %arg7[%c3_110, %c0_111, %c0_112] : memref<8x32x8xf32, #tpu.memory_space<vmem>>, vector<1x32x8xf32>
    %143 = vector.shape_cast %142 : vector<1x32x8xf32> to vector<32x8xf32>
    %cst_113 = arith.constant dense<0.000000e+00> : vector<2x8xf32>
    %144 = tpu.matmul %5, %143, %cst_113 {dimension_numbers = #tpu.dot_dimension_numbers<[1], [0], [0], [1], [0, 0, 1, 1], [], []>} : vector<2x32xf32>, vector<32x8xf32>, vector<2x8xf32> -> vector<2x8xf32>
    %c3_114 = arith.constant 3 : index
    %c0_115 = arith.constant 0 : index
    %c0_116 = arith.constant 0 : index
    %145 = vector.load %arg8[%c3_114, %c0_115, %c0_116] : memref<8x1x8xf32, #tpu.memory_space<vmem>>, vector<1x1x8xf32>
    %146 = vector.shape_cast %145 : vector<1x1x8xf32> to vector<1x8xf32>
    %147 = vector.broadcast %146 : vector<1x8xf32> to vector<2x8xf32>
    %148 = arith.addf %144, %147 : vector<2x8xf32>
    %cst_117 = arith.constant dense<0.000000e+00> : vector<2x2xf32>
    %149 = tpu.matmul %134, %141, %cst_117 {dimension_numbers = #tpu.dot_dimension_numbers<[1], [1], [0], [0], [0, 0, 1, 0], [], []>} : vector<2x8xf32>, vector<2x8xf32>, vector<2x2xf32> -> vector<2x2xf32>
    %cst_118 = arith.constant dense<0xFF800000> : vector<2xf32>
    %150 = vector.multi_reduction <maximumf>, %149, %cst_118 [1] : vector<2x2xf32> to vector<2xf32>
    %151 = vector.shape_cast %150 : vector<2xf32> to vector<2x1xf32>
    %152 = vector.broadcast %151 : vector<2x1xf32> to vector<2x2xf32>
    %153 = arith.subf %149, %152 : vector<2x2xf32>
    %154 = math.exp %153 : vector<2x2xf32>
    %cst_119 = arith.constant dense<0.000000e+00> : vector<2xf32>
    %155 = vector.multi_reduction <add>, %154, %cst_119 [1] : vector<2x2xf32> to vector<2xf32>
    %156 = vector.shape_cast %155 : vector<2xf32> to vector<2x1xf32>
    %157 = tpu.reciprocal %156 {approx = true} : vector<2x1xf32> -> vector<2x1xf32>
    %158 = vector.broadcast %157 : vector<2x1xf32> to vector<2x2xf32>
    %159 = arith.mulf %154, %158 : vector<2x2xf32>
    %cst_120 = arith.constant dense<0.000000e+00> : vector<2x8xf32>
    %160 = tpu.matmul %159, %148, %cst_120 {dimension_numbers = #tpu.dot_dimension_numbers<[1], [0], [0], [1], [0, 0, 1, 1], [], []>} : vector<2x2xf32>, vector<2x8xf32>, vector<2x8xf32> -> vector<2x8xf32>
    %c3_121 = arith.constant 3 : index
    %c0_122 = arith.constant 0 : index
    %c0_123 = arith.constant 0 : index
    %161 = vector.load %arg9[%c3_121, %c0_122, %c0_123] : memref<8x8x32xf32, #tpu.memory_space<vmem>>, vector<1x8x32xf32>
    %162 = vector.shape_cast %161 : vector<1x8x32xf32> to vector<8x32xf32>
    %cst_124 = arith.constant dense<0.000000e+00> : vector<2x32xf32>
    %163 = tpu.matmul %160, %162, %cst_124 {dimension_numbers = #tpu.dot_dimension_numbers<[1], [0], [0], [1], [0, 0, 1, 1], [], []>} : vector<2x8xf32>, vector<8x32xf32>, vector<2x32xf32> -> vector<2x32xf32>
    %164 = arith.addf %125, %163 : vector<2x32xf32>
    %165 = arith.addf %5, %164 : vector<2x32xf32>
    %cst_125 = arith.constant dense<0.000000e+00> : vector<2xf32>
    %166 = vector.multi_reduction <add>, %165, %cst_125 [1] : vector<2x32xf32> to vector<2xf32>
    %167 = vector.shape_cast %166 : vector<2xf32> to vector<2x1xf32>
    %cst_126 = arith.constant 3.200000e+01 : f32
    %168 = vector.broadcast %cst_126 : f32 to vector<2x1xf32>
    %169 = arith.divf %167, %168 : vector<2x1xf32>
    %170 = vector.broadcast %169 : vector<2x1xf32> to vector<2x32xf32>
    %171 = arith.subf %165, %170 : vector<2x32xf32>
    %172 = arith.mulf %171, %171 : vector<2x32xf32>
    %cst_127 = arith.constant dense<0.000000e+00> : vector<2xf32>
    %173 = vector.multi_reduction <add>, %172, %cst_127 [1] : vector<2x32xf32> to vector<2xf32>
    %174 = vector.shape_cast %173 : vector<2xf32> to vector<2x1xf32>
    %cst_128 = arith.constant 3.200000e+01 : f32
    %175 = vector.broadcast %cst_128 : f32 to vector<2x1xf32>
    %176 = arith.divf %174, %175 : vector<2x1xf32>
    %177 = vector.broadcast %169 : vector<2x1xf32> to vector<2x32xf32>
    %178 = arith.subf %165, %177 : vector<2x32xf32>
    %cst_129 = arith.constant 9.99999974E-6 : f32
    %179 = vector.broadcast %cst_129 : f32 to vector<2x1xf32>
    %180 = arith.addf %176, %179 : vector<2x1xf32>
    %181 = math.rsqrt %180 : vector<2x1xf32>
    %182 = vector.broadcast %181 : vector<2x1xf32> to vector<2x32xf32>
    %183 = arith.mulf %178, %182 : vector<2x32xf32>
    %c0_130 = arith.constant 0 : index
    %c0_131 = arith.constant 0 : index
    %c0_132 = arith.constant 0 : index
    %184 = vector.load %arg11[%c0_130, %c0_131, %c0_132] : memref<2x1x32xf32, #tpu.memory_space<vmem>>, vector<1x1x32xf32>
    %185 = vector.shape_cast %184 : vector<1x1x32xf32> to vector<1x32xf32>
    %186 = vector.broadcast %185 : vector<1x32xf32> to vector<2x32xf32>
    %187 = arith.mulf %183, %186 : vector<2x32xf32>
    %c0_133 = arith.constant 0 : index
    %c0_134 = arith.constant 0 : index
    %c0_135 = arith.constant 0 : index
    %188 = vector.load %arg12[%c0_133, %c0_134, %c0_135] : memref<2x1x32xf32, #tpu.memory_space<vmem>>, vector<1x1x32xf32>
    %189 = vector.shape_cast %188 : vector<1x1x32xf32> to vector<1x32xf32>
    %190 = vector.broadcast %189 : vector<1x32xf32> to vector<2x32xf32>
    %191 = arith.addf %187, %190 : vector<2x32xf32>
    %c0_136 = arith.constant 0 : index
    %c0_137 = arith.constant 0 : index
    %c0_138 = arith.constant 0 : index
    %192 = vector.load %arg13[%c0_136, %c0_137, %c0_138] : memref<2x32x64xf32, #tpu.memory_space<vmem>>, vector<1x32x64xf32>
    %193 = vector.shape_cast %192 : vector<1x32x64xf32> to vector<32x64xf32>
    %cst_139 = arith.constant dense<0.000000e+00> : vector<2x64xf32>
    %194 = tpu.matmul %191, %193, %cst_139 {dimension_numbers = #tpu.dot_dimension_numbers<[1], [0], [0], [1], [0, 0, 1, 1], [], []>} : vector<2x32xf32>, vector<32x64xf32>, vector<2x64xf32> -> vector<2x64xf32>
    %c0_140 = arith.constant 0 : index
    %c0_141 = arith.constant 0 : index
    %c0_142 = arith.constant 0 : index
    %195 = vector.load %arg14[%c0_140, %c0_141, %c0_142] : memref<2x1x64xf32, #tpu.memory_space<vmem>>, vector<1x1x64xf32>
    %196 = vector.shape_cast %195 : vector<1x1x64xf32> to vector<1x64xf32>
    %197 = vector.broadcast %196 : vector<1x64xf32> to vector<2x64xf32>
    %198 = arith.addf %194, %197 : vector<2x64xf32>
    %cst_143 = arith.constant 0.000000e+00 : f32
    %199 = vector.broadcast %cst_143 : f32 to vector<2x64xf32>
    %200 = arith.maximumf %198, %199 : vector<2x64xf32>
    %c0_144 = arith.constant 0 : index
    %c0_145 = arith.constant 0 : index
    %c0_146 = arith.constant 0 : index
    %201 = vector.load %arg15[%c0_144, %c0_145, %c0_146] : memref<2x64x32xf32, #tpu.memory_space<vmem>>, vector<1x64x32xf32>
    %202 = vector.shape_cast %201 : vector<1x64x32xf32> to vector<64x32xf32>
    %cst_147 = arith.constant dense<0.000000e+00> : vector<2x32xf32>
    %203 = tpu.matmul %200, %202, %cst_147 {dimension_numbers = #tpu.dot_dimension_numbers<[1], [0], [0], [1], [0, 0, 1, 1], [], []>} : vector<2x64xf32>, vector<64x32xf32>, vector<2x32xf32> -> vector<2x32xf32>
    %c0_148 = arith.constant 0 : index
    %c0_149 = arith.constant 0 : index
    %c0_150 = arith.constant 0 : index
    %204 = vector.load %arg16[%c0_148, %c0_149, %c0_150] : memref<2x1x32xf32, #tpu.memory_space<vmem>>, vector<1x1x32xf32>
    %205 = vector.shape_cast %204 : vector<1x1x32xf32> to vector<1x32xf32>
    %206 = vector.broadcast %205 : vector<1x32xf32> to vector<2x32xf32>
    %207 = arith.addf %203, %206 : vector<2x32xf32>
    %208 = arith.addf %191, %207 : vector<2x32xf32>
    %cst_151 = arith.constant dense<0.000000e+00> : vector<2xf32>
    %209 = vector.multi_reduction <add>, %208, %cst_151 [1] : vector<2x32xf32> to vector<2xf32>
    %210 = vector.shape_cast %209 : vector<2xf32> to vector<2x1xf32>
    %cst_152 = arith.constant 3.200000e+01 : f32
    %211 = vector.broadcast %cst_152 : f32 to vector<2x1xf32>
    %212 = arith.divf %210, %211 : vector<2x1xf32>
    %213 = vector.broadcast %212 : vector<2x1xf32> to vector<2x32xf32>
    %214 = arith.subf %208, %213 : vector<2x32xf32>
    %215 = arith.mulf %214, %214 : vector<2x32xf32>
    %cst_153 = arith.constant dense<0.000000e+00> : vector<2xf32>
    %216 = vector.multi_reduction <add>, %215, %cst_153 [1] : vector<2x32xf32> to vector<2xf32>
    %217 = vector.shape_cast %216 : vector<2xf32> to vector<2x1xf32>
    %cst_154 = arith.constant 3.200000e+01 : f32
    %218 = vector.broadcast %cst_154 : f32 to vector<2x1xf32>
    %219 = arith.divf %217, %218 : vector<2x1xf32>
    %220 = vector.broadcast %212 : vector<2x1xf32> to vector<2x32xf32>
    %221 = arith.subf %208, %220 : vector<2x32xf32>
    %cst_155 = arith.constant 9.99999974E-6 : f32
    %222 = vector.broadcast %cst_155 : f32 to vector<2x1xf32>
    %223 = arith.addf %219, %222 : vector<2x1xf32>
    %224 = math.rsqrt %223 : vector<2x1xf32>
    %225 = vector.broadcast %224 : vector<2x1xf32> to vector<2x32xf32>
    %226 = arith.mulf %221, %225 : vector<2x32xf32>
    %c0_156 = arith.constant 0 : index
    %c0_157 = arith.constant 0 : index
    %c0_158 = arith.constant 0 : index
    %227 = vector.load %arg17[%c0_156, %c0_157, %c0_158] : memref<2x1x32xf32, #tpu.memory_space<vmem>>, vector<1x1x32xf32>
    %228 = vector.shape_cast %227 : vector<1x1x32xf32> to vector<1x32xf32>
    %229 = vector.broadcast %228 : vector<1x32xf32> to vector<2x32xf32>
    %230 = arith.mulf %226, %229 : vector<2x32xf32>
    %c0_159 = arith.constant 0 : index
    %c0_160 = arith.constant 0 : index
    %c0_161 = arith.constant 0 : index
    %231 = vector.load %arg18[%c0_159, %c0_160, %c0_161] : memref<2x1x32xf32, #tpu.memory_space<vmem>>, vector<1x1x32xf32>
    %232 = vector.shape_cast %231 : vector<1x1x32xf32> to vector<1x32xf32>
    %233 = vector.broadcast %232 : vector<1x32xf32> to vector<2x32xf32>
    %234 = arith.addf %230, %233 : vector<2x32xf32>
    %c1_162 = arith.constant 1 : index
    %c0_163 = arith.constant 0 : index
    %c0_164 = arith.constant 0 : index
    %235 = vector.load %arg10[%c1_162, %c0_163, %c0_164] : memref<2x1x32xf32, #tpu.memory_space<vmem>>, vector<1x1x32xf32>
    %236 = vector.shape_cast %235 : vector<1x1x32xf32> to vector<1x32xf32>
    %c4 = arith.constant 4 : index
    %c0_165 = arith.constant 0 : index
    %c0_166 = arith.constant 0 : index
    %237 = vector.load %arg3[%c4, %c0_165, %c0_166] : memref<8x32x8xf32, #tpu.memory_space<vmem>>, vector<1x32x8xf32>
    %238 = vector.shape_cast %237 : vector<1x32x8xf32> to vector<32x8xf32>
    %cst_167 = arith.constant dense<0.000000e+00> : vector<2x8xf32>
    %239 = tpu.matmul %234, %238, %cst_167 {dimension_numbers = #tpu.dot_dimension_numbers<[1], [0], [0], [1], [0, 0, 1, 1], [], []>} : vector<2x32xf32>, vector<32x8xf32>, vector<2x8xf32> -> vector<2x8xf32>
    %c4_168 = arith.constant 4 : index
    %c0_169 = arith.constant 0 : index
    %c0_170 = arith.constant 0 : index
    %240 = vector.load %arg4[%c4_168, %c0_169, %c0_170] : memref<8x1x8xf32, #tpu.memory_space<vmem>>, vector<1x1x8xf32>
    %241 = vector.shape_cast %240 : vector<1x1x8xf32> to vector<1x8xf32>
    %242 = vector.broadcast %241 : vector<1x8xf32> to vector<2x8xf32>
    %243 = arith.addf %239, %242 : vector<2x8xf32>
    %cst_171 = arith.constant 0.353553385 : f32
    %244 = vector.broadcast %cst_171 : f32 to vector<2x8xf32>
    %245 = arith.mulf %243, %244 : vector<2x8xf32>
    %c4_172 = arith.constant 4 : index
    %c0_173 = arith.constant 0 : index
    %c0_174 = arith.constant 0 : index
    %246 = vector.load %arg5[%c4_172, %c0_173, %c0_174] : memref<8x32x8xf32, #tpu.memory_space<vmem>>, vector<1x32x8xf32>
    %247 = vector.shape_cast %246 : vector<1x32x8xf32> to vector<32x8xf32>
    %cst_175 = arith.constant dense<0.000000e+00> : vector<2x8xf32>
    %248 = tpu.matmul %234, %247, %cst_175 {dimension_numbers = #tpu.dot_dimension_numbers<[1], [0], [0], [1], [0, 0, 1, 1], [], []>} : vector<2x32xf32>, vector<32x8xf32>, vector<2x8xf32> -> vector<2x8xf32>
    %c4_176 = arith.constant 4 : index
    %c0_177 = arith.constant 0 : index
    %c0_178 = arith.constant 0 : index
    %249 = vector.load %arg6[%c4_176, %c0_177, %c0_178] : memref<8x1x8xf32, #tpu.memory_space<vmem>>, vector<1x1x8xf32>
    %250 = vector.shape_cast %249 : vector<1x1x8xf32> to vector<1x8xf32>
    %251 = vector.broadcast %250 : vector<1x8xf32> to vector<2x8xf32>
    %252 = arith.addf %248, %251 : vector<2x8xf32>
    %c4_179 = arith.constant 4 : index
    %c0_180 = arith.constant 0 : index
    %c0_181 = arith.constant 0 : index
    %253 = vector.load %arg7[%c4_179, %c0_180, %c0_181] : memref<8x32x8xf32, #tpu.memory_space<vmem>>, vector<1x32x8xf32>
    %254 = vector.shape_cast %253 : vector<1x32x8xf32> to vector<32x8xf32>
    %cst_182 = arith.constant dense<0.000000e+00> : vector<2x8xf32>
    %255 = tpu.matmul %234, %254, %cst_182 {dimension_numbers = #tpu.dot_dimension_numbers<[1], [0], [0], [1], [0, 0, 1, 1], [], []>} : vector<2x32xf32>, vector<32x8xf32>, vector<2x8xf32> -> vector<2x8xf32>
    %c4_183 = arith.constant 4 : index
    %c0_184 = arith.constant 0 : index
    %c0_185 = arith.constant 0 : index
    %256 = vector.load %arg8[%c4_183, %c0_184, %c0_185] : memref<8x1x8xf32, #tpu.memory_space<vmem>>, vector<1x1x8xf32>
    %257 = vector.shape_cast %256 : vector<1x1x8xf32> to vector<1x8xf32>
    %258 = vector.broadcast %257 : vector<1x8xf32> to vector<2x8xf32>
    %259 = arith.addf %255, %258 : vector<2x8xf32>
    %cst_186 = arith.constant dense<0.000000e+00> : vector<2x2xf32>
    %260 = tpu.matmul %245, %252, %cst_186 {dimension_numbers = #tpu.dot_dimension_numbers<[1], [1], [0], [0], [0, 0, 1, 0], [], []>} : vector<2x8xf32>, vector<2x8xf32>, vector<2x2xf32> -> vector<2x2xf32>
    %cst_187 = arith.constant dense<0xFF800000> : vector<2xf32>
    %261 = vector.multi_reduction <maximumf>, %260, %cst_187 [1] : vector<2x2xf32> to vector<2xf32>
    %262 = vector.shape_cast %261 : vector<2xf32> to vector<2x1xf32>
    %263 = vector.broadcast %262 : vector<2x1xf32> to vector<2x2xf32>
    %264 = arith.subf %260, %263 : vector<2x2xf32>
    %265 = math.exp %264 : vector<2x2xf32>
    %cst_188 = arith.constant dense<0.000000e+00> : vector<2xf32>
    %266 = vector.multi_reduction <add>, %265, %cst_188 [1] : vector<2x2xf32> to vector<2xf32>
    %267 = vector.shape_cast %266 : vector<2xf32> to vector<2x1xf32>
    %268 = tpu.reciprocal %267 {approx = true} : vector<2x1xf32> -> vector<2x1xf32>
    %269 = vector.broadcast %268 : vector<2x1xf32> to vector<2x2xf32>
    %270 = arith.mulf %265, %269 : vector<2x2xf32>
    %cst_189 = arith.constant dense<0.000000e+00> : vector<2x8xf32>
    %271 = tpu.matmul %270, %259, %cst_189 {dimension_numbers = #tpu.dot_dimension_numbers<[1], [0], [0], [1], [0, 0, 1, 1], [], []>} : vector<2x2xf32>, vector<2x8xf32>, vector<2x8xf32> -> vector<2x8xf32>
    %c4_190 = arith.constant 4 : index
    %c0_191 = arith.constant 0 : index
    %c0_192 = arith.constant 0 : index
    %272 = vector.load %arg9[%c4_190, %c0_191, %c0_192] : memref<8x8x32xf32, #tpu.memory_space<vmem>>, vector<1x8x32xf32>
    %273 = vector.shape_cast %272 : vector<1x8x32xf32> to vector<8x32xf32>
    %cst_193 = arith.constant dense<0.000000e+00> : vector<2x32xf32>
    %274 = tpu.matmul %271, %273, %cst_193 {dimension_numbers = #tpu.dot_dimension_numbers<[1], [0], [0], [1], [0, 0, 1, 1], [], []>} : vector<2x8xf32>, vector<8x32xf32>, vector<2x32xf32> -> vector<2x32xf32>
    %275 = vector.broadcast %236 : vector<1x32xf32> to vector<2x32xf32>
    %276 = arith.addf %275, %274 : vector<2x32xf32>
    %c5 = arith.constant 5 : index
    %c0_194 = arith.constant 0 : index
    %c0_195 = arith.constant 0 : index
    %277 = vector.load %arg3[%c5, %c0_194, %c0_195] : memref<8x32x8xf32, #tpu.memory_space<vmem>>, vector<1x32x8xf32>
    %278 = vector.shape_cast %277 : vector<1x32x8xf32> to vector<32x8xf32>
    %cst_196 = arith.constant dense<0.000000e+00> : vector<2x8xf32>
    %279 = tpu.matmul %234, %278, %cst_196 {dimension_numbers = #tpu.dot_dimension_numbers<[1], [0], [0], [1], [0, 0, 1, 1], [], []>} : vector<2x32xf32>, vector<32x8xf32>, vector<2x8xf32> -> vector<2x8xf32>
    %c5_197 = arith.constant 5 : index
    %c0_198 = arith.constant 0 : index
    %c0_199 = arith.constant 0 : index
    %280 = vector.load %arg4[%c5_197, %c0_198, %c0_199] : memref<8x1x8xf32, #tpu.memory_space<vmem>>, vector<1x1x8xf32>
    %281 = vector.shape_cast %280 : vector<1x1x8xf32> to vector<1x8xf32>
    %282 = vector.broadcast %281 : vector<1x8xf32> to vector<2x8xf32>
    %283 = arith.addf %279, %282 : vector<2x8xf32>
    %cst_200 = arith.constant 0.353553385 : f32
    %284 = vector.broadcast %cst_200 : f32 to vector<2x8xf32>
    %285 = arith.mulf %283, %284 : vector<2x8xf32>
    %c5_201 = arith.constant 5 : index
    %c0_202 = arith.constant 0 : index
    %c0_203 = arith.constant 0 : index
    %286 = vector.load %arg5[%c5_201, %c0_202, %c0_203] : memref<8x32x8xf32, #tpu.memory_space<vmem>>, vector<1x32x8xf32>
    %287 = vector.shape_cast %286 : vector<1x32x8xf32> to vector<32x8xf32>
    %cst_204 = arith.constant dense<0.000000e+00> : vector<2x8xf32>
    %288 = tpu.matmul %234, %287, %cst_204 {dimension_numbers = #tpu.dot_dimension_numbers<[1], [0], [0], [1], [0, 0, 1, 1], [], []>} : vector<2x32xf32>, vector<32x8xf32>, vector<2x8xf32> -> vector<2x8xf32>
    %c5_205 = arith.constant 5 : index
    %c0_206 = arith.constant 0 : index
    %c0_207 = arith.constant 0 : index
    %289 = vector.load %arg6[%c5_205, %c0_206, %c0_207] : memref<8x1x8xf32, #tpu.memory_space<vmem>>, vector<1x1x8xf32>
    %290 = vector.shape_cast %289 : vector<1x1x8xf32> to vector<1x8xf32>
    %291 = vector.broadcast %290 : vector<1x8xf32> to vector<2x8xf32>
    %292 = arith.addf %288, %291 : vector<2x8xf32>
    %c5_208 = arith.constant 5 : index
    %c0_209 = arith.constant 0 : index
    %c0_210 = arith.constant 0 : index
    %293 = vector.load %arg7[%c5_208, %c0_209, %c0_210] : memref<8x32x8xf32, #tpu.memory_space<vmem>>, vector<1x32x8xf32>
    %294 = vector.shape_cast %293 : vector<1x32x8xf32> to vector<32x8xf32>
    %cst_211 = arith.constant dense<0.000000e+00> : vector<2x8xf32>
    %295 = tpu.matmul %234, %294, %cst_211 {dimension_numbers = #tpu.dot_dimension_numbers<[1], [0], [0], [1], [0, 0, 1, 1], [], []>} : vector<2x32xf32>, vector<32x8xf32>, vector<2x8xf32> -> vector<2x8xf32>
    %c5_212 = arith.constant 5 : index
    %c0_213 = arith.constant 0 : index
    %c0_214 = arith.constant 0 : index
    %296 = vector.load %arg8[%c5_212, %c0_213, %c0_214] : memref<8x1x8xf32, #tpu.memory_space<vmem>>, vector<1x1x8xf32>
    %297 = vector.shape_cast %296 : vector<1x1x8xf32> to vector<1x8xf32>
    %298 = vector.broadcast %297 : vector<1x8xf32> to vector<2x8xf32>
    %299 = arith.addf %295, %298 : vector<2x8xf32>
    %cst_215 = arith.constant dense<0.000000e+00> : vector<2x2xf32>
    %300 = tpu.matmul %285, %292, %cst_215 {dimension_numbers = #tpu.dot_dimension_numbers<[1], [1], [0], [0], [0, 0, 1, 0], [], []>} : vector<2x8xf32>, vector<2x8xf32>, vector<2x2xf32> -> vector<2x2xf32>
    %cst_216 = arith.constant dense<0xFF800000> : vector<2xf32>
    %301 = vector.multi_reduction <maximumf>, %300, %cst_216 [1] : vector<2x2xf32> to vector<2xf32>
    %302 = vector.shape_cast %301 : vector<2xf32> to vector<2x1xf32>
    %303 = vector.broadcast %302 : vector<2x1xf32> to vector<2x2xf32>
    %304 = arith.subf %300, %303 : vector<2x2xf32>
    %305 = math.exp %304 : vector<2x2xf32>
    %cst_217 = arith.constant dense<0.000000e+00> : vector<2xf32>
    %306 = vector.multi_reduction <add>, %305, %cst_217 [1] : vector<2x2xf32> to vector<2xf32>
    %307 = vector.shape_cast %306 : vector<2xf32> to vector<2x1xf32>
    %308 = tpu.reciprocal %307 {approx = true} : vector<2x1xf32> -> vector<2x1xf32>
    %309 = vector.broadcast %308 : vector<2x1xf32> to vector<2x2xf32>
    %310 = arith.mulf %305, %309 : vector<2x2xf32>
    %cst_218 = arith.constant dense<0.000000e+00> : vector<2x8xf32>
    %311 = tpu.matmul %310, %299, %cst_218 {dimension_numbers = #tpu.dot_dimension_numbers<[1], [0], [0], [1], [0, 0, 1, 1], [], []>} : vector<2x2xf32>, vector<2x8xf32>, vector<2x8xf32> -> vector<2x8xf32>
    %c5_219 = arith.constant 5 : index
    %c0_220 = arith.constant 0 : index
    %c0_221 = arith.constant 0 : index
    %312 = vector.load %arg9[%c5_219, %c0_220, %c0_221] : memref<8x8x32xf32, #tpu.memory_space<vmem>>, vector<1x8x32xf32>
    %313 = vector.shape_cast %312 : vector<1x8x32xf32> to vector<8x32xf32>
    %cst_222 = arith.constant dense<0.000000e+00> : vector<2x32xf32>
    %314 = tpu.matmul %311, %313, %cst_222 {dimension_numbers = #tpu.dot_dimension_numbers<[1], [0], [0], [1], [0, 0, 1, 1], [], []>} : vector<2x8xf32>, vector<8x32xf32>, vector<2x32xf32> -> vector<2x32xf32>
    %315 = arith.addf %276, %314 : vector<2x32xf32>
    %c6 = arith.constant 6 : index
    %c0_223 = arith.constant 0 : index
    %c0_224 = arith.constant 0 : index
    %316 = vector.load %arg3[%c6, %c0_223, %c0_224] : memref<8x32x8xf32, #tpu.memory_space<vmem>>, vector<1x32x8xf32>
    %317 = vector.shape_cast %316 : vector<1x32x8xf32> to vector<32x8xf32>
    %cst_225 = arith.constant dense<0.000000e+00> : vector<2x8xf32>
    %318 = tpu.matmul %234, %317, %cst_225 {dimension_numbers = #tpu.dot_dimension_numbers<[1], [0], [0], [1], [0, 0, 1, 1], [], []>} : vector<2x32xf32>, vector<32x8xf32>, vector<2x8xf32> -> vector<2x8xf32>
    %c6_226 = arith.constant 6 : index
    %c0_227 = arith.constant 0 : index
    %c0_228 = arith.constant 0 : index
    %319 = vector.load %arg4[%c6_226, %c0_227, %c0_228] : memref<8x1x8xf32, #tpu.memory_space<vmem>>, vector<1x1x8xf32>
    %320 = vector.shape_cast %319 : vector<1x1x8xf32> to vector<1x8xf32>
    %321 = vector.broadcast %320 : vector<1x8xf32> to vector<2x8xf32>
    %322 = arith.addf %318, %321 : vector<2x8xf32>
    %cst_229 = arith.constant 0.353553385 : f32
    %323 = vector.broadcast %cst_229 : f32 to vector<2x8xf32>
    %324 = arith.mulf %322, %323 : vector<2x8xf32>
    %c6_230 = arith.constant 6 : index
    %c0_231 = arith.constant 0 : index
    %c0_232 = arith.constant 0 : index
    %325 = vector.load %arg5[%c6_230, %c0_231, %c0_232] : memref<8x32x8xf32, #tpu.memory_space<vmem>>, vector<1x32x8xf32>
    %326 = vector.shape_cast %325 : vector<1x32x8xf32> to vector<32x8xf32>
    %cst_233 = arith.constant dense<0.000000e+00> : vector<2x8xf32>
    %327 = tpu.matmul %234, %326, %cst_233 {dimension_numbers = #tpu.dot_dimension_numbers<[1], [0], [0], [1], [0, 0, 1, 1], [], []>} : vector<2x32xf32>, vector<32x8xf32>, vector<2x8xf32> -> vector<2x8xf32>
    %c6_234 = arith.constant 6 : index
    %c0_235 = arith.constant 0 : index
    %c0_236 = arith.constant 0 : index
    %328 = vector.load %arg6[%c6_234, %c0_235, %c0_236] : memref<8x1x8xf32, #tpu.memory_space<vmem>>, vector<1x1x8xf32>
    %329 = vector.shape_cast %328 : vector<1x1x8xf32> to vector<1x8xf32>
    %330 = vector.broadcast %329 : vector<1x8xf32> to vector<2x8xf32>
    %331 = arith.addf %327, %330 : vector<2x8xf32>
    %c6_237 = arith.constant 6 : index
    %c0_238 = arith.constant 0 : index
    %c0_239 = arith.constant 0 : index
    %332 = vector.load %arg7[%c6_237, %c0_238, %c0_239] : memref<8x32x8xf32, #tpu.memory_space<vmem>>, vector<1x32x8xf32>
    %333 = vector.shape_cast %332 : vector<1x32x8xf32> to vector<32x8xf32>
    %cst_240 = arith.constant dense<0.000000e+00> : vector<2x8xf32>
    %334 = tpu.matmul %234, %333, %cst_240 {dimension_numbers = #tpu.dot_dimension_numbers<[1], [0], [0], [1], [0, 0, 1, 1], [], []>} : vector<2x32xf32>, vector<32x8xf32>, vector<2x8xf32> -> vector<2x8xf32>
    %c6_241 = arith.constant 6 : index
    %c0_242 = arith.constant 0 : index
    %c0_243 = arith.constant 0 : index
    %335 = vector.load %arg8[%c6_241, %c0_242, %c0_243] : memref<8x1x8xf32, #tpu.memory_space<vmem>>, vector<1x1x8xf32>
    %336 = vector.shape_cast %335 : vector<1x1x8xf32> to vector<1x8xf32>
    %337 = vector.broadcast %336 : vector<1x8xf32> to vector<2x8xf32>
    %338 = arith.addf %334, %337 : vector<2x8xf32>
    %cst_244 = arith.constant dense<0.000000e+00> : vector<2x2xf32>
    %339 = tpu.matmul %324, %331, %cst_244 {dimension_numbers = #tpu.dot_dimension_numbers<[1], [1], [0], [0], [0, 0, 1, 0], [], []>} : vector<2x8xf32>, vector<2x8xf32>, vector<2x2xf32> -> vector<2x2xf32>
    %cst_245 = arith.constant dense<0xFF800000> : vector<2xf32>
    %340 = vector.multi_reduction <maximumf>, %339, %cst_245 [1] : vector<2x2xf32> to vector<2xf32>
    %341 = vector.shape_cast %340 : vector<2xf32> to vector<2x1xf32>
    %342 = vector.broadcast %341 : vector<2x1xf32> to vector<2x2xf32>
    %343 = arith.subf %339, %342 : vector<2x2xf32>
    %344 = math.exp %343 : vector<2x2xf32>
    %cst_246 = arith.constant dense<0.000000e+00> : vector<2xf32>
    %345 = vector.multi_reduction <add>, %344, %cst_246 [1] : vector<2x2xf32> to vector<2xf32>
    %346 = vector.shape_cast %345 : vector<2xf32> to vector<2x1xf32>
    %347 = tpu.reciprocal %346 {approx = true} : vector<2x1xf32> -> vector<2x1xf32>
    %348 = vector.broadcast %347 : vector<2x1xf32> to vector<2x2xf32>
    %349 = arith.mulf %344, %348 : vector<2x2xf32>
    %cst_247 = arith.constant dense<0.000000e+00> : vector<2x8xf32>
    %350 = tpu.matmul %349, %338, %cst_247 {dimension_numbers = #tpu.dot_dimension_numbers<[1], [0], [0], [1], [0, 0, 1, 1], [], []>} : vector<2x2xf32>, vector<2x8xf32>, vector<2x8xf32> -> vector<2x8xf32>
    %c6_248 = arith.constant 6 : index
    %c0_249 = arith.constant 0 : index
    %c0_250 = arith.constant 0 : index
    %351 = vector.load %arg9[%c6_248, %c0_249, %c0_250] : memref<8x8x32xf32, #tpu.memory_space<vmem>>, vector<1x8x32xf32>
    %352 = vector.shape_cast %351 : vector<1x8x32xf32> to vector<8x32xf32>
    %cst_251 = arith.constant dense<0.000000e+00> : vector<2x32xf32>
    %353 = tpu.matmul %350, %352, %cst_251 {dimension_numbers = #tpu.dot_dimension_numbers<[1], [0], [0], [1], [0, 0, 1, 1], [], []>} : vector<2x8xf32>, vector<8x32xf32>, vector<2x32xf32> -> vector<2x32xf32>
    %354 = arith.addf %315, %353 : vector<2x32xf32>
    %c7 = arith.constant 7 : index
    %c0_252 = arith.constant 0 : index
    %c0_253 = arith.constant 0 : index
    %355 = vector.load %arg3[%c7, %c0_252, %c0_253] : memref<8x32x8xf32, #tpu.memory_space<vmem>>, vector<1x32x8xf32>
    %356 = vector.shape_cast %355 : vector<1x32x8xf32> to vector<32x8xf32>
    %cst_254 = arith.constant dense<0.000000e+00> : vector<2x8xf32>
    %357 = tpu.matmul %234, %356, %cst_254 {dimension_numbers = #tpu.dot_dimension_numbers<[1], [0], [0], [1], [0, 0, 1, 1], [], []>} : vector<2x32xf32>, vector<32x8xf32>, vector<2x8xf32> -> vector<2x8xf32>
    %c7_255 = arith.constant 7 : index
    %c0_256 = arith.constant 0 : index
    %c0_257 = arith.constant 0 : index
    %358 = vector.load %arg4[%c7_255, %c0_256, %c0_257] : memref<8x1x8xf32, #tpu.memory_space<vmem>>, vector<1x1x8xf32>
    %359 = vector.shape_cast %358 : vector<1x1x8xf32> to vector<1x8xf32>
    %360 = vector.broadcast %359 : vector<1x8xf32> to vector<2x8xf32>
    %361 = arith.addf %357, %360 : vector<2x8xf32>
    %cst_258 = arith.constant 0.353553385 : f32
    %362 = vector.broadcast %cst_258 : f32 to vector<2x8xf32>
    %363 = arith.mulf %361, %362 : vector<2x8xf32>
    %c7_259 = arith.constant 7 : index
    %c0_260 = arith.constant 0 : index
    %c0_261 = arith.constant 0 : index
    %364 = vector.load %arg5[%c7_259, %c0_260, %c0_261] : memref<8x32x8xf32, #tpu.memory_space<vmem>>, vector<1x32x8xf32>
    %365 = vector.shape_cast %364 : vector<1x32x8xf32> to vector<32x8xf32>
    %cst_262 = arith.constant dense<0.000000e+00> : vector<2x8xf32>
    %366 = tpu.matmul %234, %365, %cst_262 {dimension_numbers = #tpu.dot_dimension_numbers<[1], [0], [0], [1], [0, 0, 1, 1], [], []>} : vector<2x32xf32>, vector<32x8xf32>, vector<2x8xf32> -> vector<2x8xf32>
    %c7_263 = arith.constant 7 : index
    %c0_264 = arith.constant 0 : index
    %c0_265 = arith.constant 0 : index
    %367 = vector.load %arg6[%c7_263, %c0_264, %c0_265] : memref<8x1x8xf32, #tpu.memory_space<vmem>>, vector<1x1x8xf32>
    %368 = vector.shape_cast %367 : vector<1x1x8xf32> to vector<1x8xf32>
    %369 = vector.broadcast %368 : vector<1x8xf32> to vector<2x8xf32>
    %370 = arith.addf %366, %369 : vector<2x8xf32>
    %c7_266 = arith.constant 7 : index
    %c0_267 = arith.constant 0 : index
    %c0_268 = arith.constant 0 : index
    %371 = vector.load %arg7[%c7_266, %c0_267, %c0_268] : memref<8x32x8xf32, #tpu.memory_space<vmem>>, vector<1x32x8xf32>
    %372 = vector.shape_cast %371 : vector<1x32x8xf32> to vector<32x8xf32>
    %cst_269 = arith.constant dense<0.000000e+00> : vector<2x8xf32>
    %373 = tpu.matmul %234, %372, %cst_269 {dimension_numbers = #tpu.dot_dimension_numbers<[1], [0], [0], [1], [0, 0, 1, 1], [], []>} : vector<2x32xf32>, vector<32x8xf32>, vector<2x8xf32> -> vector<2x8xf32>
    %c7_270 = arith.constant 7 : index
    %c0_271 = arith.constant 0 : index
    %c0_272 = arith.constant 0 : index
    %374 = vector.load %arg8[%c7_270, %c0_271, %c0_272] : memref<8x1x8xf32, #tpu.memory_space<vmem>>, vector<1x1x8xf32>
    %375 = vector.shape_cast %374 : vector<1x1x8xf32> to vector<1x8xf32>
    %376 = vector.broadcast %375 : vector<1x8xf32> to vector<2x8xf32>
    %377 = arith.addf %373, %376 : vector<2x8xf32>
    %cst_273 = arith.constant dense<0.000000e+00> : vector<2x2xf32>
    %378 = tpu.matmul %363, %370, %cst_273 {dimension_numbers = #tpu.dot_dimension_numbers<[1], [1], [0], [0], [0, 0, 1, 0], [], []>} : vector<2x8xf32>, vector<2x8xf32>, vector<2x2xf32> -> vector<2x2xf32>
    %cst_274 = arith.constant dense<0xFF800000> : vector<2xf32>
    %379 = vector.multi_reduction <maximumf>, %378, %cst_274 [1] : vector<2x2xf32> to vector<2xf32>
    %380 = vector.shape_cast %379 : vector<2xf32> to vector<2x1xf32>
    %381 = vector.broadcast %380 : vector<2x1xf32> to vector<2x2xf32>
    %382 = arith.subf %378, %381 : vector<2x2xf32>
    %383 = math.exp %382 : vector<2x2xf32>
    %cst_275 = arith.constant dense<0.000000e+00> : vector<2xf32>
    %384 = vector.multi_reduction <add>, %383, %cst_275 [1] : vector<2x2xf32> to vector<2xf32>
    %385 = vector.shape_cast %384 : vector<2xf32> to vector<2x1xf32>
    %386 = tpu.reciprocal %385 {approx = true} : vector<2x1xf32> -> vector<2x1xf32>
    %387 = vector.broadcast %386 : vector<2x1xf32> to vector<2x2xf32>
    %388 = arith.mulf %383, %387 : vector<2x2xf32>
    %cst_276 = arith.constant dense<0.000000e+00> : vector<2x8xf32>
    %389 = tpu.matmul %388, %377, %cst_276 {dimension_numbers = #tpu.dot_dimension_numbers<[1], [0], [0], [1], [0, 0, 1, 1], [], []>} : vector<2x2xf32>, vector<2x8xf32>, vector<2x8xf32> -> vector<2x8xf32>
    %c7_277 = arith.constant 7 : index
    %c0_278 = arith.constant 0 : index
    %c0_279 = arith.constant 0 : index
    %390 = vector.load %arg9[%c7_277, %c0_278, %c0_279] : memref<8x8x32xf32, #tpu.memory_space<vmem>>, vector<1x8x32xf32>
    %391 = vector.shape_cast %390 : vector<1x8x32xf32> to vector<8x32xf32>
    %cst_280 = arith.constant dense<0.000000e+00> : vector<2x32xf32>
    %392 = tpu.matmul %389, %391, %cst_280 {dimension_numbers = #tpu.dot_dimension_numbers<[1], [0], [0], [1], [0, 0, 1, 1], [], []>} : vector<2x8xf32>, vector<8x32xf32>, vector<2x32xf32> -> vector<2x32xf32>
    %393 = arith.addf %354, %392 : vector<2x32xf32>
    %394 = arith.addf %234, %393 : vector<2x32xf32>
    %cst_281 = arith.constant dense<0.000000e+00> : vector<2xf32>
    %395 = vector.multi_reduction <add>, %394, %cst_281 [1] : vector<2x32xf32> to vector<2xf32>
    %396 = vector.shape_cast %395 : vector<2xf32> to vector<2x1xf32>
    %cst_282 = arith.constant 3.200000e+01 : f32
    %397 = vector.broadcast %cst_282 : f32 to vector<2x1xf32>
    %398 = arith.divf %396, %397 : vector<2x1xf32>
    %399 = vector.broadcast %398 : vector<2x1xf32> to vector<2x32xf32>
    %400 = arith.subf %394, %399 : vector<2x32xf32>
    %401 = arith.mulf %400, %400 : vector<2x32xf32>
    %cst_283 = arith.constant dense<0.000000e+00> : vector<2xf32>
    %402 = vector.multi_reduction <add>, %401, %cst_283 [1] : vector<2x32xf32> to vector<2xf32>
    %403 = vector.shape_cast %402 : vector<2xf32> to vector<2x1xf32>
    %cst_284 = arith.constant 3.200000e+01 : f32
    %404 = vector.broadcast %cst_284 : f32 to vector<2x1xf32>
    %405 = arith.divf %403, %404 : vector<2x1xf32>
    %406 = vector.broadcast %398 : vector<2x1xf32> to vector<2x32xf32>
    %407 = arith.subf %394, %406 : vector<2x32xf32>
    %cst_285 = arith.constant 9.99999974E-6 : f32
    %408 = vector.broadcast %cst_285 : f32 to vector<2x1xf32>
    %409 = arith.addf %405, %408 : vector<2x1xf32>
    %410 = math.rsqrt %409 : vector<2x1xf32>
    %411 = vector.broadcast %410 : vector<2x1xf32> to vector<2x32xf32>
    %412 = arith.mulf %407, %411 : vector<2x32xf32>
    %c1_286 = arith.constant 1 : index
    %c0_287 = arith.constant 0 : index
    %c0_288 = arith.constant 0 : index
    %413 = vector.load %arg11[%c1_286, %c0_287, %c0_288] : memref<2x1x32xf32, #tpu.memory_space<vmem>>, vector<1x1x32xf32>
    %414 = vector.shape_cast %413 : vector<1x1x32xf32> to vector<1x32xf32>
    %415 = vector.broadcast %414 : vector<1x32xf32> to vector<2x32xf32>
    %416 = arith.mulf %412, %415 : vector<2x32xf32>
    %c1_289 = arith.constant 1 : index
    %c0_290 = arith.constant 0 : index
    %c0_291 = arith.constant 0 : index
    %417 = vector.load %arg12[%c1_289, %c0_290, %c0_291] : memref<2x1x32xf32, #tpu.memory_space<vmem>>, vector<1x1x32xf32>
    %418 = vector.shape_cast %417 : vector<1x1x32xf32> to vector<1x32xf32>
    %419 = vector.broadcast %418 : vector<1x32xf32> to vector<2x32xf32>
    %420 = arith.addf %416, %419 : vector<2x32xf32>
    %c1_292 = arith.constant 1 : index
    %c0_293 = arith.constant 0 : index
    %c0_294 = arith.constant 0 : index
    %421 = vector.load %arg13[%c1_292, %c0_293, %c0_294] : memref<2x32x64xf32, #tpu.memory_space<vmem>>, vector<1x32x64xf32>
    %422 = vector.shape_cast %421 : vector<1x32x64xf32> to vector<32x64xf32>
    %cst_295 = arith.constant dense<0.000000e+00> : vector<2x64xf32>
    %423 = tpu.matmul %420, %422, %cst_295 {dimension_numbers = #tpu.dot_dimension_numbers<[1], [0], [0], [1], [0, 0, 1, 1], [], []>} : vector<2x32xf32>, vector<32x64xf32>, vector<2x64xf32> -> vector<2x64xf32>
    %c1_296 = arith.constant 1 : index
    %c0_297 = arith.constant 0 : index
    %c0_298 = arith.constant 0 : index
    %424 = vector.load %arg14[%c1_296, %c0_297, %c0_298] : memref<2x1x64xf32, #tpu.memory_space<vmem>>, vector<1x1x64xf32>
    %425 = vector.shape_cast %424 : vector<1x1x64xf32> to vector<1x64xf32>
    %426 = vector.broadcast %425 : vector<1x64xf32> to vector<2x64xf32>
    %427 = arith.addf %423, %426 : vector<2x64xf32>
    %cst_299 = arith.constant 0.000000e+00 : f32
    %428 = vector.broadcast %cst_299 : f32 to vector<2x64xf32>
    %429 = arith.maximumf %427, %428 : vector<2x64xf32>
    %c1_300 = arith.constant 1 : index
    %c0_301 = arith.constant 0 : index
    %c0_302 = arith.constant 0 : index
    %430 = vector.load %arg15[%c1_300, %c0_301, %c0_302] : memref<2x64x32xf32, #tpu.memory_space<vmem>>, vector<1x64x32xf32>
    %431 = vector.shape_cast %430 : vector<1x64x32xf32> to vector<64x32xf32>
    %cst_303 = arith.constant dense<0.000000e+00> : vector<2x32xf32>
    %432 = tpu.matmul %429, %431, %cst_303 {dimension_numbers = #tpu.dot_dimension_numbers<[1], [0], [0], [1], [0, 0, 1, 1], [], []>} : vector<2x64xf32>, vector<64x32xf32>, vector<2x32xf32> -> vector<2x32xf32>
    %c1_304 = arith.constant 1 : index
    %c0_305 = arith.constant 0 : index
    %c0_306 = arith.constant 0 : index
    %433 = vector.load %arg16[%c1_304, %c0_305, %c0_306] : memref<2x1x32xf32, #tpu.memory_space<vmem>>, vector<1x1x32xf32>
    %434 = vector.shape_cast %433 : vector<1x1x32xf32> to vector<1x32xf32>
    %435 = vector.broadcast %434 : vector<1x32xf32> to vector<2x32xf32>
    %436 = arith.addf %432, %435 : vector<2x32xf32>
    %437 = arith.addf %420, %436 : vector<2x32xf32>
    %cst_307 = arith.constant dense<0.000000e+00> : vector<2xf32>
    %438 = vector.multi_reduction <add>, %437, %cst_307 [1] : vector<2x32xf32> to vector<2xf32>
    %439 = vector.shape_cast %438 : vector<2xf32> to vector<2x1xf32>
    %cst_308 = arith.constant 3.200000e+01 : f32
    %440 = vector.broadcast %cst_308 : f32 to vector<2x1xf32>
    %441 = arith.divf %439, %440 : vector<2x1xf32>
    %442 = vector.broadcast %441 : vector<2x1xf32> to vector<2x32xf32>
    %443 = arith.subf %437, %442 : vector<2x32xf32>
    %444 = arith.mulf %443, %443 : vector<2x32xf32>
    %cst_309 = arith.constant dense<0.000000e+00> : vector<2xf32>
    %445 = vector.multi_reduction <add>, %444, %cst_309 [1] : vector<2x32xf32> to vector<2xf32>
    %446 = vector.shape_cast %445 : vector<2xf32> to vector<2x1xf32>
    %cst_310 = arith.constant 3.200000e+01 : f32
    %447 = vector.broadcast %cst_310 : f32 to vector<2x1xf32>
    %448 = arith.divf %446, %447 : vector<2x1xf32>
    %449 = vector.broadcast %441 : vector<2x1xf32> to vector<2x32xf32>
    %450 = arith.subf %437, %449 : vector<2x32xf32>
    %cst_311 = arith.constant 9.99999974E-6 : f32
    %451 = vector.broadcast %cst_311 : f32 to vector<2x1xf32>
    %452 = arith.addf %448, %451 : vector<2x1xf32>
    %453 = math.rsqrt %452 : vector<2x1xf32>
    %454 = vector.broadcast %453 : vector<2x1xf32> to vector<2x32xf32>
    %455 = arith.mulf %450, %454 : vector<2x32xf32>
    %c1_312 = arith.constant 1 : index
    %c0_313 = arith.constant 0 : index
    %c0_314 = arith.constant 0 : index
    %456 = vector.load %arg17[%c1_312, %c0_313, %c0_314] : memref<2x1x32xf32, #tpu.memory_space<vmem>>, vector<1x1x32xf32>
    %457 = vector.shape_cast %456 : vector<1x1x32xf32> to vector<1x32xf32>
    %458 = vector.broadcast %457 : vector<1x32xf32> to vector<2x32xf32>
    %459 = arith.mulf %455, %458 : vector<2x32xf32>
    %c1_315 = arith.constant 1 : index
    %c0_316 = arith.constant 0 : index
    %c0_317 = arith.constant 0 : index
    %460 = vector.load %arg18[%c1_315, %c0_316, %c0_317] : memref<2x1x32xf32, #tpu.memory_space<vmem>>, vector<1x1x32xf32>
    %461 = vector.shape_cast %460 : vector<1x1x32xf32> to vector<1x32xf32>
    %462 = vector.broadcast %461 : vector<1x32xf32> to vector<2x32xf32>
    %463 = arith.addf %459, %462 : vector<2x32xf32>
    %c0_318 = arith.constant 0 : index
    %c0_319 = arith.constant 0 : index
    %464 = vector.load %arg19[%c0_318, %c0_319] : memref<32x128xf32, #tpu.memory_space<vmem>>, vector<32x128xf32>
    %cst_320 = arith.constant dense<0.000000e+00> : vector<2x128xf32>
    %465 = tpu.matmul %463, %464, %cst_320 {dimension_numbers = #tpu.dot_dimension_numbers<[1], [0], [0], [1], [0, 0, 1, 1], [], []>} : vector<2x32xf32>, vector<32x128xf32>, vector<2x128xf32> -> vector<2x128xf32>
    %c0_321 = arith.constant 0 : index
    %c0_322 = arith.constant 0 : index
    %466 = vector.load %arg20[%c0_321, %c0_322] : memref<1x128xf32, #tpu.memory_space<vmem>>, vector<1x128xf32>
    %467 = vector.broadcast %466 : vector<1x128xf32> to vector<2x128xf32>
    %468 = arith.addf %465, %467 : vector<2x128xf32>
    %c0_323 = arith.constant 0 : index
    %c0_324 = arith.constant 0 : index
    %469 = vector.load %arg21[%c0_323, %c0_324] : memref<2x128xf32, #tpu.memory_space<vmem>>, vector<2x128xf32>
    tpu.vector_store %arg21[%c0_323, %c0_324], %468 {strides = array<i32>} : memref<2x128xf32, #tpu.memory_space<vmem>>, vector<2x128xf32>,
    return
  }
}

</mosaic_0001>

<llo_original>
// kernel: transformer_model_forward.1
$region0: #{transformer_model_forward.1}
  #allocation0 [shape = 'u32[]', space=smem, size = 0x4, offset = 0x4, fixed_abs, tag = 'smem constant byte address 0x4 - core index']
  #allocation1 [shape = 'u32[144,128]{1,0:T(1,128)}', space=vmem, size = 0x12000, scoped, tag = 'internal scratch']
  %s0 = inlined_call_operand.vmem [shape: f32[2,16], index: 0, kind: input, shape index: {}]
  %s1 = inlined_call_operand.vmem [shape: f32[16,32], index: 1, kind: input, shape index: {}]
  %s2 = inlined_call_operand.vmem [shape: f32[1,32], index: 2, kind: input, shape index: {}]
  %s3 = inlined_call_operand.vmem [shape: f32[8,32,8], index: 3, kind: input, shape index: {}]
  %s4 = inlined_call_operand.vmem [shape: f32[8,1,8], index: 4, kind: input, shape index: {}]
  %s5 = inlined_call_operand.vmem [shape: f32[8,32,8], index: 5, kind: input, shape index: {}]
  %s6 = inlined_call_operand.vmem [shape: f32[8,1,8], index: 6, kind: input, shape index: {}]
  %s7 = inlined_call_operand.vmem [shape: f32[8,32,8], index: 7, kind: input, shape index: {}]
  %s8 = inlined_call_operand.vmem [shape: f32[8,1,8], index: 8, kind: input, shape index: {}]
  %s9 = inlined_call_operand.vmem [shape: f32[8,8,32], index: 9, kind: input, shape index: {}]
  %s10 = inlined_call_operand.vmem [shape: f32[2,1,32], index: 10, kind: input, shape index: {}]
  %s11 = inlined_call_operand.vmem [shape: f32[2,1,32], index: 11, kind: input, shape index: {}]
  %s12 = inlined_call_operand.vmem [shape: f32[2,1,32], index: 12, kind: input, shape index: {}]
  %s13 = inlined_call_operand.vmem [shape: f32[2,32,64], index: 13, kind: input, shape index: {}]
  %s14 = inlined_call_operand.vmem [shape: f32[2,1,64], index: 14, kind: input, shape index: {}]
  %s15 = inlined_call_operand.vmem [shape: f32[2,64,32], index: 15, kind: input, shape index: {}]
  %s16 = inlined_call_operand.vmem [shape: f32[2,1,32], index: 16, kind: input, shape index: {}]
  %s17 = inlined_call_operand.vmem [shape: f32[2,1,32], index: 17, kind: input, shape index: {}]
  %s18 = inlined_call_operand.vmem [shape: f32[2,1,32], index: 18, kind: input, shape index: {}]
  %s19 = inlined_call_operand.vmem [shape: f32[32,128], index: 19, kind: input, shape index: {}]
  %s20 = inlined_call_operand.vmem [shape: f32[1,128], index: 20, kind: input, shape index: {}]
  %s21 = inlined_call_operand.vmem [shape: f32[2,128], index: 21, kind: output, shape index: {}]
  %s22 = sld [smem:[#allocation0]]
  $region94: #{transformer_model_forward.1} parent=0
    _
  %s24 = ssub.s32 1, %s22
  %s25 = scalar_select 0, %s24, %s22
  // Predicated region
  $region2: #{transformer_model_forward.1} parent=0 // pred_check
    _
  $region3: #{transformer_model_forward.1} parent=0 // pred_check_branch
    %27 = sbr.rel (0) target = $region5
  $region4: #{transformer_model_forward.1} parent=0 // pred_region
    _
  $region5: #{transformer_model_forward.1} parent=0 // pred_fallthru
    _
  // Predicated region
  $region6: #{transformer_model_forward.1} parent=0 // pred_check
    _
  $region7: #{transformer_model_forward.1} parent=0 // pred_check_branch
    %29 = sbr.rel (0) target = $region9
  $region8: #{transformer_model_forward.1} parent=0 // pred_region
    _
  $region9: #{transformer_model_forward.1} parent=0 // pred_fallthru
    _
  // Predicated region
  $region10: #{transformer_model_forward.1} parent=0 // pred_check
    _
  $region11: #{transformer_model_forward.1} parent=0 // pred_check_branch
    %31 = sbr.rel (0) target = $region13
  $region12: #{transformer_model_forward.1} parent=0 // pred_region
    _
  $region13: #{transformer_model_forward.1} parent=0 // pred_fallthru
    _
  // Predicated region
  $region14: #{transformer_model_forward.1} parent=0 // pred_check
    _
  $region15: #{transformer_model_forward.1} parent=0 // pred_check_branch
    %33 = sbr.rel (0) target = $region17
  $region16: #{transformer_model_forward.1} parent=0 // pred_region
    _
  $region17: #{transformer_model_forward.1} parent=0 // pred_fallthru
    _
  // Predicated region
  $region18: #{transformer_model_forward.1} parent=0 // pred_check
    _
  $region19: #{transformer_model_forward.1} parent=0 // pred_check_branch
    %35 = sbr.rel (0) target = $region21
  $region20: #{transformer_model_forward.1} parent=0 // pred_region
    _
  $region21: #{transformer_model_forward.1} parent=0 // pred_fallthru
    _
  // Predicated region
  $region22: #{transformer_model_forward.1} parent=0 // pred_check
    _
  $region23: #{transformer_model_forward.1} parent=0 // pred_check_branch
    %37 = sbr.rel (0) target = $region25
  $region24: #{transformer_model_forward.1} parent=0 // pred_region
    _
  $region25: #{transformer_model_forward.1} parent=0 // pred_fallthru
    _
  // Predicated region
  $region26: #{transformer_model_forward.1} parent=0 // pred_check
    _
  $region27: #{transformer_model_forward.1} parent=0 // pred_check_branch
    %39 = sbr.rel (0) target = $region29
  $region28: #{transformer_model_forward.1} parent=0 // pred_region
    _
  $region29: #{transformer_model_forward.1} parent=0 // pred_fallthru
    _
  // Predicated region
  $region30: #{transformer_model_forward.1} parent=0 // pred_check
    _
  $region31: #{transformer_model_forward.1} parent=0 // pred_check_branch
    %41 = sbr.rel (0) target = $region33
  $region32: #{transformer_model_forward.1} parent=0 // pred_region
    _
  $region33: #{transformer_model_forward.1} parent=0 // pred_fallthru
    _
  // Predicated region
  $region34: #{transformer_model_forward.1} parent=0 // pred_check
    _
  $region35: #{transformer_model_forward.1} parent=0 // pred_check_branch
    %43 = sbr.rel (0) target = $region37
  $region36: #{transformer_model_forward.1} parent=0 // pred_region
    _
  $region37: #{transformer_model_forward.1} parent=0 // pred_fallthru
    _
  // Predicated region
  $region38: #{transformer_model_forward.1} parent=0 // pred_check
    _
  $region39: #{transformer_model_forward.1} parent=0 // pred_check_branch
    %45 = sbr.rel (0) target = $region41
  $region40: #{transformer_model_forward.1} parent=0 // pred_region
    _
  $region41: #{transformer_model_forward.1} parent=0 // pred_fallthru
    _
  // Predicated region
  $region42: #{transformer_model_forward.1} parent=0 // pred_check
    _
  $region43: #{transformer_model_forward.1} parent=0 // pred_check_branch
    %47 = sbr.rel (0) target = $region45
  $region44: #{transformer_model_forward.1} parent=0 // pred_region
    _
  $region45: #{transformer_model_forward.1} parent=0 // pred_fallthru
    _
  // Predicated region
  $region46: #{transformer_model_forward.1} parent=0 // pred_check
    _
  $region47: #{transformer_model_forward.1} parent=0 // pred_check_branch
    %49 = sbr.rel (0) target = $region49
  $region48: #{transformer_model_forward.1} parent=0 // pred_region
    _
  $region49: #{transformer_model_forward.1} parent=0 // pred_fallthru
    _
  // Predicated region
  $region50: #{transformer_model_forward.1} parent=0 // pred_check
    _
  $region51: #{transformer_model_forward.1} parent=0 // pred_check_branch
    %51 = sbr.rel (0) target = $region53
  $region52: #{transformer_model_forward.1} parent=0 // pred_region
    _
  $region53: #{transformer_model_forward.1} parent=0 // pred_fallthru
    _
  // Predicated region
  $region54: #{transformer_model_forward.1} parent=0 // pred_check
    _
  $region55: #{transformer_model_forward.1} parent=0 // pred_check_branch
    %53 = sbr.rel (0) target = $region57
  $region56: #{transformer_model_forward.1} parent=0 // pred_region
    _
  $region57: #{transformer_model_forward.1} parent=0 // pred_fallthru
    _
  // Predicated region
  $region58: #{transformer_model_forward.1} parent=0 // pred_check
    _
  $region59: #{transformer_model_forward.1} parent=0 // pred_check_branch
    %55 = sbr.rel (0) target = $region61
  $region60: #{transformer_model_forward.1} parent=0 // pred_region
    _
  $region61: #{transformer_model_forward.1} parent=0 // pred_fallthru
    _
  // Predicated region
  $region62: #{transformer_model_forward.1} parent=0 // pred_check
    _
  $region63: #{transformer_model_forward.1} parent=0 // pred_check_branch
    %57 = sbr.rel (0) target = $region65
  $region64: #{transformer_model_forward.1} parent=0 // pred_region
    _
  $region65: #{transformer_model_forward.1} parent=0 // pred_fallthru
    _
  // Predicated region
  $region66: #{transformer_model_forward.1} parent=0 // pred_check
    _
  $region67: #{transformer_model_forward.1} parent=0 // pred_check_branch
    %59 = sbr.rel (0) target = $region69
  $region68: #{transformer_model_forward.1} parent=0 // pred_region
    _
  $region69: #{transformer_model_forward.1} parent=0 // pred_fallthru
    _
  // Predicated region
  $region70: #{transformer_model_forward.1} parent=0 // pred_check
    _
  $region71: #{transformer_model_forward.1} parent=0 // pred_check_branch
    %61 = sbr.rel (0) target = $region73
  $region72: #{transformer_model_forward.1} parent=0 // pred_region
    _
  $region73: #{transformer_model_forward.1} parent=0 // pred_fallthru
    _
  // Predicated region
  $region74: #{transformer_model_forward.1} parent=0 // pred_check
    _
  $region75: #{transformer_model_forward.1} parent=0 // pred_check_branch
    %63 = sbr.rel (0) target = $region77
  $region76: #{transformer_model_forward.1} parent=0 // pred_region
    _
  $region77: #{transformer_model_forward.1} parent=0 // pred_fallthru
    _
  // Predicated region
  $region78: #{transformer_model_forward.1} parent=0 // pred_check
    _
  $region79: #{transformer_model_forward.1} parent=0 // pred_check_branch
    %65 = sbr.rel (0) target = $region81
  $region80: #{transformer_model_forward.1} parent=0 // pred_region
    _
  $region81: #{transformer_model_forward.1} parent=0 // pred_fallthru
    _
  // Predicated region
  $region82: #{transformer_model_forward.1} parent=0 // pred_check
    _
  $region83: #{transformer_model_forward.1} parent=0 // pred_check_branch
    %67 = sbr.rel (0) target = $region85
  $region84: #{transformer_model_forward.1} parent=0 // pred_region
    _
  $region85: #{transformer_model_forward.1} parent=0 // pred_fallthru
    _
  %v68 = vld [vmem:[%s0] sm:$0x3]
  %v69 = vld [vmem:[%s1] sm:$0xff]
  %v70 = vld [vmem:[%s1 + $0x8] sm:$0xff]
  %v71 = vld [vmem:[%s2] sm:$0x1]
  %v73 = vlaneseq
  %v74 = vshrl.u32 %v73, 7
  %v75 = vsub.s32 0, %v74
  %v76 = vrot.slane %v71, %v75
  %vm78 = vcmask 130048
  %v80 = vsel %vm78, %v68, 0
  %82 = vmatprep.subr.mxu0 0.0
  %83 = vmatpush1.msra.mxu0 %v69
  %84 = vmatprep.subr.mxu0 0.0
  %85 = vmatpush1.msra.mxu0 %v70
  %86 = vmatprep.subr.mxu0 0.0
  %87 = vmatpush1.msra.mxu0 0.0
  %88 = vmatprep.subr.mxu0 0.0
  %89 = vmatpush1.msra.mxu0 0.0
  %90 = vmatprep.subr.mxu0 0.0
  %91 = vmatpush1.msra.mxu0 0.0
  %92 = vmatprep.subr.mxu0 0.0
  %93 = vmatpush1.msra.mxu0 0.0
  %94 = vmatprep.subr.mxu0 0.0
  %95 = vmatpush1.msra.mxu0 0.0
  %96 = vmatprep.subr.mxu0 0.0
  %97 = vmatpush1.msra.mxu0 0.0
  %98 = vmatprep.subr.mxu0 0.0
  %99 = vmatpush1.msra.mxu0 0.0
  %100 = vmatprep.subr.mxu0 0.0
  %101 = vmatpush1.msra.mxu0 0.0
  %102 = vmatprep.subr.mxu0 0.0
  %103 = vmatpush1.msra.mxu0 0.0
  %104 = vmatprep.subr.mxu0 0.0
  %105 = vmatpush1.msra.mxu0 0.0
  %106 = vmatprep.subr.mxu0 0.0
  %107 = vmatpush1.msra.mxu0 0.0
  %108 = vmatprep.subr.mxu0 0.0
  %109 = vmatpush1.msra.mxu0 0.0
  %110 = vmatprep.subr.mxu0 0.0
  %111 = vmatpush1.msra.mxu0 0.0
  %112 = vmatprep.subr.mxu0 0.0
  %113 = vmatpush1.msra.mxu0 0.0
  %114 = vmatprep.subr.mxu0 0.0
  %115 = vmatpush1.msra.mxu0 0.0
  %116 = vmatprep.subr.mxu0 0.0
  %117 = vmatpush1.msra.mxu0 0.0
  %118 = vmatprep.subr.mxu0 0.0
  %119 = vmatpush1.msra.mxu0 0.0
  %120 = vmatprep.subr.mxu0 0.0
  %121 = vmatpush1.msra.mxu0 0.0
  %122 = vmatprep.subr.mxu0 0.0
  %123 = vmatpush1.msra.mxu0 0.0
  %124 = vmatprep.subr.mxu0 0.0
  %125 = vmatpush1.msra.mxu0 0.0
  %126 = vmatprep.subr.mxu0 0.0
  %127 = vmatpush1.msra.mxu0 0.0
  %128 = vmatprep.subr.mxu0 0.0
  %129 = vmatpush1.msra.mxu0 0.0
  %130 = vmatprep.subr.mxu0 0.0
  %131 = vmatpush1.msra.mxu0 0.0
  %132 = vmatprep.subr.mxu0 0.0
  %133 = vmatpush1.msra.mxu0 0.0
  %134 = vmatprep.subr.mxu0 0.0
  %135 = vmatpush1.msra.mxu0 0.0
  %136 = vmatprep.subr.mxu0 0.0
  %137 = vmatpush1.msra.mxu0 0.0
  %138 = vmatprep.subr.mxu0 0.0
  %139 = vmatpush1.msra.mxu0 0.0
  %140 = vmatprep.subr.mxu0 0.0
  %141 = vmatpush1.msra.mxu0 0.0
  %142 = vmatprep.subr.mxu0 0.0
  %143 = vmatpush1.msra.mxu0 0.0
  %144 = vmatprep.subr.mxu0 0.0
  %145 = vmatpush1.msra.mxu0 0.0
  %146 = vmatprep.mubr.f32.mxu0 0.0
  %147 = vmatmul.mubr.f32.gmra.mrb[0].mxu0 %v80
  %v148 = vpop.f32.mrb[0].mxu0
  %v149 = vadd.f32 %v76, %v148
  %v150 = vpop.f32.mrb[0].mxu0
  %151 = vdwg.mxu0
  %v152 = vld [vmem:[%s10] sm:$0x1]
  %v153 = vld [vmem:[%s3] sm:$0xff]
  %v154 = vld [vmem:[%s3 + $0x8] sm:$0xff]
  %v155 = vld [vmem:[%s3 + $0x10] sm:$0xff]
  %v156 = vld [vmem:[%s3 + $0x18] sm:$0xff]
  %v157 = vld [vmem:[%s4] sm:$0x1]
  %v159 = vlaneseq
  %v160 = vshrl.u32 %v159, 7
  %v161 = vsub.s32 0, %v160
  %v162 = vrot.slane %v157, %v161
  %vm164 = vcmask 261120
  %v166 = vsel %vm164, %v149, 0
  %168 = vmatprep.subr.mxu0 0.0
  %169 = vmatpush1.msra.mxu0 %v153
  %170 = vmatprep.subr.mxu0 0.0
  %171 = vmatpush1.msra.mxu0 %v154
  %172 = vmatprep.subr.mxu0 0.0
  %173 = vmatpush1.msra.mxu0 %v155
  %174 = vmatprep.subr.mxu0 0.0
  %175 = vmatpush1.msra.mxu0 %v156
  %176 = vmatprep.subr.mxu0 0.0
  %177 = vmatpush1.msra.mxu0 0.0
  %178 = vmatprep.subr.mxu0 0.0
  %179 = vmatpush1.msra.mxu0 0.0
  %180 = vmatprep.subr.mxu0 0.0
  %181 = vmatpush1.msra.mxu0 0.0
  %182 = vmatprep.subr.mxu0 0.0
  %183 = vmatpush1.msra.mxu0 0.0
  %184 = vmatprep.subr.mxu0 0.0
  %185 = vmatpush1.msra.mxu0 0.0
  %186 = vmatprep.subr.mxu0 0.0
  %187 = vmatpush1.msra.mxu0 0.0
  %188 = vmatprep.subr.mxu0 0.0
  %189 = vmatpush1.msra.mxu0 0.0
  %190 = vmatprep.subr.mxu0 0.0
  %191 = vmatpush1.msra.mxu0 0.0
  %192 = vmatprep.subr.mxu0 0.0
  %193 = vmatpush1.msra.mxu0 0.0
  %194 = vmatprep.subr.mxu0 0.0
  %195 = vmatpush1.msra.mxu0 0.0
  %196 = vmatprep.subr.mxu0 0.0
  %197 = vmatpush1.msra.mxu0 0.0
  %198 = vmatprep.subr.mxu0 0.0
  %199 = vmatpush1.msra.mxu0 0.0
  %200 = vmatprep.subr.mxu0 0.0
  %201 = vmatpush1.msra.mxu0 0.0
  %202 = vmatprep.subr.mxu0 0.0
  %203 = vmatpush1.msra.mxu0 0.0
  %204 = vmatprep.subr.mxu0 0.0
  %205 = vmatpush1.msra.mxu0 0.0
  %206 = vmatprep.subr.mxu0 0.0
  %207 = vmatpush1.msra.mxu0 0.0
  %208 = vmatprep.subr.mxu0 0.0
  %209 = vmatpush1.msra.mxu0 0.0
  %210 = vmatprep.subr.mxu0 0.0
  %211 = vmatpush1.msra.mxu0 0.0
  %212 = vmatprep.subr.mxu0 0.0
  %213 = vmatpush1.msra.mxu0 0.0
  %214 = vmatprep.subr.mxu0 0.0
  %215 = vmatpush1.msra.mxu0 0.0
  %216 = vmatprep.subr.mxu0 0.0
  %217 = vmatpush1.msra.mxu0 0.0
  %218 = vmatprep.subr.mxu0 0.0
  %219 = vmatpush1.msra.mxu0 0.0
  %220 = vmatprep.subr.mxu0 0.0
  %221 = vmatpush1.msra.mxu0 0.0
  %222 = vmatprep.subr.mxu0 0.0
  %223 = vmatpush1.msra.mxu0 0.0
  %224 = vmatprep.subr.mxu0 0.0
  %225 = vmatpush1.msra.mxu0 0.0
  %226 = vmatprep.subr.mxu0 0.0
  %227 = vmatpush1.msra.mxu0 0.0
  %228 = vmatprep.subr.mxu0 0.0
  %229 = vmatpush1.msra.mxu0 0.0
  %230 = vmatprep.subr.mxu0 0.0
  %231 = vmatpush1.msra.mxu0 0.0
  %232 = vmatprep.mubr.f32.mxu0 0.0
  %233 = vmatmul.mubr.f32.gmra.mrb[0].mxu0 %v166
  %v234 = vpop.f32.mrb[0].mxu0
  %v235 = vadd.f32 %v162, %v234
  %v236 = vpop.f32.mrb[0].mxu0
  %237 = vdwg.mxu0
  %v238 = vmul.f32 %v235, 0.35355338
  %v239 = vld [vmem:[%s5] sm:$0xff]
  %v240 = vld [vmem:[%s5 + $0x8] sm:$0xff]
  %v241 = vld [vmem:[%s5 + $0x10] sm:$0xff]
  %v242 = vld [vmem:[%s5 + $0x18] sm:$0xff]
  %v243 = vld [vmem:[%s6] sm:$0x1]
  %v245 = vlaneseq
  %v246 = vshrl.u32 %v245, 7
  %v247 = vsub.s32 0, %v246
  %v248 = vrot.slane %v243, %v247
  %250 = vmatprep.subr.mxu0 0.0
  %251 = vmatpush1.msra.mxu0 %v239
  %252 = vmatprep.subr.mxu0 0.0
  %253 = vmatpush1.msra.mxu0 %v240
  %254 = vmatprep.subr.mxu0 0.0
  %255 = vmatpush1.msra.mxu0 %v241
  %256 = vmatprep.subr.mxu0 0.0
  %257 = vmatpush1.msra.mxu0 %v242
  %258 = vmatprep.subr.mxu0 0.0
  %259 = vmatpush1.msra.mxu0 0.0
  %260 = vmatprep.subr.mxu0 0.0
  %261 = vmatpush1.msra.mxu0 0.0
  %262 = vmatprep.subr.mxu0 0.0
  %263 = vmatpush1.msra.mxu0 0.0
  %264 = vmatprep.subr.mxu0 0.0
  %265 = vmatpush1.msra.mxu0 0.0
  %266 = vmatprep.subr.mxu0 0.0
  %267 = vmatpush1.msra.mxu0 0.0
  %268 = vmatprep.subr.mxu0 0.0
  %269 = vmatpush1.msra.mxu0 0.0
  %270 = vmatprep.subr.mxu0 0.0
  %271 = vmatpush1.msra.mxu0 0.0
  %272 = vmatprep.subr.mxu0 0.0
  %273 = vmatpush1.msra.mxu0 0.0
  %274 = vmatprep.subr.mxu0 0.0
  %275 = vmatpush1.msra.mxu0 0.0
  %276 = vmatprep.subr.mxu0 0.0
  %277 = vmatpush1.msra.mxu0 0.0
  %278 = vmatprep.subr.mxu0 0.0
  %279 = vmatpush1.msra.mxu0 0.0
  %280 = vmatprep.subr.mxu0 0.0
  %281 = vmatpush1.msra.mxu0 0.0
  %282 = vmatprep.subr.mxu0 0.0
  %283 = vmatpush1.msra.mxu0 0.0
  %284 = vmatprep.subr.mxu0 0.0
  %285 = vmatpush1.msra.mxu0 0.0
  %286 = vmatprep.subr.mxu0 0.0
  %287 = vmatpush1.msra.mxu0 0.0
  %288 = vmatprep.subr.mxu0 0.0
  %289 = vmatpush1.msra.mxu0 0.0
  %290 = vmatprep.subr.mxu0 0.0
  %291 = vmatpush1.msra.mxu0 0.0
  %292 = vmatprep.subr.mxu0 0.0
  %293 = vmatpush1.msra.mxu0 0.0
  %294 = vmatprep.subr.mxu0 0.0
  %295 = vmatpush1.msra.mxu0 0.0
  %296 = vmatprep.subr.mxu0 0.0
  %297 = vmatpush1.msra.mxu0 0.0
  %298 = vmatprep.subr.mxu0 0.0
  %299 = vmatpush1.msra.mxu0 0.0
  %300 = vmatprep.subr.mxu0 0.0
  %301 = vmatpush1.msra.mxu0 0.0
  %302 = vmatprep.subr.mxu0 0.0
  %303 = vmatpush1.msra.mxu0 0.0
  %304 = vmatprep.subr.mxu0 0.0
  %305 = vmatpush1.msra.mxu0 0.0
  %306 = vmatprep.subr.mxu0 0.0
  %307 = vmatpush1.msra.mxu0 0.0
  %308 = vmatprep.subr.mxu0 0.0
  %309 = vmatpush1.msra.mxu0 0.0
  %310 = vmatprep.subr.mxu0 0.0
  %311 = vmatpush1.msra.mxu0 0.0
  %312 = vmatprep.subr.mxu0 0.0
  %313 = vmatpush1.msra.mxu0 0.0
  %314 = vmatprep.mubr.f32.mxu0 0.0
  %315 = vmatmul.mubr.f32.gmra.mrb[0].mxu0 %v166
  %v316 = vpop.f32.mrb[0].mxu0
  %v317 = vadd.f32 %v248, %v316
  %v318 = vpop.f32.mrb[0].mxu0
  %319 = vdwg.mxu0
  %v320 = vld [vmem:[%s7] sm:$0xff]
  %v321 = vld [vmem:[%s7 + $0x8] sm:$0xff]
  %v322 = vld [vmem:[%s7 + $0x10] sm:$0xff]
  %v323 = vld [vmem:[%s7 + $0x18] sm:$0xff]
  %v324 = vld [vmem:[%s8] sm:$0x1]
  %v326 = vlaneseq
  %v327 = vshrl.u32 %v326, 7
  %v328 = vsub.s32 0, %v327
  %v329 = vrot.slane %v324, %v328
  %331 = vmatprep.subr.mxu0 0.0
  %332 = vmatpush1.msra.mxu0 %v320
  %333 = vmatprep.subr.mxu0 0.0
  %334 = vmatpush1.msra.mxu0 %v321
  %335 = vmatprep.subr.mxu0 0.0
  %336 = vmatpush1.msra.mxu0 %v322
  %337 = vmatprep.subr.mxu0 0.0
  %338 = vmatpush1.msra.mxu0 %v323
  %339 = vmatprep.subr.mxu0 0.0
  %340 = vmatpush1.msra.mxu0 0.0
  %341 = vmatprep.subr.mxu0 0.0
  %342 = vmatpush1.msra.mxu0 0.0
  %343 = vmatprep.subr.mxu0 0.0
  %344 = vmatpush1.msra.mxu0 0.0
  %345 = vmatprep.subr.mxu0 0.0
  %346 = vmatpush1.msra.mxu0 0.0
  %347 = vmatprep.subr.mxu0 0.0
  %348 = vmatpush1.msra.mxu0 0.0
  %349 = vmatprep.subr.mxu0 0.0
  %350 = vmatpush1.msra.mxu0 0.0
  %351 = vmatprep.subr.mxu0 0.0
  %352 = vmatpush1.msra.mxu0 0.0
  %353 = vmatprep.subr.mxu0 0.0
  %354 = vmatpush1.msra.mxu0 0.0
  %355 = vmatprep.subr.mxu0 0.0
  %356 = vmatpush1.msra.mxu0 0.0
  %357 = vmatprep.subr.mxu0 0.0
  %358 = vmatpush1.msra.mxu0 0.0
  %359 = vmatprep.subr.mxu0 0.0
  %360 = vmatpush1.msra.mxu0 0.0
  %361 = vmatprep.subr.mxu0 0.0
  %362 = vmatpush1.msra.mxu0 0.0
  %363 = vmatprep.subr.mxu0 0.0
  %364 = vmatpush1.msra.mxu0 0.0
  %365 = vmatprep.subr.mxu0 0.0
  %366 = vmatpush1.msra.mxu0 0.0
  %367 = vmatprep.subr.mxu0 0.0
  %368 = vmatpush1.msra.mxu0 0.0
  %369 = vmatprep.subr.mxu0 0.0
  %370 = vmatpush1.msra.mxu0 0.0
  %371 = vmatprep.subr.mxu0 0.0
  %372 = vmatpush1.msra.mxu0 0.0
  %373 = vmatprep.subr.mxu0 0.0
  %374 = vmatpush1.msra.mxu0 0.0
  %375 = vmatprep.subr.mxu0 0.0
  %376 = vmatpush1.msra.mxu0 0.0
  %377 = vmatprep.subr.mxu0 0.0
  %378 = vmatpush1.msra.mxu0 0.0
  %379 = vmatprep.subr.mxu0 0.0
  %380 = vmatpush1.msra.mxu0 0.0
  %381 = vmatprep.subr.mxu0 0.0
  %382 = vmatpush1.msra.mxu0 0.0
  %383 = vmatprep.subr.mxu0 0.0
  %384 = vmatpush1.msra.mxu0 0.0
  %385 = vmatprep.subr.mxu0 0.0
  %386 = vmatpush1.msra.mxu0 0.0
  %387 = vmatprep.subr.mxu0 0.0
  %388 = vmatpush1.msra.mxu0 0.0
  %389 = vmatprep.subr.mxu0 0.0
  %390 = vmatpush1.msra.mxu0 0.0
  %391 = vmatprep.subr.mxu0 0.0
  %392 = vmatpush1.msra.mxu0 0.0
  %393 = vmatprep.subr.mxu0 0.0
  %394 = vmatpush1.msra.mxu0 0.0
  %395 = vmatprep.mubr.f32.mxu0 0.0
  %396 = vmatmul.mubr.f32.gmra.mrb[0].mxu0 %v166
  %v397 = vpop.f32.mrb[0].mxu0
  %v398 = vadd.f32 %v329, %v397
  %v399 = vpop.f32.mrb[0].mxu0
  %400 = vdwg.mxu0
  %vm401 = vcmask 64512
  %v403 = vsel %vm401, %v238, 0
  %v406 = vsel %vm401, %v317, 0
  %408 = vmatprep.subr.mxu0 0.0
  %409 = vmatpush1.xpose.msra.mxu0 %v406
  %410 = vmatprep.subr.mxu0 0.0
  %411 = vmatpush1.xpose.msra.mxu0 0.0
  %412 = vmatprep.subr.mxu0 0.0
  %413 = vmatpush1.xpose.msra.mxu0 0.0
  %414 = vmatprep.subr.mxu0 0.0
  %415 = vmatpush1.xpose.msra.mxu0 0.0
  %416 = vmatprep.subr.mxu0 0.0
  %417 = vmatpush1.xpose.msra.mxu0 0.0
  %418 = vmatprep.subr.mxu0 0.0
  %419 = vmatpush1.xpose.msra.mxu0 0.0
  %420 = vmatprep.subr.mxu0 0.0
  %421 = vmatpush1.xpose.msra.mxu0 0.0
  %422 = vmatprep.subr.mxu0 0.0
  %423 = vmatpush1.xpose.msra.mxu0 0.0
  %424 = vmatprep.subr.mxu0 0.0
  %425 = vmatpush1.xpose.msra.mxu0 0.0
  %426 = vmatprep.subr.mxu0 0.0
  %427 = vmatpush1.xpose.msra.mxu0 0.0
  %428 = vmatprep.subr.mxu0 0.0
  %429 = vmatpush1.xpose.msra.mxu0 0.0
  %430 = vmatprep.subr.mxu0 0.0
  %431 = vmatpush1.xpose.msra.mxu0 0.0
  %432 = vmatprep.subr.mxu0 0.0
  %433 = vmatpush1.xpose.msra.mxu0 0.0
  %434 = vmatprep.subr.mxu0 0.0
  %435 = vmatpush1.xpose.msra.mxu0 0.0
  %436 = vmatprep.subr.mxu0 0.0
  %437 = vmatpush1.xpose.msra.mxu0 0.0
  %438 = vmatprep.subr.mxu0 0.0
  %439 = vmatpush1.xpose.msra.mxu0 0.0
  %440 = vmatprep.subr.mxu0 0.0
  %441 = vmatpush1.xpose.msra.mxu0 0.0
  %442 = vmatprep.subr.mxu0 0.0
  %443 = vmatpush1.xpose.msra.mxu0 0.0
  %444 = vmatprep.subr.mxu0 0.0
  %445 = vmatpush1.xpose.msra.mxu0 0.0
  %446 = vmatprep.subr.mxu0 0.0
  %447 = vmatpush1.xpose.msra.mxu0 0.0
  %448 = vmatprep.subr.mxu0 0.0
  %449 = vmatpush1.xpose.msra.mxu0 0.0
  %450 = vmatprep.subr.mxu0 0.0
  %451 = vmatpush1.xpose.msra.mxu0 0.0
  %452 = vmatprep.subr.mxu0 0.0
  %453 = vmatpush1.xpose.msra.mxu0 0.0
  %454 = vmatprep.subr.mxu0 0.0
  %455 = vmatpush1.xpose.msra.mxu0 0.0
  %456 = vmatprep.subr.mxu0 0.0
  %457 = vmatpush1.xpose.msra.mxu0 0.0
  %458 = vmatprep.subr.mxu0 0.0
  %459 = vmatpush1.xpose.msra.mxu0 0.0
  %460 = vmatprep.subr.mxu0 0.0
  %461 = vmatpush1.xpose.msra.mxu0 0.0
  %462 = vmatprep.subr.mxu0 0.0
  %463 = vmatpush1.xpose.msra.mxu0 0.0
  %464 = vmatprep.subr.mxu0 0.0
  %465 = vmatpush1.xpose.msra.mxu0 0.0
  %466 = vmatprep.subr.mxu0 0.0
  %467 = vmatpush1.xpose.msra.mxu0 0.0
  %468 = vmatprep.subr.mxu0 0.0
  %469 = vmatpush1.xpose.msra.mxu0 0.0
  %470 = vmatprep.subr.mxu0 0.0
  %471 = vmatpush1.xpose.msra.mxu0 0.0
  %472 = vmatprep.mubr.f32.mxu0 0.0
  %473 = vmatmul.mubr.f32.gmra.mrb[0].mxu0 %v403
  %v474 = vpop.f32.mrb[0].mxu0
  %v475 = vadd.f32 0.0, %v474
  %v476 = vpop.f32.mrb[0].mxu0
  %477 = vdwg.mxu0
  %vm478 = vcmask 9216
  %v479 = vsel %vm478, %v475, -inf
  %480 = vmax.xlane.f32.xlu0 %v479
  %v481 = vpop.xlane.xlu0 %480
  %v482 = vsub.f32 %v475, %v481
  %v483 = vmul.f32 %v482, 1.442695
  %v484 = vpow.pop %v483
  %v485 = vsel %vm478, %v484, 0.0
  %486 = vadd.xlane.f32.xlu0 %v485
  %v487 = vpop.xlane.xlu0 %486
  %v488 = vrcp.pop %v487
  %v489 = vmul.f32 %v484, %v488
  %vm490 = vcmask 15360
  %v492 = vsel %vm490, %v489, 0
  %vm494 = vcmask 1041408
  %v496 = vsel %vm494, %v398, 0
  %498 = vmatprep.subr.mxu0 0.0
  %499 = vmatpush1.msra.mxu0 %v496
  %500 = vmatprep.subr.mxu0 0.0
  %501 = vmatpush1.msra.mxu0 0.0
  %502 = vmatprep.subr.mxu0 0.0
  %503 = vmatpush1.msra.mxu0 0.0
  %504 = vmatprep.subr.mxu0 0.0
  %505 = vmatpush1.msra.mxu0 0.0
  %506 = vmatprep.subr.mxu0 0.0
  %507 = vmatpush1.msra.mxu0 0.0
  %508 = vmatprep.subr.mxu0 0.0
  %509 = vmatpush1.msra.mxu0 0.0
  %510 = vmatprep.subr.mxu0 0.0
  %511 = vmatpush1.msra.mxu0 0.0
  %512 = vmatprep.subr.mxu0 0.0
  %513 = vmatpush1.msra.mxu0 0.0
  %514 = vmatprep.subr.mxu0 0.0
  %515 = vmatpush1.msra.mxu0 0.0
  %516 = vmatprep.subr.mxu0 0.0
  %517 = vmatpush1.msra.mxu0 0.0
  %518 = vmatprep.subr.mxu0 0.0
  %519 = vmatpush1.msra.mxu0 0.0
  %520 = vmatprep.subr.mxu0 0.0
  %521 = vmatpush1.msra.mxu0 0.0
  %522 = vmatprep.subr.mxu0 0.0
  %523 = vmatpush1.msra.mxu0 0.0
  %524 = vmatprep.subr.mxu0 0.0
  %525 = vmatpush1.msra.mxu0 0.0
  %526 = vmatprep.subr.mxu0 0.0
  %527 = vmatpush1.msra.mxu0 0.0
  %528 = vmatprep.subr.mxu0 0.0
  %529 = vmatpush1.msra.mxu0 0.0
  %530 = vmatprep.subr.mxu0 0.0
  %531 = vmatpush1.msra.mxu0 0.0
  %532 = vmatprep.subr.mxu0 0.0
  %533 = vmatpush1.msra.mxu0 0.0
  %534 = vmatprep.subr.mxu0 0.0
  %535 = vmatpush1.msra.mxu0 0.0
  %536 = vmatprep.subr.mxu0 0.0
  %537 = vmatpush1.msra.mxu0 0.0
  %538 = vmatprep.subr.mxu0 0.0
  %539 = vmatpush1.msra.mxu0 0.0
  %540 = vmatprep.subr.mxu0 0.0
  %541 = vmatpush1.msra.mxu0 0.0
  %542 = vmatprep.subr.mxu0 0.0
  %543 = vmatpush1.msra.mxu0 0.0
  %544 = vmatprep.subr.mxu0 0.0
  %545 = vmatpush1.msra.mxu0 0.0
  %546 = vmatprep.subr.mxu0 0.0
  %547 = vmatpush1.msra.mxu0 0.0
  %548 = vmatprep.subr.mxu0 0.0
  %549 = vmatpush1.msra.mxu0 0.0
  %550 = vmatprep.subr.mxu0 0.0
  %551 = vmatpush1.msra.mxu0 0.0
  %552 = vmatprep.subr.mxu0 0.0
  %553 = vmatpush1.msra.mxu0 0.0
  %554 = vmatprep.subr.mxu0 0.0
  %555 = vmatpush1.msra.mxu0 0.0
  %556 = vmatprep.subr.mxu0 0.0
  %557 = vmatpush1.msra.mxu0 0.0
  %558 = vmatprep.subr.mxu0 0.0
  %559 = vmatpush1.msra.mxu0 0.0
  %560 = vmatprep.subr.mxu0 0.0
  %561 = vmatpush1.msra.mxu0 0.0
  %562 = vmatprep.mubr.f32.mxu0 0.0
  %563 = vmatmul.mubr.f32.gmra.mrb[0].mxu0 %v492
  %v564 = vpop.f32.mrb[0].mxu0
  %v565 = vadd.f32 0.0, %v564
  %v566 = vpop.f32.mrb[0].mxu0
  %567 = vdwg.mxu0
  %v568 = vld [vmem:[%s9] sm:$0xff]
  %v570 = vsel %vm401, %v565, 0
  %572 = vmatprep.subr.mxu0 0.0
  %573 = vmatpush1.msra.mxu0 %v568
  %574 = vmatprep.subr.mxu0 0.0
  %575 = vmatpush1.msra.mxu0 0.0
  %576 = vmatprep.subr.mxu0 0.0
  %577 = vmatpush1.msra.mxu0 0.0
  %578 = vmatprep.subr.mxu0 0.0
  %579 = vmatpush1.msra.mxu0 0.0
  %580 = vmatprep.subr.mxu0 0.0
  %581 = vmatpush1.msra.mxu0 0.0
  %582 = vmatprep.subr.mxu0 0.0
  %583 = vmatpush1.msra.mxu0 0.0
  %584 = vmatprep.subr.mxu0 0.0
  %585 = vmatpush1.msra.mxu0 0.0
  %586 = vmatprep.subr.mxu0 0.0
  %587 = vmatpush1.msra.mxu0 0.0
  %588 = vmatprep.subr.mxu0 0.0
  %589 = vmatpush1.msra.mxu0 0.0
  %590 = vmatprep.subr.mxu0 0.0
  %591 = vmatpush1.msra.mxu0 0.0
  %592 = vmatprep.subr.mxu0 0.0
  %593 = vmatpush1.msra.mxu0 0.0
  %594 = vmatprep.subr.mxu0 0.0
  %595 = vmatpush1.msra.mxu0 0.0
  %596 = vmatprep.subr.mxu0 0.0
  %597 = vmatpush1.msra.mxu0 0.0
  %598 = vmatprep.subr.mxu0 0.0
  %599 = vmatpush1.msra.mxu0 0.0
  %600 = vmatprep.subr.mxu0 0.0
  %601 = vmatpush1.msra.mxu0 0.0
  %602 = vmatprep.subr.mxu0 0.0
  %603 = vmatpush1.msra.mxu0 0.0
  %604 = vmatprep.subr.mxu0 0.0
  %605 = vmatpush1.msra.mxu0 0.0
  %606 = vmatprep.subr.mxu0 0.0
  %607 = vmatpush1.msra.mxu0 0.0
  %608 = vmatprep.subr.mxu0 0.0
  %609 = vmatpush1.msra.mxu0 0.0
  %610 = vmatprep.subr.mxu0 0.0
  %611 = vmatpush1.msra.mxu0 0.0
  %612 = vmatprep.subr.mxu0 0.0
  %613 = vmatpush1.msra.mxu0 0.0
  %614 = vmatprep.subr.mxu0 0.0
  %615 = vmatpush1.msra.mxu0 0.0
  %616 = vmatprep.subr.mxu0 0.0
  %617 = vmatpush1.msra.mxu0 0.0
  %618 = vmatprep.subr.mxu0 0.0
  %619 = vmatpush1.msra.mxu0 0.0
  %620 = vmatprep.subr.mxu0 0.0
  %621 = vmatpush1.msra.mxu0 0.0
  %622 = vmatprep.subr.mxu0 0.0
  %623 = vmatpush1.msra.mxu0 0.0
  %624 = vmatprep.subr.mxu0 0.0
  %625 = vmatpush1.msra.mxu0 0.0
  %626 = vmatprep.subr.mxu0 0.0
  %627 = vmatpush1.msra.mxu0 0.0
  %628 = vmatprep.subr.mxu0 0.0
  %629 = vmatpush1.msra.mxu0 0.0
  %630 = vmatprep.subr.mxu0 0.0
  %631 = vmatpush1.msra.mxu0 0.0
  %632 = vmatprep.subr.mxu0 0.0
  %633 = vmatpush1.msra.mxu0 0.0
  %634 = vmatprep.subr.mxu0 0.0
  %635 = vmatpush1.msra.mxu0 0.0
  %636 = vmatprep.mubr.f32.mxu0 0.0
  %637 = vmatmul.mubr.f32.gmra.mrb[0].mxu0 %v570
  %v638 = vpop.f32.mrb[0].mxu0
  %v639 = vadd.f32 0.0, %v638
  %v640 = vpop.f32.mrb[0].mxu0
  %641 = vdwg.mxu0
  %v643 = vlaneseq
  %v644 = vshrl.u32 %v643, 7
  %v645 = vsub.s32 0, %v644
  %v646 = vrot.slane %v152, %v645
  %v648 = vadd.f32 %v646, %v639
  %s649 = scalar_lea.vmem %s3, 32
  %v650 = vld [vmem:[%s649] sm:$0xff]
  %v651 = vld [vmem:[%s649 + $0x8] sm:$0xff]
  %v652 = vld [vmem:[%s649 + $0x10] sm:$0xff]
  %v653 = vld [vmem:[%s649 + $0x18] sm:$0xff]
  %s654 = scalar_lea.vmem %s4, 1
  %v655 = vld [vmem:[%s654] sm:$0x1]
  %v657 = vlaneseq
  %v658 = vshrl.u32 %v657, 7
  %v659 = vsub.s32 0, %v658
  %v660 = vrot.slane %v655, %v659
  %662 = vmatprep.subr.mxu0 0.0
  %663 = vmatpush1.msra.mxu0 %v650
  %664 = vmatprep.subr.mxu0 0.0
  %665 = vmatpush1.msra.mxu0 %v651
  %666 = vmatprep.subr.mxu0 0.0
  %667 = vmatpush1.msra.mxu0 %v652
  %668 = vmatprep.subr.mxu0 0.0
  %669 = vmatpush1.msra.mxu0 %v653
  %670 = vmatprep.subr.mxu0 0.0
  %671 = vmatpush1.msra.mxu0 0.0
  %672 = vmatprep.subr.mxu0 0.0
  %673 = vmatpush1.msra.mxu0 0.0
  %674 = vmatprep.subr.mxu0 0.0
  %675 = vmatpush1.msra.mxu0 0.0
  %676 = vmatprep.subr.mxu0 0.0
  %677 = vmatpush1.msra.mxu0 0.0
  %678 = vmatprep.subr.mxu0 0.0
  %679 = vmatpush1.msra.mxu0 0.0
  %680 = vmatprep.subr.mxu0 0.0
  %681 = vmatpush1.msra.mxu0 0.0
  %682 = vmatprep.subr.mxu0 0.0
  %683 = vmatpush1.msra.mxu0 0.0
  %684 = vmatprep.subr.mxu0 0.0
  %685 = vmatpush1.msra.mxu0 0.0
  %686 = vmatprep.subr.mxu0 0.0
  %687 = vmatpush1.msra.mxu0 0.0
  %688 = vmatprep.subr.mxu0 0.0
  %689 = vmatpush1.msra.mxu0 0.0
  %690 = vmatprep.subr.mxu0 0.0
  %691 = vmatpush1.msra.mxu0 0.0
  %692 = vmatprep.subr.mxu0 0.0
  %693 = vmatpush1.msra.mxu0 0.0
  %694 = vmatprep.subr.mxu0 0.0
  %695 = vmatpush1.msra.mxu0 0.0
  %696 = vmatprep.subr.mxu0 0.0
  %697 = vmatpush1.msra.mxu0 0.0
  %698 = vmatprep.subr.mxu0 0.0
  %699 = vmatpush1.msra.mxu0 0.0
  %700 = vmatprep.subr.mxu0 0.0
  %701 = vmatpush1.msra.mxu0 0.0
  %702 = vmatprep.subr.mxu0 0.0
  %703 = vmatpush1.msra.mxu0 0.0
  %704 = vmatprep.subr.mxu0 0.0
  %705 = vmatpush1.msra.mxu0 0.0
  %706 = vmatprep.subr.mxu0 0.0
  %707 = vmatpush1.msra.mxu0 0.0
  %708 = vmatprep.subr.mxu0 0.0
  %709 = vmatpush1.msra.mxu0 0.0
  %710 = vmatprep.subr.mxu0 0.0
  %711 = vmatpush1.msra.mxu0 0.0
  %712 = vmatprep.subr.mxu0 0.0
  %713 = vmatpush1.msra.mxu0 0.0
  %714 = vmatprep.subr.mxu0 0.0
  %715 = vmatpush1.msra.mxu0 0.0
  %716 = vmatprep.subr.mxu0 0.0
  %717 = vmatpush1.msra.mxu0 0.0
  %718 = vmatprep.subr.mxu0 0.0
  %719 = vmatpush1.msra.mxu0 0.0
  %720 = vmatprep.subr.mxu0 0.0
  %721 = vmatpush1.msra.mxu0 0.0
  %722 = vmatprep.subr.mxu0 0.0
  %723 = vmatpush1.msra.mxu0 0.0
  %724 = vmatprep.subr.mxu0 0.0
  %725 = vmatpush1.msra.mxu0 0.0
  %726 = vmatprep.mubr.f32.mxu0 0.0
  %727 = vmatmul.mubr.f32.gmra.mrb[0].mxu0 %v166
  %v728 = vpop.f32.mrb[0].mxu0
  %v729 = vadd.f32 %v660, %v728
  %v730 = vpop.f32.mrb[0].mxu0
  %731 = vdwg.mxu0
  %v732 = vmul.f32 %v729, 0.35355338
  %s733 = scalar_lea.vmem %s5, 32
  %v734 = vld [vmem:[%s733] sm:$0xff]
  %v735 = vld [vmem:[%s733 + $0x8] sm:$0xff]
  %v736 = vld [vmem:[%s733 + $0x10] sm:$0xff]
  %v737 = vld [vmem:[%s733 + $0x18] sm:$0xff]
  %s738 = scalar_lea.vmem %s6, 1
  %v739 = vld [vmem:[%s738] sm:$0x1]
  %v741 = vlaneseq
  %v742 = vshrl.u32 %v741, 7
  %v743 = vsub.s32 0, %v742
  %v744 = vrot.slane %v739, %v743
  %746 = vmatprep.subr.mxu0 0.0
  %747 = vmatpush1.msra.mxu0 %v734
  %748 = vmatprep.subr.mxu0 0.0
  %749 = vmatpush1.msra.mxu0 %v735
  %750 = vmatprep.subr.mxu0 0.0
  %751 = vmatpush1.msra.mxu0 %v736
  %752 = vmatprep.subr.mxu0 0.0
  %753 = vmatpush1.msra.mxu0 %v737
  %754 = vmatprep.subr.mxu0 0.0
  %755 = vmatpush1.msra.mxu0 0.0
  %756 = vmatprep.subr.mxu0 0.0
  %757 = vmatpush1.msra.mxu0 0.0
  %758 = vmatprep.subr.mxu0 0.0
  %759 = vmatpush1.msra.mxu0 0.0
  %760 = vmatprep.subr.mxu0 0.0
  %761 = vmatpush1.msra.mxu0 0.0
  %762 = vmatprep.subr.mxu0 0.0
  %763 = vmatpush1.msra.mxu0 0.0
  %764 = vmatprep.subr.mxu0 0.0
  %765 = vmatpush1.msra.mxu0 0.0
  %766 = vmatprep.subr.mxu0 0.0
  %767 = vmatpush1.msra.mxu0 0.0
  %768 = vmatprep.subr.mxu0 0.0
  %769 = vmatpush1.msra.mxu0 0.0
  %770 = vmatprep.subr.mxu0 0.0
  %771 = vmatpush1.msra.mxu0 0.0
  %772 = vmatprep.subr.mxu0 0.0
  %773 = vmatpush1.msra.mxu0 0.0
  %774 = vmatprep.subr.mxu0 0.0
  %775 = vmatpush1.msra.mxu0 0.0
  %776 = vmatprep.subr.mxu0 0.0
  %777 = vmatpush1.msra.mxu0 0.0
  %778 = vmatprep.subr.mxu0 0.0
  %779 = vmatpush1.msra.mxu0 0.0
  %780 = vmatprep.subr.mxu0 0.0
  %781 = vmatpush1.msra.mxu0 0.0
  %782 = vmatprep.subr.mxu0 0.0
  %783 = vmatpush1.msra.mxu0 0.0
  %784 = vmatprep.subr.mxu0 0.0
  %785 = vmatpush1.msra.mxu0 0.0
  %786 = vmatprep.subr.mxu0 0.0
  %787 = vmatpush1.msra.mxu0 0.0
  %788 = vmatprep.subr.mxu0 0.0
  %789 = vmatpush1.msra.mxu0 0.0
  %790 = vmatprep.subr.mxu0 0.0
  %791 = vmatpush1.msra.mxu0 0.0
  %792 = vmatprep.subr.mxu0 0.0
  %793 = vmatpush1.msra.mxu0 0.0
  %794 = vmatprep.subr.mxu0 0.0
  %795 = vmatpush1.msra.mxu0 0.0
  %796 = vmatprep.subr.mxu0 0.0
  %797 = vmatpush1.msra.mxu0 0.0
  %798 = vmatprep.subr.mxu0 0.0
  %799 = vmatpush1.msra.mxu0 0.0
  %800 = vmatprep.subr.mxu0 0.0
  %801 = vmatpush1.msra.mxu0 0.0
  %802 = vmatprep.subr.mxu0 0.0
  %803 = vmatpush1.msra.mxu0 0.0
  %804 = vmatprep.subr.mxu0 0.0
  %805 = vmatpush1.msra.mxu0 0.0
  %806 = vmatprep.subr.mxu0 0.0
  %807 = vmatpush1.msra.mxu0 0.0
  %808 = vmatprep.subr.mxu0 0.0
  %809 = vmatpush1.msra.mxu0 0.0
  %810 = vmatprep.mubr.f32.mxu0 0.0
  %811 = vmatmul.mubr.f32.gmra.mrb[0].mxu0 %v166
  %v812 = vpop.f32.mrb[0].mxu0
  %v813 = vadd.f32 %v744, %v812
  %v814 = vpop.f32.mrb[0].mxu0
  %815 = vdwg.mxu0
  %s816 = scalar_lea.vmem %s7, 32
  %v817 = vld [vmem:[%s816] sm:$0xff]
  %v818 = vld [vmem:[%s816 + $0x8] sm:$0xff]
  %v819 = vld [vmem:[%s816 + $0x10] sm:$0xff]
  %v820 = vld [vmem:[%s816 + $0x18] sm:$0xff]
  %s821 = scalar_lea.vmem %s8, 1
  %v822 = vld [vmem:[%s821] sm:$0x1]
  %v824 = vlaneseq
  %v825 = vshrl.u32 %v824, 7
  %v826 = vsub.s32 0, %v825
  %v827 = vrot.slane %v822, %v826
  %829 = vmatprep.subr.mxu0 0.0
  %830 = vmatpush1.msra.mxu0 %v817
  %831 = vmatprep.subr.mxu0 0.0
  %832 = vmatpush1.msra.mxu0 %v818
  %833 = vmatprep.subr.mxu0 0.0
  %834 = vmatpush1.msra.mxu0 %v819
  %835 = vmatprep.subr.mxu0 0.0
  %836 = vmatpush1.msra.mxu0 %v820
  %837 = vmatprep.subr.mxu0 0.0
  %838 = vmatpush1.msra.mxu0 0.0
  %839 = vmatprep.subr.mxu0 0.0
  %840 = vmatpush1.msra.mxu0 0.0
  %841 = vmatprep.subr.mxu0 0.0
  %842 = vmatpush1.msra.mxu0 0.0
  %843 = vmatprep.subr.mxu0 0.0
  %844 = vmatpush1.msra.mxu0 0.0
  %845 = vmatprep.subr.mxu0 0.0
  %846 = vmatpush1.msra.mxu0 0.0
  %847 = vmatprep.subr.mxu0 0.0
  %848 = vmatpush1.msra.mxu0 0.0
  %849 = vmatprep.subr.mxu0 0.0
  %850 = vmatpush1.msra.mxu0 0.0
  %851 = vmatprep.subr.mxu0 0.0
  %852 = vmatpush1.msra.mxu0 0.0
  %853 = vmatprep.subr.mxu0 0.0
  %854 = vmatpush1.msra.mxu0 0.0
  %855 = vmatprep.subr.mxu0 0.0
  %856 = vmatpush1.msra.mxu0 0.0
  %857 = vmatprep.subr.mxu0 0.0
  %858 = vmatpush1.msra.mxu0 0.0
  %859 = vmatprep.subr.mxu0 0.0
  %860 = vmatpush1.msra.mxu0 0.0
  %861 = vmatprep.subr.mxu0 0.0
  %862 = vmatpush1.msra.mxu0 0.0
  %863 = vmatprep.subr.mxu0 0.0
  %864 = vmatpush1.msra.mxu0 0.0
  %865 = vmatprep.subr.mxu0 0.0
  %866 = vmatpush1.msra.mxu0 0.0
  %867 = vmatprep.subr.mxu0 0.0
  %868 = vmatpush1.msra.mxu0 0.0
  %869 = vmatprep.subr.mxu0 0.0
  %870 = vmatpush1.msra.mxu0 0.0
  %871 = vmatprep.subr.mxu0 0.0
  %872 = vmatpush1.msra.mxu0 0.0
  %873 = vmatprep.subr.mxu0 0.0
  %874 = vmatpush1.msra.mxu0 0.0
  %875 = vmatprep.subr.mxu0 0.0
  %876 = vmatpush1.msra.mxu0 0.0
  %877 = vmatprep.subr.mxu0 0.0
  %878 = vmatpush1.msra.mxu0 0.0
  %879 = vmatprep.subr.mxu0 0.0
  %880 = vmatpush1.msra.mxu0 0.0
  %881 = vmatprep.subr.mxu0 0.0
  %882 = vmatpush1.msra.mxu0 0.0
  %883 = vmatprep.subr.mxu0 0.0
  %884 = vmatpush1.msra.mxu0 0.0
  %885 = vmatprep.subr.mxu0 0.0
  %886 = vmatpush1.msra.mxu0 0.0
  %887 = vmatprep.subr.mxu0 0.0
  %888 = vmatpush1.msra.mxu0 0.0
  %889 = vmatprep.subr.mxu0 0.0
  %890 = vmatpush1.msra.mxu0 0.0
  %891 = vmatprep.subr.mxu0 0.0
  %892 = vmatpush1.msra.mxu0 0.0
  %893 = vmatprep.mubr.f32.mxu0 0.0
  %894 = vmatmul.mubr.f32.gmra.mrb[0].mxu0 %v166
  %v895 = vpop.f32.mrb[0].mxu0
  %v896 = vadd.f32 %v827, %v895
  %v897 = vpop.f32.mrb[0].mxu0
  %898 = vdwg.mxu0
  %v900 = vsel %vm401, %v732, 0
  %v903 = vsel %vm401, %v813, 0
  %905 = vmatprep.subr.mxu0 0.0
  %906 = vmatpush1.xpose.msra.mxu0 %v903
  %907 = vmatprep.subr.mxu0 0.0
  %908 = vmatpush1.xpose.msra.mxu0 0.0
  %909 = vmatprep.subr.mxu0 0.0
  %910 = vmatpush1.xpose.msra.mxu0 0.0
  %911 = vmatprep.subr.mxu0 0.0
  %912 = vmatpush1.xpose.msra.mxu0 0.0
  %913 = vmatprep.subr.mxu0 0.0
  %914 = vmatpush1.xpose.msra.mxu0 0.0
  %915 = vmatprep.subr.mxu0 0.0
  %916 = vmatpush1.xpose.msra.mxu0 0.0
  %917 = vmatprep.subr.mxu0 0.0
  %918 = vmatpush1.xpose.msra.mxu0 0.0
  %919 = vmatprep.subr.mxu0 0.0
  %920 = vmatpush1.xpose.msra.mxu0 0.0
  %921 = vmatprep.subr.mxu0 0.0
  %922 = vmatpush1.xpose.msra.mxu0 0.0
  %923 = vmatprep.subr.mxu0 0.0
  %924 = vmatpush1.xpose.msra.mxu0 0.0
  %925 = vmatprep.subr.mxu0 0.0
  %926 = vmatpush1.xpose.msra.mxu0 0.0
  %927 = vmatprep.subr.mxu0 0.0
  %928 = vmatpush1.xpose.msra.mxu0 0.0
  %929 = vmatprep.subr.mxu0 0.0
  %930 = vmatpush1.xpose.msra.mxu0 0.0
  %931 = vmatprep.subr.mxu0 0.0
  %932 = vmatpush1.xpose.msra.mxu0 0.0
  %933 = vmatprep.subr.mxu0 0.0
  %934 = vmatpush1.xpose.msra.mxu0 0.0
  %935 = vmatprep.subr.mxu0 0.0
  %936 = vmatpush1.xpose.msra.mxu0 0.0
  %937 = vmatprep.subr.mxu0 0.0
  %938 = vmatpush1.xpose.msra.mxu0 0.0
  %939 = vmatprep.subr.mxu0 0.0
  %940 = vmatpush1.xpose.msra.mxu0 0.0
  %941 = vmatprep.subr.mxu0 0.0
  %942 = vmatpush1.xpose.msra.mxu0 0.0
  %943 = vmatprep.subr.mxu0 0.0
  %944 = vmatpush1.xpose.msra.mxu0 0.0
  %945 = vmatprep.subr.mxu0 0.0
  %946 = vmatpush1.xpose.msra.mxu0 0.0
  %947 = vmatprep.subr.mxu0 0.0
  %948 = vmatpush1.xpose.msra.mxu0 0.0
  %949 = vmatprep.subr.mxu0 0.0
  %950 = vmatpush1.xpose.msra.mxu0 0.0
  %951 = vmatprep.subr.mxu0 0.0
  %952 = vmatpush1.xpose.msra.mxu0 0.0
  %953 = vmatprep.subr.mxu0 0.0
  %954 = vmatpush1.xpose.msra.mxu0 0.0
  %955 = vmatprep.subr.mxu0 0.0
  %956 = vmatpush1.xpose.msra.mxu0 0.0
  %957 = vmatprep.subr.mxu0 0.0
  %958 = vmatpush1.xpose.msra.mxu0 0.0
  %959 = vmatprep.subr.mxu0 0.0
  %960 = vmatpush1.xpose.msra.mxu0 0.0
  %961 = vmatprep.subr.mxu0 0.0
  %962 = vmatpush1.xpose.msra.mxu0 0.0
  %963 = vmatprep.subr.mxu0 0.0
  %964 = vmatpush1.xpose.msra.mxu0 0.0
  %965 = vmatprep.subr.mxu0 0.0
  %966 = vmatpush1.xpose.msra.mxu0 0.0
  %967 = vmatprep.subr.mxu0 0.0
  %968 = vmatpush1.xpose.msra.mxu0 0.0
  %969 = vmatprep.mubr.f32.mxu0 0.0
  %970 = vmatmul.mubr.f32.gmra.mrb[0].mxu0 %v900
  %v971 = vpop.f32.mrb[0].mxu0
  %v972 = vadd.f32 0.0, %v971
  %v973 = vpop.f32.mrb[0].mxu0
  %974 = vdwg.mxu0
  %v975 = vsel %vm478, %v972, -inf
  %976 = vmax.xlane.f32.xlu0 %v975
  %v977 = vpop.xlane.xlu0 %976
  %v978 = vsub.f32 %v972, %v977
  %v979 = vmul.f32 %v978, 1.442695
  %v980 = vpow.pop %v979
  %v981 = vsel %vm478, %v980, 0.0
  %982 = vadd.xlane.f32.xlu0 %v981
  %v983 = vpop.xlane.xlu0 %982
  %v984 = vrcp.pop %v983
  %v985 = vmul.f32 %v980, %v984
  %v987 = vsel %vm490, %v985, 0
  %v990 = vsel %vm494, %v896, 0
  %992 = vmatprep.subr.mxu0 0.0
  %993 = vmatpush1.msra.mxu0 %v990
  %994 = vmatprep.subr.mxu0 0.0
  %995 = vmatpush1.msra.mxu0 0.0
  %996 = vmatprep.subr.mxu0 0.0
  %997 = vmatpush1.msra.mxu0 0.0
  %998 = vmatprep.subr.mxu0 0.0
  %999 = vmatpush1.msra.mxu0 0.0
  %1000 = vmatprep.subr.mxu0 0.0
  %1001 = vmatpush1.msra.mxu0 0.0
  %1002 = vmatprep.subr.mxu0 0.0
  %1003 = vmatpush1.msra.mxu0 0.0
  %1004 = vmatprep.subr.mxu0 0.0
  %1005 = vmatpush1.msra.mxu0 0.0
  %1006 = vmatprep.subr.mxu0 0.0
  %1007 = vmatpush1.msra.mxu0 0.0
  %1008 = vmatprep.subr.mxu0 0.0
  %1009 = vmatpush1.msra.mxu0 0.0
  %1010 = vmatprep.subr.mxu0 0.0
  %1011 = vmatpush1.msra.mxu0 0.0
  %1012 = vmatprep.subr.mxu0 0.0
  %1013 = vmatpush1.msra.mxu0 0.0
  %1014 = vmatprep.subr.mxu0 0.0
  %1015 = vmatpush1.msra.mxu0 0.0
  %1016 = vmatprep.subr.mxu0 0.0
  %1017 = vmatpush1.msra.mxu0 0.0
  %1018 = vmatprep.subr.mxu0 0.0
  %1019 = vmatpush1.msra.mxu0 0.0
  %1020 = vmatprep.subr.mxu0 0.0
  %1021 = vmatpush1.msra.mxu0 0.0
  %1022 = vmatprep.subr.mxu0 0.0
  %1023 = vmatpush1.msra.mxu0 0.0
  %1024 = vmatprep.subr.mxu0 0.0
  %1025 = vmatpush1.msra.mxu0 0.0
  %1026 = vmatprep.subr.mxu0 0.0
  %1027 = vmatpush1.msra.mxu0 0.0
  %1028 = vmatprep.subr.mxu0 0.0
  %1029 = vmatpush1.msra.mxu0 0.0
  %1030 = vmatprep.subr.mxu0 0.0
  %1031 = vmatpush1.msra.mxu0 0.0
  %1032 = vmatprep.subr.mxu0 0.0
  %1033 = vmatpush1.msra.mxu0 0.0
  %1034 = vmatprep.subr.mxu0 0.0
  %1035 = vmatpush1.msra.mxu0 0.0
  %1036 = vmatprep.subr.mxu0 0.0
  %1037 = vmatpush1.msra.mxu0 0.0
  %1038 = vmatprep.subr.mxu0 0.0
  %1039 = vmatpush1.msra.mxu0 0.0
  %1040 = vmatprep.subr.mxu0 0.0
  %1041 = vmatpush1.msra.mxu0 0.0
  %1042 = vmatprep.subr.mxu0 0.0
  %1043 = vmatpush1.msra.mxu0 0.0
  %1044 = vmatprep.subr.mxu0 0.0
  %1045 = vmatpush1.msra.mxu0 0.0
  %1046 = vmatprep.subr.mxu0 0.0
  %1047 = vmatpush1.msra.mxu0 0.0
  %1048 = vmatprep.subr.mxu0 0.0
  %1049 = vmatpush1.msra.mxu0 0.0
  %1050 = vmatprep.subr.mxu0 0.0
  %1051 = vmatpush1.msra.mxu0 0.0
  %1052 = vmatprep.subr.mxu0 0.0
  %1053 = vmatpush1.msra.mxu0 0.0
  %1054 = vmatprep.subr.mxu0 0.0
  %1055 = vmatpush1.msra.mxu0 0.0
  %1056 = vmatprep.mubr.f32.mxu0 0.0
  %1057 = vmatmul.mubr.f32.gmra.mrb[0].mxu0 %v987
  %v1058 = vpop.f32.mrb[0].mxu0
  %v1059 = vadd.f32 0.0, %v1058
  %v1060 = vpop.f32.mrb[0].mxu0
  %1061 = vdwg.mxu0
  %s1062 = scalar_lea.vmem %s9, 8
  %v1063 = vld [vmem:[%s1062] sm:$0xff]
  %v1065 = vsel %vm401, %v1059, 0
  %1067 = vmatprep.subr.mxu0 0.0
  %1068 = vmatpush1.msra.mxu0 %v1063
  %1069 = vmatprep.subr.mxu0 0.0
  %1070 = vmatpush1.msra.mxu0 0.0
  %1071 = vmatprep.subr.mxu0 0.0
  %1072 = vmatpush1.msra.mxu0 0.0
  %1073 = vmatprep.subr.mxu0 0.0
  %1074 = vmatpush1.msra.mxu0 0.0
  %1075 = vmatprep.subr.mxu0 0.0
  %1076 = vmatpush1.msra.mxu0 0.0
  %1077 = vmatprep.subr.mxu0 0.0
  %1078 = vmatpush1.msra.mxu0 0.0
  %1079 = vmatprep.subr.mxu0 0.0
  %1080 = vmatpush1.msra.mxu0 0.0
  %1081 = vmatprep.subr.mxu0 0.0
  %1082 = vmatpush1.msra.mxu0 0.0
  %1083 = vmatprep.subr.mxu0 0.0
  %1084 = vmatpush1.msra.mxu0 0.0
  %1085 = vmatprep.subr.mxu0 0.0
  %1086 = vmatpush1.msra.mxu0 0.0
  %1087 = vmatprep.subr.mxu0 0.0
  %1088 = vmatpush1.msra.mxu0 0.0
  %1089 = vmatprep.subr.mxu0 0.0
  %1090 = vmatpush1.msra.mxu0 0.0
  %1091 = vmatprep.subr.mxu0 0.0
  %1092 = vmatpush1.msra.mxu0 0.0
  %1093 = vmatprep.subr.mxu0 0.0
  %1094 = vmatpush1.msra.mxu0 0.0
  %1095 = vmatprep.subr.mxu0 0.0
  %1096 = vmatpush1.msra.mxu0 0.0
  %1097 = vmatprep.subr.mxu0 0.0
  %1098 = vmatpush1.msra.mxu0 0.0
  %1099 = vmatprep.subr.mxu0 0.0
  %1100 = vmatpush1.msra.mxu0 0.0
  %1101 = vmatprep.subr.mxu0 0.0
  %1102 = vmatpush1.msra.mxu0 0.0
  %1103 = vmatprep.subr.mxu0 0.0
  %1104 = vmatpush1.msra.mxu0 0.0
  %1105 = vmatprep.subr.mxu0 0.0
  %1106 = vmatpush1.msra.mxu0 0.0
  %1107 = vmatprep.subr.mxu0 0.0
  %1108 = vmatpush1.msra.mxu0 0.0
  %1109 = vmatprep.subr.mxu0 0.0
  %1110 = vmatpush1.msra.mxu0 0.0
  %1111 = vmatprep.subr.mxu0 0.0
  %1112 = vmatpush1.msra.mxu0 0.0
  %1113 = vmatprep.subr.mxu0 0.0
  %1114 = vmatpush1.msra.mxu0 0.0
  %1115 = vmatprep.subr.mxu0 0.0
  %1116 = vmatpush1.msra.mxu0 0.0
  %1117 = vmatprep.subr.mxu0 0.0
  %1118 = vmatpush1.msra.mxu0 0.0
  %1119 = vmatprep.subr.mxu0 0.0
  %1120 = vmatpush1.msra.mxu0 0.0
  %1121 = vmatprep.subr.mxu0 0.0
  %1122 = vmatpush1.msra.mxu0 0.0
  %1123 = vmatprep.subr.mxu0 0.0
  %1124 = vmatpush1.msra.mxu0 0.0
  %1125 = vmatprep.subr.mxu0 0.0
  %1126 = vmatpush1.msra.mxu0 0.0
  %1127 = vmatprep.subr.mxu0 0.0
  %1128 = vmatpush1.msra.mxu0 0.0
  %1129 = vmatprep.subr.mxu0 0.0
  %1130 = vmatpush1.msra.mxu0 0.0
  %1131 = vmatprep.mubr.f32.mxu0 0.0
  %1132 = vmatmul.mubr.f32.gmra.mrb[0].mxu0 %v1065
  %v1133 = vpop.f32.mrb[0].mxu0
  %v1134 = vadd.f32 0.0, %v1133
  %v1135 = vpop.f32.mrb[0].mxu0
  %1136 = vdwg.mxu0
  %v1137 = vadd.f32 %v648, %v1134
  %s1138 = scalar_lea.vmem %s3, 64
  %v1139 = vld [vmem:[%s1138] sm:$0xff]
  %v1140 = vld [vmem:[%s1138 + $0x8] sm:$0xff]
  %v1141 = vld [vmem:[%s1138 + $0x10] sm:$0xff]
  %v1142 = vld [vmem:[%s1138 + $0x18] sm:$0xff]
  %s1143 = scalar_lea.vmem %s4, 2
  %v1144 = vld [vmem:[%s1143] sm:$0x1]
  %v1146 = vlaneseq
  %v1147 = vshrl.u32 %v1146, 7
  %v1148 = vsub.s32 0, %v1147
  %v1149 = vrot.slane %v1144, %v1148
  %1151 = vmatprep.subr.mxu0 0.0
  %1152 = vmatpush1.msra.mxu0 %v1139
  %1153 = vmatprep.subr.mxu0 0.0
  %1154 = vmatpush1.msra.mxu0 %v1140
  %1155 = vmatprep.subr.mxu0 0.0
  %1156 = vmatpush1.msra.mxu0 %v1141
  %1157 = vmatprep.subr.mxu0 0.0
  %1158 = vmatpush1.msra.mxu0 %v1142
  %1159 = vmatprep.subr.mxu0 0.0
  %1160 = vmatpush1.msra.mxu0 0.0
  %1161 = vmatprep.subr.mxu0 0.0
  %1162 = vmatpush1.msra.mxu0 0.0
  %1163 = vmatprep.subr.mxu0 0.0
  %1164 = vmatpush1.msra.mxu0 0.0
  %1165 = vmatprep.subr.mxu0 0.0
  %1166 = vmatpush1.msra.mxu0 0.0
  %1167 = vmatprep.subr.mxu0 0.0
  %1168 = vmatpush1.msra.mxu0 0.0
  %1169 = vmatprep.subr.mxu0 0.0
  %1170 = vmatpush1.msra.mxu0 0.0
  %1171 = vmatprep.subr.mxu0 0.0
  %1172 = vmatpush1.msra.mxu0 0.0
  %1173 = vmatprep.subr.mxu0 0.0
  %1174 = vmatpush1.msra.mxu0 0.0
  %1175 = vmatprep.subr.mxu0 0.0
  %1176 = vmatpush1.msra.mxu0 0.0
  %1177 = vmatprep.subr.mxu0 0.0
  %1178 = vmatpush1.msra.mxu0 0.0
  %1179 = vmatprep.subr.mxu0 0.0
  %1180 = vmatpush1.msra.mxu0 0.0
  %1181 = vmatprep.subr.mxu0 0.0
  %1182 = vmatpush1.msra.mxu0 0.0
  %1183 = vmatprep.subr.mxu0 0.0
  %1184 = vmatpush1.msra.mxu0 0.0
  %1185 = vmatprep.subr.mxu0 0.0
  %1186 = vmatpush1.msra.mxu0 0.0
  %1187 = vmatprep.subr.mxu0 0.0
  %1188 = vmatpush1.msra.mxu0 0.0
  %1189 = vmatprep.subr.mxu0 0.0
  %1190 = vmatpush1.msra.mxu0 0.0
  %1191 = vmatprep.subr.mxu0 0.0
  %1192 = vmatpush1.msra.mxu0 0.0
  %1193 = vmatprep.subr.mxu0 0.0
  %1194 = vmatpush1.msra.mxu0 0.0
  %1195 = vmatprep.subr.mxu0 0.0
  %1196 = vmatpush1.msra.mxu0 0.0
  %1197 = vmatprep.subr.mxu0 0.0
  %1198 = vmatpush1.msra.mxu0 0.0
  %1199 = vmatprep.subr.mxu0 0.0
  %1200 = vmatpush1.msra.mxu0 0.0
  %1201 = vmatprep.subr.mxu0 0.0
  %1202 = vmatpush1.msra.mxu0 0.0
  %1203 = vmatprep.subr.mxu0 0.0
  %1204 = vmatpush1.msra.mxu0 0.0
  %1205 = vmatprep.subr.mxu0 0.0
  %1206 = vmatpush1.msra.mxu0 0.0
  %1207 = vmatprep.subr.mxu0 0.0
  %1208 = vmatpush1.msra.mxu0 0.0
  %1209 = vmatprep.subr.mxu0 0.0
  %1210 = vmatpush1.msra.mxu0 0.0
  %1211 = vmatprep.subr.mxu0 0.0
  %1212 = vmatpush1.msra.mxu0 0.0
  %1213 = vmatprep.subr.mxu0 0.0
  %1214 = vmatpush1.msra.mxu0 0.0
  %1215 = vmatprep.mubr.f32.mxu0 0.0
  %1216 = vmatmul.mubr.f32.gmra.mrb[0].mxu0 %v166
  %v1217 = vpop.f32.mrb[0].mxu0
  %v1218 = vadd.f32 %v1149, %v1217
  %v1219 = vpop.f32.mrb[0].mxu0
  %1220 = vdwg.mxu0
  %v1221 = vmul.f32 %v1218, 0.35355338
  %s1222 = scalar_lea.vmem %s5, 64
  %v1223 = vld [vmem:[%s1222] sm:$0xff]
  %v1224 = vld [vmem:[%s1222 + $0x8] sm:$0xff]
  %v1225 = vld [vmem:[%s1222 + $0x10] sm:$0xff]
  %v1226 = vld [vmem:[%s1222 + $0x18] sm:$0xff]
  %s1227 = scalar_lea.vmem %s6, 2
  %v1228 = vld [vmem:[%s1227] sm:$0x1]
  %v1230 = vlaneseq
  %v1231 = vshrl.u32 %v1230, 7
  %v1232 = vsub.s32 0, %v1231
  %v1233 = vrot.slane %v1228, %v1232
  %1235 = vmatprep.subr.mxu0 0.0
  %1236 = vmatpush1.msra.mxu0 %v1223
  %1237 = vmatprep.subr.mxu0 0.0
  %1238 = vmatpush1.msra.mxu0 %v1224
  %1239 = vmatprep.subr.mxu0 0.0
  %1240 = vmatpush1.msra.mxu0 %v1225
  %1241 = vmatprep.subr.mxu0 0.0
  %1242 = vmatpush1.msra.mxu0 %v1226
  %1243 = vmatprep.subr.mxu0 0.0
  %1244 = vmatpush1.msra.mxu0 0.0
  %1245 = vmatprep.subr.mxu0 0.0
  %1246 = vmatpush1.msra.mxu0 0.0
  %1247 = vmatprep.subr.mxu0 0.0
  %1248 = vmatpush1.msra.mxu0 0.0
  %1249 = vmatprep.subr.mxu0 0.0
  %1250 = vmatpush1.msra.mxu0 0.0
  %1251 = vmatprep.subr.mxu0 0.0
  %1252 = vmatpush1.msra.mxu0 0.0
  %1253 = vmatprep.subr.mxu0 0.0
  %1254 = vmatpush1.msra.mxu0 0.0
  %1255 = vmatprep.subr.mxu0 0.0
  %1256 = vmatpush1.msra.mxu0 0.0
  %1257 = vmatprep.subr.mxu0 0.0
  %1258 = vmatpush1.msra.mxu0 0.0
  %1259 = vmatprep.subr.mxu0 0.0
  %1260 = vmatpush1.msra.mxu0 0.0
  %1261 = vmatprep.subr.mxu0 0.0
  %1262 = vmatpush1.msra.mxu0 0.0
  %1263 = vmatprep.subr.mxu0 0.0
  %1264 = vmatpush1.msra.mxu0 0.0
  %1265 = vmatprep.subr.mxu0 0.0
  %1266 = vmatpush1.msra.mxu0 0.0
  %1267 = vmatprep.subr.mxu0 0.0
  %1268 = vmatpush1.msra.mxu0 0.0
  %1269 = vmatprep.subr.mxu0 0.0
  %1270 = vmatpush1.msra.mxu0 0.0
  %1271 = vmatprep.subr.mxu0 0.0
  %1272 = vmatpush1.msra.mxu0 0.0
  %1273 = vmatprep.subr.mxu0 0.0
  %1274 = vmatpush1.msra.mxu0 0.0
  %1275 = vmatprep.subr.mxu0 0.0
  %1276 = vmatpush1.msra.mxu0 0.0
  %1277 = vmatprep.subr.mxu0 0.0
  %1278 = vmatpush1.msra.mxu0 0.0
  %1279 = vmatprep.subr.mxu0 0.0
  %1280 = vmatpush1.msra.mxu0 0.0
  %1281 = vmatprep.subr.mxu0 0.0
  %1282 = vmatpush1.msra.mxu0 0.0
  %1283 = vmatprep.subr.mxu0 0.0
  %1284 = vmatpush1.msra.mxu0 0.0
  %1285 = vmatprep.subr.mxu0 0.0
  %1286 = vmatpush1.msra.mxu0 0.0
  %1287 = vmatprep.subr.mxu0 0.0
  %1288 = vmatpush1.msra.mxu0 0.0
  %1289 = vmatprep.subr.mxu0 0.0
  %1290 = vmatpush1.msra.mxu0 0.0
  %1291 = vmatprep.subr.mxu0 0.0
  %1292 = vmatpush1.msra.mxu0 0.0
  %1293 = vmatprep.subr.mxu0 0.0
  %1294 = vmatpush1.msra.mxu0 0.0
  %1295 = vmatprep.subr.mxu0 0.0
  %1296 = vmatpush1.msra.mxu0 0.0
  %1297 = vmatprep.subr.mxu0 0.0
  %1298 = vmatpush1.msra.mxu0 0.0
  %1299 = vmatprep.mubr.f32.mxu0 0.0
  %1300 = vmatmul.mubr.f32.gmra.mrb[0].mxu0 %v166
  %v1301 = vpop.f32.mrb[0].mxu0
  %v1302 = vadd.f32 %v1233, %v1301
  %v1303 = vpop.f32.mrb[0].mxu0
  %1304 = vdwg.mxu0
  %s1305 = scalar_lea.vmem %s7, 64
  %v1306 = vld [vmem:[%s1305] sm:$0xff]
  %v1307 = vld [vmem:[%s1305 + $0x8] sm:$0xff]
  %v1308 = vld [vmem:[%s1305 + $0x10] sm:$0xff]
  %v1309 = vld [vmem:[%s1305 + $0x18] sm:$0xff]
  %s1310 = scalar_lea.vmem %s8, 2
  %v1311 = vld [vmem:[%s1310] sm:$0x1]
  %v1313 = vlaneseq
  %v1314 = vshrl.u32 %v1313, 7
  %v1315 = vsub.s32 0, %v1314
  %v1316 = vrot.slane %v1311, %v1315
  %1318 = vmatprep.subr.mxu0 0.0
  %1319 = vmatpush1.msra.mxu0 %v1306
  %1320 = vmatprep.subr.mxu0 0.0
  %1321 = vmatpush1.msra.mxu0 %v1307
  %1322 = vmatprep.subr.mxu0 0.0
  %1323 = vmatpush1.msra.mxu0 %v1308
  %1324 = vmatprep.subr.mxu0 0.0
  %1325 = vmatpush1.msra.mxu0 %v1309
  %1326 = vmatprep.subr.mxu0 0.0
  %1327 = vmatpush1.msra.mxu0 0.0
  %1328 = vmatprep.subr.mxu0 0.0
  %1329 = vmatpush1.msra.mxu0 0.0
  %1330 = vmatprep.subr.mxu0 0.0
  %1331 = vmatpush1.msra.mxu0 0.0
  %1332 = vmatprep.subr.mxu0 0.0
  %1333 = vmatpush1.msra.mxu0 0.0
  %1334 = vmatprep.subr.mxu0 0.0
  %1335 = vmatpush1.msra.mxu0 0.0
  %1336 = vmatprep.subr.mxu0 0.0
  %1337 = vmatpush1.msra.mxu0 0.0
  %1338 = vmatprep.subr.mxu0 0.0
  %1339 = vmatpush1.msra.mxu0 0.0
  %1340 = vmatprep.subr.mxu0 0.0
  %1341 = vmatpush1.msra.mxu0 0.0
  %1342 = vmatprep.subr.mxu0 0.0
  %1343 = vmatpush1.msra.mxu0 0.0
  %1344 = vmatprep.subr.mxu0 0.0
  %1345 = vmatpush1.msra.mxu0 0.0
  %1346 = vmatprep.subr.mxu0 0.0
  %1347 = vmatpush1.msra.mxu0 0.0
  %1348 = vmatprep.subr.mxu0 0.0
  %1349 = vmatpush1.msra.mxu0 0.0
  %1350 = vmatprep.subr.mxu0 0.0
  %1351 = vmatpush1.msra.mxu0 0.0
  %1352 = vmatprep.subr.mxu0 0.0
  %1353 = vmatpush1.msra.mxu0 0.0
  %1354 = vmatprep.subr.mxu0 0.0
  %1355 = vmatpush1.msra.mxu0 0.0
  %1356 = vmatprep.subr.mxu0 0.0
  %1357 = vmatpush1.msra.mxu0 0.0
  %1358 = vmatprep.subr.mxu0 0.0
  %1359 = vmatpush1.msra.mxu0 0.0
  %1360 = vmatprep.subr.mxu0 0.0
  %1361 = vmatpush1.msra.mxu0 0.0
  %1362 = vmatprep.subr.mxu0 0.0
  %1363 = vmatpush1.msra.mxu0 0.0
  %1364 = vmatprep.subr.mxu0 0.0
  %1365 = vmatpush1.msra.mxu0 0.0
  %1366 = vmatprep.subr.mxu0 0.0
  %1367 = vmatpush1.msra.mxu0 0.0
  %1368 = vmatprep.subr.mxu0 0.0
  %1369 = vmatpush1.msra.mxu0 0.0
  %1370 = vmatprep.subr.mxu0 0.0
  %1371 = vmatpush1.msra.mxu0 0.0
  %1372 = vmatprep.subr.mxu0 0.0
  %1373 = vmatpush1.msra.mxu0 0.0
  %1374 = vmatprep.subr.mxu0 0.0
  %1375 = vmatpush1.msra.mxu0 0.0
  %1376 = vmatprep.subr.mxu0 0.0
  %1377 = vmatpush1.msra.mxu0 0.0
  %1378 = vmatprep.subr.mxu0 0.0
  %1379 = vmatpush1.msra.mxu0 0.0
  %1380 = vmatprep.subr.mxu0 0.0
  %1381 = vmatpush1.msra.mxu0 0.0
  %1382 = vmatprep.mubr.f32.mxu0 0.0
  %1383 = vmatmul.mubr.f32.gmra.mrb[0].mxu0 %v166
  %v1384 = vpop.f32.mrb[0].mxu0
  %v1385 = vadd.f32 %v1316, %v1384
  %v1386 = vpop.f32.mrb[0].mxu0
  %1387 = vdwg.mxu0
  %v1389 = vsel %vm401, %v1221, 0
  %v1392 = vsel %vm401, %v1302, 0
  %1394 = vmatprep.subr.mxu0 0.0
  %1395 = vmatpush1.xpose.msra.mxu0 %v1392
  %1396 = vmatprep.subr.mxu0 0.0
  %1397 = vmatpush1.xpose.msra.mxu0 0.0
  %1398 = vmatprep.subr.mxu0 0.0
  %1399 = vmatpush1.xpose.msra.mxu0 0.0
  %1400 = vmatprep.subr.mxu0 0.0
  %1401 = vmatpush1.xpose.msra.mxu0 0.0
  %1402 = vmatprep.subr.mxu0 0.0
  %1403 = vmatpush1.xpose.msra.mxu0 0.0
  %1404 = vmatprep.subr.mxu0 0.0
  %1405 = vmatpush1.xpose.msra.mxu0 0.0
  %1406 = vmatprep.subr.mxu0 0.0
  %1407 = vmatpush1.xpose.msra.mxu0 0.0
  %1408 = vmatprep.subr.mxu0 0.0
  %1409 = vmatpush1.xpose.msra.mxu0 0.0
  %1410 = vmatprep.subr.mxu0 0.0
  %1411 = vmatpush1.xpose.msra.mxu0 0.0
  %1412 = vmatprep.subr.mxu0 0.0
  %1413 = vmatpush1.xpose.msra.mxu0 0.0
  %1414 = vmatprep.subr.mxu0 0.0
  %1415 = vmatpush1.xpose.msra.mxu0 0.0
  %1416 = vmatprep.subr.mxu0 0.0
  %1417 = vmatpush1.xpose.msra.mxu0 0.0
  %1418 = vmatprep.subr.mxu0 0.0
  %1419 = vmatpush1.xpose.msra.mxu0 0.0
  %1420 = vmatprep.subr.mxu0 0.0
  %1421 = vmatpush1.xpose.msra.mxu0 0.0
  %1422 = vmatprep.subr.mxu0 0.0
  %1423 = vmatpush1.xpose.msra.mxu0 0.0
  %1424 = vmatprep.subr.mxu0 0.0
  %1425 = vmatpush1.xpose.msra.mxu0 0.0
  %1426 = vmatprep.subr.mxu0 0.0
  %1427 = vmatpush1.xpose.msra.mxu0 0.0
  %1428 = vmatprep.subr.mxu0 0.0
  %1429 = vmatpush1.xpose.msra.mxu0 0.0
  %1430 = vmatprep.subr.mxu0 0.0
  %1431 = vmatpush1.xpose.msra.mxu0 0.0
  %1432 = vmatprep.subr.mxu0 0.0
  %1433 = vmatpush1.xpose.msra.mxu0 0.0
  %1434 = vmatprep.subr.mxu0 0.0
  %1435 = vmatpush1.xpose.msra.mxu0 0.0
  %1436 = vmatprep.subr.mxu0 0.0
  %1437 = vmatpush1.xpose.msra.mxu0 0.0
  %1438 = vmatprep.subr.mxu0 0.0
  %1439 = vmatpush1.xpose.msra.mxu0 0.0
  %1440 = vmatprep.subr.mxu0 0.0
  %1441 = vmatpush1.xpose.msra.mxu0 0.0
  %1442 = vmatprep.subr.mxu0 0.0
  %1443 = vmatpush1.xpose.msra.mxu0 0.0
  %1444 = vmatprep.subr.mxu0 0.0
  %1445 = vmatpush1.xpose.msra.mxu0 0.0
  %1446 = vmatprep.subr.mxu0 0.0
  %1447 = vmatpush1.xpose.msra.mxu0 0.0
  %1448 = vmatprep.subr.mxu0 0.0
  %1449 = vmatpush1.xpose.msra.mxu0 0.0
  %1450 = vmatprep.subr.mxu0 0.0
  %1451 = vmatpush1.xpose.msra.mxu0 0.0
  %1452 = vmatprep.subr.mxu0 0.0
  %1453 = vmatpush1.xpose.msra.mxu0 0.0
  %1454 = vmatprep.subr.mxu0 0.0
  %1455 = vmatpush1.xpose.msra.mxu0 0.0
  %1456 = vmatprep.subr.mxu0 0.0
  %1457 = vmatpush1.xpose.msra.mxu0 0.0
  %1458 = vmatprep.mubr.f32.mxu0 0.0
  %1459 = vmatmul.mubr.f32.gmra.mrb[0].mxu0 %v1389
  %v1460 = vpop.f32.mrb[0].mxu0
  %v1461 = vadd.f32 0.0, %v1460
  %v1462 = vpop.f32.mrb[0].mxu0
  %1463 = vdwg.mxu0
  %v1464 = vsel %vm478, %v1461, -inf
  %1465 = vmax.xlane.f32.xlu0 %v1464
  %v1466 = vpop.xlane.xlu0 %1465
  %v1467 = vsub.f32 %v1461, %v1466
  %v1468 = vmul.f32 %v1467, 1.442695
  %v1469 = vpow.pop %v1468
  %v1470 = vsel %vm478, %v1469, 0.0
  %1471 = vadd.xlane.f32.xlu0 %v1470
  %v1472 = vpop.xlane.xlu0 %1471
  %v1473 = vrcp.pop %v1472
  %v1474 = vmul.f32 %v1469, %v1473
  %v1476 = vsel %vm490, %v1474, 0
  %v1479 = vsel %vm494, %v1385, 0
  %1481 = vmatprep.subr.mxu0 0.0
  %1482 = vmatpush1.msra.mxu0 %v1479
  %1483 = vmatprep.subr.mxu0 0.0
  %1484 = vmatpush1.msra.mxu0 0.0
  %1485 = vmatprep.subr.mxu0 0.0
  %1486 = vmatpush1.msra.mxu0 0.0
  %1487 = vmatprep.subr.mxu0 0.0
  %1488 = vmatpush1.msra.mxu0 0.0
  %1489 = vmatprep.subr.mxu0 0.0
  %1490 = vmatpush1.msra.mxu0 0.0
  %1491 = vmatprep.subr.mxu0 0.0
  %1492 = vmatpush1.msra.mxu0 0.0
  %1493 = vmatprep.subr.mxu0 0.0
  %1494 = vmatpush1.msra.mxu0 0.0
  %1495 = vmatprep.subr.mxu0 0.0
  %1496 = vmatpush1.msra.mxu0 0.0
  %1497 = vmatprep.subr.mxu0 0.0
  %1498 = vmatpush1.msra.mxu0 0.0
  %1499 = vmatprep.subr.mxu0 0.0
  %1500 = vmatpush1.msra.mxu0 0.0
  %1501 = vmatprep.subr.mxu0 0.0
  %1502 = vmatpush1.msra.mxu0 0.0
  %1503 = vmatprep.subr.mxu0 0.0
  %1504 = vmatpush1.msra.mxu0 0.0
  %1505 = vmatprep.subr.mxu0 0.0
  %1506 = vmatpush1.msra.mxu0 0.0
  %1507 = vmatprep.subr.mxu0 0.0
  %1508 = vmatpush1.msra.mxu0 0.0
  %1509 = vmatprep.subr.mxu0 0.0
  %1510 = vmatpush1.msra.mxu0 0.0
  %1511 = vmatprep.subr.mxu0 0.0
  %1512 = vmatpush1.msra.mxu0 0.0
  %1513 = vmatprep.subr.mxu0 0.0
  %1514 = vmatpush1.msra.mxu0 0.0
  %1515 = vmatprep.subr.mxu0 0.0
  %1516 = vmatpush1.msra.mxu0 0.0
  %1517 = vmatprep.subr.mxu0 0.0
  %1518 = vmatpush1.msra.mxu0 0.0
  %1519 = vmatprep.subr.mxu0 0.0
  %1520 = vmatpush1.msra.mxu0 0.0
  %1521 = vmatprep.subr.mxu0 0.0
  %1522 = vmatpush1.msra.mxu0 0.0
  %1523 = vmatprep.subr.mxu0 0.0
  %1524 = vmatpush1.msra.mxu0 0.0
  %1525 = vmatprep.subr.mxu0 0.0
  %1526 = vmatpush1.msra.mxu0 0.0
  %1527 = vmatprep.subr.mxu0 0.0
  %1528 = vmatpush1.msra.mxu0 0.0
  %1529 = vmatprep.subr.mxu0 0.0
  %1530 = vmatpush1.msra.mxu0 0.0
  %1531 = vmatprep.subr.mxu0 0.0
  %1532 = vmatpush1.msra.mxu0 0.0
  %1533 = vmatprep.subr.mxu0 0.0
  %1534 = vmatpush1.msra.mxu0 0.0
  %1535 = vmatprep.subr.mxu0 0.0
  %1536 = vmatpush1.msra.mxu0 0.0
  %1537 = vmatprep.subr.mxu0 0.0
  %1538 = vmatpush1.msra.mxu0 0.0
  %1539 = vmatprep.subr.mxu0 0.0
  %1540 = vmatpush1.msra.mxu0 0.0
  %1541 = vmatprep.subr.mxu0 0.0
  %1542 = vmatpush1.msra.mxu0 0.0
  %1543 = vmatprep.subr.mxu0 0.0
  %1544 = vmatpush1.msra.mxu0 0.0
  %1545 = vmatprep.mubr.f32.mxu0 0.0
  %1546 = vmatmul.mubr.f32.gmra.mrb[0].mxu0 %v1476
  %v1547 = vpop.f32.mrb[0].mxu0
  %v1548 = vadd.f32 0.0, %v1547
  %v1549 = vpop.f32.mrb[0].mxu0
  %1550 = vdwg.mxu0
  %s1551 = scalar_lea.vmem %s9, 16
  %v1552 = vld [vmem:[%s1551] sm:$0xff]
  %v1554 = vsel %vm401, %v1548, 0
  %1556 = vmatprep.subr.mxu0 0.0
  %1557 = vmatpush1.msra.mxu0 %v1552
  %1558 = vmatprep.subr.mxu0 0.0
  %1559 = vmatpush1.msra.mxu0 0.0
  %1560 = vmatprep.subr.mxu0 0.0
  %1561 = vmatpush1.msra.mxu0 0.0
  %1562 = vmatprep.subr.mxu0 0.0
  %1563 = vmatpush1.msra.mxu0 0.0
  %1564 = vmatprep.subr.mxu0 0.0
  %1565 = vmatpush1.msra.mxu0 0.0
  %1566 = vmatprep.subr.mxu0 0.0
  %1567 = vmatpush1.msra.mxu0 0.0
  %1568 = vmatprep.subr.mxu0 0.0
  %1569 = vmatpush1.msra.mxu0 0.0
  %1570 = vmatprep.subr.mxu0 0.0
  %1571 = vmatpush1.msra.mxu0 0.0
  %1572 = vmatprep.subr.mxu0 0.0
  %1573 = vmatpush1.msra.mxu0 0.0
  %1574 = vmatprep.subr.mxu0 0.0
  %1575 = vmatpush1.msra.mxu0 0.0
  %1576 = vmatprep.subr.mxu0 0.0
  %1577 = vmatpush1.msra.mxu0 0.0
  %1578 = vmatprep.subr.mxu0 0.0
  %1579 = vmatpush1.msra.mxu0 0.0
  %1580 = vmatprep.subr.mxu0 0.0
  %1581 = vmatpush1.msra.mxu0 0.0
  %1582 = vmatprep.subr.mxu0 0.0
  %1583 = vmatpush1.msra.mxu0 0.0
  %1584 = vmatprep.subr.mxu0 0.0
  %1585 = vmatpush1.msra.mxu0 0.0
  %1586 = vmatprep.subr.mxu0 0.0
  %1587 = vmatpush1.msra.mxu0 0.0
  %1588 = vmatprep.subr.mxu0 0.0
  %1589 = vmatpush1.msra.mxu0 0.0
  %1590 = vmatprep.subr.mxu0 0.0
  %1591 = vmatpush1.msra.mxu0 0.0
  %1592 = vmatprep.subr.mxu0 0.0
  %1593 = vmatpush1.msra.mxu0 0.0
  %1594 = vmatprep.subr.mxu0 0.0
  %1595 = vmatpush1.msra.mxu0 0.0
  %1596 = vmatprep.subr.mxu0 0.0
  %1597 = vmatpush1.msra.mxu0 0.0
  %1598 = vmatprep.subr.mxu0 0.0
  %1599 = vmatpush1.msra.mxu0 0.0
  %1600 = vmatprep.subr.mxu0 0.0
  %1601 = vmatpush1.msra.mxu0 0.0
  %1602 = vmatprep.subr.mxu0 0.0
  %1603 = vmatpush1.msra.mxu0 0.0
  %1604 = vmatprep.subr.mxu0 0.0
  %1605 = vmatpush1.msra.mxu0 0.0
  %1606 = vmatprep.subr.mxu0 0.0
  %1607 = vmatpush1.msra.mxu0 0.0
  %1608 = vmatprep.subr.mxu0 0.0
  %1609 = vmatpush1.msra.mxu0 0.0
  %1610 = vmatprep.subr.mxu0 0.0
  %1611 = vmatpush1.msra.mxu0 0.0
  %1612 = vmatprep.subr.mxu0 0.0
  %1613 = vmatpush1.msra.mxu0 0.0
  %1614 = vmatprep.subr.mxu0 0.0
  %1615 = vmatpush1.msra.mxu0 0.0
  %1616 = vmatprep.subr.mxu0 0.0
  %1617 = vmatpush1.msra.mxu0 0.0
  %1618 = vmatprep.subr.mxu0 0.0
  %1619 = vmatpush1.msra.mxu0 0.0
  %1620 = vmatprep.mubr.f32.mxu0 0.0
  %1621 = vmatmul.mubr.f32.gmra.mrb[0].mxu0 %v1554
  %v1622 = vpop.f32.mrb[0].mxu0
  %v1623 = vadd.f32 0.0, %v1622
  %v1624 = vpop.f32.mrb[0].mxu0
  %1625 = vdwg.mxu0
  %v1626 = vadd.f32 %v1137, %v1623
  %s1627 = scalar_lea.vmem %s3, 96
  %v1628 = vld [vmem:[%s1627] sm:$0xff]
  %v1629 = vld [vmem:[%s1627 + $0x8] sm:$0xff]
  %v1630 = vld [vmem:[%s1627 + $0x10] sm:$0xff]
  %v1631 = vld [vmem:[%s1627 + $0x18] sm:$0xff]
  %s1632 = scalar_lea.vmem %s4, 3
  %v1633 = vld [vmem:[%s1632] sm:$0x1]
  %v1635 = vlaneseq
  %v1636 = vshrl.u32 %v1635, 7
  %v1637 = vsub.s32 0, %v1636
  %v1638 = vrot.slane %v1633, %v1637
  %1640 = vmatprep.subr.mxu0 0.0
  %1641 = vmatpush1.msra.mxu0 %v1628
  %1642 = vmatprep.subr.mxu0 0.0
  %1643 = vmatpush1.msra.mxu0 %v1629
  %1644 = vmatprep.subr.mxu0 0.0
  %1645 = vmatpush1.msra.mxu0 %v1630
  %1646 = vmatprep.subr.mxu0 0.0
  %1647 = vmatpush1.msra.mxu0 %v1631
  %1648 = vmatprep.subr.mxu0 0.0
  %1649 = vmatpush1.msra.mxu0 0.0
  %1650 = vmatprep.subr.mxu0 0.0
  %1651 = vmatpush1.msra.mxu0 0.0
  %1652 = vmatprep.subr.mxu0 0.0
  %1653 = vmatpush1.msra.mxu0 0.0
  %1654 = vmatprep.subr.mxu0 0.0
  %1655 = vmatpush1.msra.mxu0 0.0
  %1656 = vmatprep.subr.mxu0 0.0
  %1657 = vmatpush1.msra.mxu0 0.0
  %1658 = vmatprep.subr.mxu0 0.0
  %1659 = vmatpush1.msra.mxu0 0.0
  %1660 = vmatprep.subr.mxu0 0.0
  %1661 = vmatpush1.msra.mxu0 0.0
  %1662 = vmatprep.subr.mxu0 0.0
  %1663 = vmatpush1.msra.mxu0 0.0
  %1664 = vmatprep.subr.mxu0 0.0
  %1665 = vmatpush1.msra.mxu0 0.0
  %1666 = vmatprep.subr.mxu0 0.0
  %1667 = vmatpush1.msra.mxu0 0.0
  %1668 = vmatprep.subr.mxu0 0.0
  %1669 = vmatpush1.msra.mxu0 0.0
  %1670 = vmatprep.subr.mxu0 0.0
  %1671 = vmatpush1.msra.mxu0 0.0
  %1672 = vmatprep.subr.mxu0 0.0
  %1673 = vmatpush1.msra.mxu0 0.0
  %1674 = vmatprep.subr.mxu0 0.0
  %1675 = vmatpush1.msra.mxu0 0.0
  %1676 = vmatprep.subr.mxu0 0.0
  %1677 = vmatpush1.msra.mxu0 0.0
  %1678 = vmatprep.subr.mxu0 0.0
  %1679 = vmatpush1.msra.mxu0 0.0
  %1680 = vmatprep.subr.mxu0 0.0
  %1681 = vmatpush1.msra.mxu0 0.0
  %1682 = vmatprep.subr.mxu0 0.0
  %1683 = vmatpush1.msra.mxu0 0.0
  %1684 = vmatprep.subr.mxu0 0.0
  %1685 = vmatpush1.msra.mxu0 0.0
  %1686 = vmatprep.subr.mxu0 0.0
  %1687 = vmatpush1.msra.mxu0 0.0
  %1688 = vmatprep.subr.mxu0 0.0
  %1689 = vmatpush1.msra.mxu0 0.0
  %1690 = vmatprep.subr.mxu0 0.0
  %1691 = vmatpush1.msra.mxu0 0.0
  %1692 = vmatprep.subr.mxu0 0.0
  %1693 = vmatpush1.msra.mxu0 0.0
  %1694 = vmatprep.subr.mxu0 0.0
  %1695 = vmatpush1.msra.mxu0 0.0
  %1696 = vmatprep.subr.mxu0 0.0
  %1697 = vmatpush1.msra.mxu0 0.0
  %1698 = vmatprep.subr.mxu0 0.0
  %1699 = vmatpush1.msra.mxu0 0.0
  %1700 = vmatprep.subr.mxu0 0.0
  %1701 = vmatpush1.msra.mxu0 0.0
  %1702 = vmatprep.subr.mxu0 0.0
  %1703 = vmatpush1.msra.mxu0 0.0
  %1704 = vmatprep.mubr.f32.mxu0 0.0
  %1705 = vmatmul.mubr.f32.gmra.mrb[0].mxu0 %v166
  %v1706 = vpop.f32.mrb[0].mxu0
  %v1707 = vadd.f32 %v1638, %v1706
  %v1708 = vpop.f32.mrb[0].mxu0
  %1709 = vdwg.mxu0
  %v1710 = vmul.f32 %v1707, 0.35355338
  %s1711 = scalar_lea.vmem %s5, 96
  %v1712 = vld [vmem:[%s1711] sm:$0xff]
  %v1713 = vld [vmem:[%s1711 + $0x8] sm:$0xff]
  %v1714 = vld [vmem:[%s1711 + $0x10] sm:$0xff]
  %v1715 = vld [vmem:[%s1711 + $0x18] sm:$0xff]
  %s1716 = scalar_lea.vmem %s6, 3
  %v1717 = vld [vmem:[%s1716] sm:$0x1]
  %v1719 = vlaneseq
  %v1720 = vshrl.u32 %v1719, 7
  %v1721 = vsub.s32 0, %v1720
  %v1722 = vrot.slane %v1717, %v1721
  %1724 = vmatprep.subr.mxu0 0.0
  %1725 = vmatpush1.msra.mxu0 %v1712
  %1726 = vmatprep.subr.mxu0 0.0
  %1727 = vmatpush1.msra.mxu0 %v1713
  %1728 = vmatprep.subr.mxu0 0.0
  %1729 = vmatpush1.msra.mxu0 %v1714
  %1730 = vmatprep.subr.mxu0 0.0
  %1731 = vmatpush1.msra.mxu0 %v1715
  %1732 = vmatprep.subr.mxu0 0.0
  %1733 = vmatpush1.msra.mxu0 0.0
  %1734 = vmatprep.subr.mxu0 0.0
  %1735 = vmatpush1.msra.mxu0 0.0
  %1736 = vmatprep.subr.mxu0 0.0
  %1737 = vmatpush1.msra.mxu0 0.0
  %1738 = vmatprep.subr.mxu0 0.0
  %1739 = vmatpush1.msra.mxu0 0.0
  %1740 = vmatprep.subr.mxu0 0.0
  %1741 = vmatpush1.msra.mxu0 0.0
  %1742 = vmatprep.subr.mxu0 0.0
  %1743 = vmatpush1.msra.mxu0 0.0
  %1744 = vmatprep.subr.mxu0 0.0
  %1745 = vmatpush1.msra.mxu0 0.0
  %1746 = vmatprep.subr.mxu0 0.0
  %1747 = vmatpush1.msra.mxu0 0.0
  %1748 = vmatprep.subr.mxu0 0.0
  %1749 = vmatpush1.msra.mxu0 0.0
  %1750 = vmatprep.subr.mxu0 0.0
  %1751 = vmatpush1.msra.mxu0 0.0
  %1752 = vmatprep.subr.mxu0 0.0
  %1753 = vmatpush1.msra.mxu0 0.0
  %1754 = vmatprep.subr.mxu0 0.0
  %1755 = vmatpush1.msra.mxu0 0.0
  %1756 = vmatprep.subr.mxu0 0.0
  %1757 = vmatpush1.msra.mxu0 0.0
  %1758 = vmatprep.subr.mxu0 0.0
  %1759 = vmatpush1.msra.mxu0 0.0
  %1760 = vmatprep.subr.mxu0 0.0
  %1761 = vmatpush1.msra.mxu0 0.0
  %1762 = vmatprep.subr.mxu0 0.0
  %1763 = vmatpush1.msra.mxu0 0.0
  %1764 = vmatprep.subr.mxu0 0.0
  %1765 = vmatpush1.msra.mxu0 0.0
  %1766 = vmatprep.subr.mxu0 0.0
  %1767 = vmatpush1.msra.mxu0 0.0
  %1768 = vmatprep.subr.mxu0 0.0
  %1769 = vmatpush1.msra.mxu0 0.0
  %1770 = vmatprep.subr.mxu0 0.0
  %1771 = vmatpush1.msra.mxu0 0.0
  %1772 = vmatprep.subr.mxu0 0.0
  %1773 = vmatpush1.msra.mxu0 0.0
  %1774 = vmatprep.subr.mxu0 0.0
  %1775 = vmatpush1.msra.mxu0 0.0
  %1776 = vmatprep.subr.mxu0 0.0
  %1777 = vmatpush1.msra.mxu0 0.0
  %1778 = vmatprep.subr.mxu0 0.0
  %1779 = vmatpush1.msra.mxu0 0.0
  %1780 = vmatprep.subr.mxu0 0.0
  %1781 = vmatpush1.msra.mxu0 0.0
  %1782 = vmatprep.subr.mxu0 0.0
  %1783 = vmatpush1.msra.mxu0 0.0
  %1784 = vmatprep.subr.mxu0 0.0
  %1785 = vmatpush1.msra.mxu0 0.0
  %1786 = vmatprep.subr.mxu0 0.0
  %1787 = vmatpush1.msra.mxu0 0.0
  %1788 = vmatprep.mubr.f32.mxu0 0.0
  %1789 = vmatmul.mubr.f32.gmra.mrb[0].mxu0 %v166
  %v1790 = vpop.f32.mrb[0].mxu0
  %v1791 = vadd.f32 %v1722, %v1790
  %v1792 = vpop.f32.mrb[0].mxu0
  %1793 = vdwg.mxu0
  %s1794 = scalar_lea.vmem %s7, 96
  %v1795 = vld [vmem:[%s1794] sm:$0xff]
  %v1796 = vld [vmem:[%s1794 + $0x8] sm:$0xff]
  %v1797 = vld [vmem:[%s1794 + $0x10] sm:$0xff]
  %v1798 = vld [vmem:[%s1794 + $0x18] sm:$0xff]
  %s1799 = scalar_lea.vmem %s8, 3
  %v1800 = vld [vmem:[%s1799] sm:$0x1]
  %v1802 = vlaneseq
  %v1803 = vshrl.u32 %v1802, 7
  %v1804 = vsub.s32 0, %v1803
  %v1805 = vrot.slane %v1800, %v1804
  %1807 = vmatprep.subr.mxu0 0.0
  %1808 = vmatpush1.msra.mxu0 %v1795
  %1809 = vmatprep.subr.mxu0 0.0
  %1810 = vmatpush1.msra.mxu0 %v1796
  %1811 = vmatprep.subr.mxu0 0.0
  %1812 = vmatpush1.msra.mxu0 %v1797
  %1813 = vmatprep.subr.mxu0 0.0
  %1814 = vmatpush1.msra.mxu0 %v1798
  %1815 = vmatprep.subr.mxu0 0.0
  %1816 = vmatpush1.msra.mxu0 0.0
  %1817 = vmatprep.subr.mxu0 0.0
  %1818 = vmatpush1.msra.mxu0 0.0
  %1819 = vmatprep.subr.mxu0 0.0
  %1820 = vmatpush1.msra.mxu0 0.0
  %1821 = vmatprep.subr.mxu0 0.0
  %1822 = vmatpush1.msra.mxu0 0.0
  %1823 = vmatprep.subr.mxu0 0.0
  %1824 = vmatpush1.msra.mxu0 0.0
  %1825 = vmatprep.subr.mxu0 0.0
  %1826 = vmatpush1.msra.mxu0 0.0
  %1827 = vmatprep.subr.mxu0 0.0
  %1828 = vmatpush1.msra.mxu0 0.0
  %1829 = vmatprep.subr.mxu0 0.0
  %1830 = vmatpush1.msra.mxu0 0.0
  %1831 = vmatprep.subr.mxu0 0.0
  %1832 = vmatpush1.msra.mxu0 0.0
  %1833 = vmatprep.subr.mxu0 0.0
  %1834 = vmatpush1.msra.mxu0 0.0
  %1835 = vmatprep.subr.mxu0 0.0
  %1836 = vmatpush1.msra.mxu0 0.0
  %1837 = vmatprep.subr.mxu0 0.0
  %1838 = vmatpush1.msra.mxu0 0.0
  %1839 = vmatprep.subr.mxu0 0.0
  %1840 = vmatpush1.msra.mxu0 0.0
  %1841 = vmatprep.subr.mxu0 0.0
  %1842 = vmatpush1.msra.mxu0 0.0
  %1843 = vmatprep.subr.mxu0 0.0
  %1844 = vmatpush1.msra.mxu0 0.0
  %1845 = vmatprep.subr.mxu0 0.0
  %1846 = vmatpush1.msra.mxu0 0.0
  %1847 = vmatprep.subr.mxu0 0.0
  %1848 = vmatpush1.msra.mxu0 0.0
  %1849 = vmatprep.subr.mxu0 0.0
  %1850 = vmatpush1.msra.mxu0 0.0
  %1851 = vmatprep.subr.mxu0 0.0
  %1852 = vmatpush1.msra.mxu0 0.0
  %1853 = vmatprep.subr.mxu0 0.0
  %1854 = vmatpush1.msra.mxu0 0.0
  %1855 = vmatprep.subr.mxu0 0.0
  %1856 = vmatpush1.msra.mxu0 0.0
  %1857 = vmatprep.subr.mxu0 0.0
  %1858 = vmatpush1.msra.mxu0 0.0
  %1859 = vmatprep.subr.mxu0 0.0
  %1860 = vmatpush1.msra.mxu0 0.0
  %1861 = vmatprep.subr.mxu0 0.0
  %1862 = vmatpush1.msra.mxu0 0.0
  %1863 = vmatprep.subr.mxu0 0.0
  %1864 = vmatpush1.msra.mxu0 0.0
  %1865 = vmatprep.subr.mxu0 0.0
  %1866 = vmatpush1.msra.mxu0 0.0
  %1867 = vmatprep.subr.mxu0 0.0
  %1868 = vmatpush1.msra.mxu0 0.0
  %1869 = vmatprep.subr.mxu0 0.0
  %1870 = vmatpush1.msra.mxu0 0.0
  %1871 = vmatprep.mubr.f32.mxu0 0.0
  %1872 = vmatmul.mubr.f32.gmra.mrb[0].mxu0 %v166
  %v1873 = vpop.f32.mrb[0].mxu0
  %v1874 = vadd.f32 %v1805, %v1873
  %v1875 = vpop.f32.mrb[0].mxu0
  %1876 = vdwg.mxu0
  %v1878 = vsel %vm401, %v1710, 0
  %v1881 = vsel %vm401, %v1791, 0
  %1883 = vmatprep.subr.mxu0 0.0
  %1884 = vmatpush1.xpose.msra.mxu0 %v1881
  %1885 = vmatprep.subr.mxu0 0.0
  %1886 = vmatpush1.xpose.msra.mxu0 0.0
  %1887 = vmatprep.subr.mxu0 0.0
  %1888 = vmatpush1.xpose.msra.mxu0 0.0
  %1889 = vmatprep.subr.mxu0 0.0
  %1890 = vmatpush1.xpose.msra.mxu0 0.0
  %1891 = vmatprep.subr.mxu0 0.0
  %1892 = vmatpush1.xpose.msra.mxu0 0.0
  %1893 = vmatprep.subr.mxu0 0.0
  %1894 = vmatpush1.xpose.msra.mxu0 0.0
  %1895 = vmatprep.subr.mxu0 0.0
  %1896 = vmatpush1.xpose.msra.mxu0 0.0
  %1897 = vmatprep.subr.mxu0 0.0
  %1898 = vmatpush1.xpose.msra.mxu0 0.0
  %1899 = vmatprep.subr.mxu0 0.0
  %1900 = vmatpush1.xpose.msra.mxu0 0.0
  %1901 = vmatprep.subr.mxu0 0.0
  %1902 = vmatpush1.xpose.msra.mxu0 0.0
  %1903 = vmatprep.subr.mxu0 0.0
  %1904 = vmatpush1.xpose.msra.mxu0 0.0
  %1905 = vmatprep.subr.mxu0 0.0
  %1906 = vmatpush1.xpose.msra.mxu0 0.0
  %1907 = vmatprep.subr.mxu0 0.0
  %1908 = vmatpush1.xpose.msra.mxu0 0.0
  %1909 = vmatprep.subr.mxu0 0.0
  %1910 = vmatpush1.xpose.msra.mxu0 0.0
  %1911 = vmatprep.subr.mxu0 0.0
  %1912 = vmatpush1.xpose.msra.mxu0 0.0
  %1913 = vmatprep.subr.mxu0 0.0
  %1914 = vmatpush1.xpose.msra.mxu0 0.0
  %1915 = vmatprep.subr.mxu0 0.0
  %1916 = vmatpush1.xpose.msra.mxu0 0.0
  %1917 = vmatprep.subr.mxu0 0.0
  %1918 = vmatpush1.xpose.msra.mxu0 0.0
  %1919 = vmatprep.subr.mxu0 0.0
  %1920 = vmatpush1.xpose.msra.mxu0 0.0
  %1921 = vmatprep.subr.mxu0 0.0
  %1922 = vmatpush1.xpose.msra.mxu0 0.0
  %1923 = vmatprep.subr.mxu0 0.0
  %1924 = vmatpush1.xpose.msra.mxu0 0.0
  %1925 = vmatprep.subr.mxu0 0.0
  %1926 = vmatpush1.xpose.msra.mxu0 0.0
  %1927 = vmatprep.subr.mxu0 0.0
  %1928 = vmatpush1.xpose.msra.mxu0 0.0
  %1929 = vmatprep.subr.mxu0 0.0
  %1930 = vmatpush1.xpose.msra.mxu0 0.0
  %1931 = vmatprep.subr.mxu0 0.0
  %1932 = vmatpush1.xpose.msra.mxu0 0.0
  %1933 = vmatprep.subr.mxu0 0.0
  %1934 = vmatpush1.xpose.msra.mxu0 0.0
  %1935 = vmatprep.subr.mxu0 0.0
  %1936 = vmatpush1.xpose.msra.mxu0 0.0
  %1937 = vmatprep.subr.mxu0 0.0
  %1938 = vmatpush1.xpose.msra.mxu0 0.0
  %1939 = vmatprep.subr.mxu0 0.0
  %1940 = vmatpush1.xpose.msra.mxu0 0.0
  %1941 = vmatprep.subr.mxu0 0.0
  %1942 = vmatpush1.xpose.msra.mxu0 0.0
  %1943 = vmatprep.subr.mxu0 0.0
  %1944 = vmatpush1.xpose.msra.mxu0 0.0
  %1945 = vmatprep.subr.mxu0 0.0
  %1946 = vmatpush1.xpose.msra.mxu0 0.0
  %1947 = vmatprep.mubr.f32.mxu0 0.0
  %1948 = vmatmul.mubr.f32.gmra.mrb[0].mxu0 %v1878
  %v1949 = vpop.f32.mrb[0].mxu0
  %v1950 = vadd.f32 0.0, %v1949
  %v1951 = vpop.f32.mrb[0].mxu0
  %1952 = vdwg.mxu0
  %v1953 = vsel %vm478, %v1950, -inf
  %1954 = vmax.xlane.f32.xlu0 %v1953
  %v1955 = vpop.xlane.xlu0 %1954
  %v1956 = vsub.f32 %v1950, %v1955
  %v1957 = vmul.f32 %v1956, 1.442695
  %v1958 = vpow.pop %v1957
  %v1959 = vsel %vm478, %v1958, 0.0
  %1960 = vadd.xlane.f32.xlu0 %v1959
  %v1961 = vpop.xlane.xlu0 %1960
  %v1962 = vrcp.pop %v1961
  %v1963 = vmul.f32 %v1958, %v1962
  %v1965 = vsel %vm490, %v1963, 0
  %v1968 = vsel %vm494, %v1874, 0
  %1970 = vmatprep.subr.mxu0 0.0
  %1971 = vmatpush1.msra.mxu0 %v1968
  %1972 = vmatprep.subr.mxu0 0.0
  %1973 = vmatpush1.msra.mxu0 0.0
  %1974 = vmatprep.subr.mxu0 0.0
  %1975 = vmatpush1.msra.mxu0 0.0
  %1976 = vmatprep.subr.mxu0 0.0
  %1977 = vmatpush1.msra.mxu0 0.0
  %1978 = vmatprep.subr.mxu0 0.0
  %1979 = vmatpush1.msra.mxu0 0.0
  %1980 = vmatprep.subr.mxu0 0.0
  %1981 = vmatpush1.msra.mxu0 0.0
  %1982 = vmatprep.subr.mxu0 0.0
  %1983 = vmatpush1.msra.mxu0 0.0
  %1984 = vmatprep.subr.mxu0 0.0
  %1985 = vmatpush1.msra.mxu0 0.0
  %1986 = vmatprep.subr.mxu0 0.0
  %1987 = vmatpush1.msra.mxu0 0.0
  %1988 = vmatprep.subr.mxu0 0.0
  %1989 = vmatpush1.msra.mxu0 0.0
  %1990 = vmatprep.subr.mxu0 0.0
  %1991 = vmatpush1.msra.mxu0 0.0
  %1992 = vmatprep.subr.mxu0 0.0
  %1993 = vmatpush1.msra.mxu0 0.0
  %1994 = vmatprep.subr.mxu0 0.0
  %1995 = vmatpush1.msra.mxu0 0.0
  %1996 = vmatprep.subr.mxu0 0.0
  %1997 = vmatpush1.msra.mxu0 0.0
  %1998 = vmatprep.subr.mxu0 0.0
  %1999 = vmatpush1.msra.mxu0 0.0
  %2000 = vmatprep.subr.mxu0 0.0
  %2001 = vmatpush1.msra.mxu0 0.0
  %2002 = vmatprep.subr.mxu0 0.0
  %2003 = vmatpush1.msra.mxu0 0.0
  %2004 = vmatprep.subr.mxu0 0.0
  %2005 = vmatpush1.msra.mxu0 0.0
  %2006 = vmatprep.subr.mxu0 0.0
  %2007 = vmatpush1.msra.mxu0 0.0
  %2008 = vmatprep.subr.mxu0 0.0
  %2009 = vmatpush1.msra.mxu0 0.0
  %2010 = vmatprep.subr.mxu0 0.0
  %2011 = vmatpush1.msra.mxu0 0.0
  %2012 = vmatprep.subr.mxu0 0.0
  %2013 = vmatpush1.msra.mxu0 0.0
  %2014 = vmatprep.subr.mxu0 0.0
  %2015 = vmatpush1.msra.mxu0 0.0
  %2016 = vmatprep.subr.mxu0 0.0
  %2017 = vmatpush1.msra.mxu0 0.0
  %2018 = vmatprep.subr.mxu0 0.0
  %2019 = vmatpush1.msra.mxu0 0.0
  %2020 = vmatprep.subr.mxu0 0.0
  %2021 = vmatpush1.msra.mxu0 0.0
  %2022 = vmatprep.subr.mxu0 0.0
  %2023 = vmatpush1.msra.mxu0 0.0
  %2024 = vmatprep.subr.mxu0 0.0
  %2025 = vmatpush1.msra.mxu0 0.0
  %2026 = vmatprep.subr.mxu0 0.0
  %2027 = vmatpush1.msra.mxu0 0.0
  %2028 = vmatprep.subr.mxu0 0.0
  %2029 = vmatpush1.msra.mxu0 0.0
  %2030 = vmatprep.subr.mxu0 0.0
  %2031 = vmatpush1.msra.mxu0 0.0
  %2032 = vmatprep.subr.mxu0 0.0
  %2033 = vmatpush1.msra.mxu0 0.0
  %2034 = vmatprep.mubr.f32.mxu0 0.0
  %2035 = vmatmul.mubr.f32.gmra.mrb[0].mxu0 %v1965
  %v2036 = vpop.f32.mrb[0].mxu0
  %v2037 = vadd.f32 0.0, %v2036
  %v2038 = vpop.f32.mrb[0].mxu0
  %2039 = vdwg.mxu0
  %s2040 = scalar_lea.vmem %s9, 24
  %v2041 = vld [vmem:[%s2040] sm:$0xff]
  %v2043 = vsel %vm401, %v2037, 0
  %2045 = vmatprep.subr.mxu0 0.0
  %2046 = vmatpush1.msra.mxu0 %v2041
  %2047 = vmatprep.subr.mxu0 0.0
  %2048 = vmatpush1.msra.mxu0 0.0
  %2049 = vmatprep.subr.mxu0 0.0
  %2050 = vmatpush1.msra.mxu0 0.0
  %2051 = vmatprep.subr.mxu0 0.0
  %2052 = vmatpush1.msra.mxu0 0.0
  %2053 = vmatprep.subr.mxu0 0.0
  %2054 = vmatpush1.msra.mxu0 0.0
  %2055 = vmatprep.subr.mxu0 0.0
  %2056 = vmatpush1.msra.mxu0 0.0
  %2057 = vmatprep.subr.mxu0 0.0
  %2058 = vmatpush1.msra.mxu0 0.0
  %2059 = vmatprep.subr.mxu0 0.0
  %2060 = vmatpush1.msra.mxu0 0.0
  %2061 = vmatprep.subr.mxu0 0.0
  %2062 = vmatpush1.msra.mxu0 0.0
  %2063 = vmatprep.subr.mxu0 0.0
  %2064 = vmatpush1.msra.mxu0 0.0
  %2065 = vmatprep.subr.mxu0 0.0
  %2066 = vmatpush1.msra.mxu0 0.0
  %2067 = vmatprep.subr.mxu0 0.0
  %2068 = vmatpush1.msra.mxu0 0.0
  %2069 = vmatprep.subr.mxu0 0.0
  %2070 = vmatpush1.msra.mxu0 0.0
  %2071 = vmatprep.subr.mxu0 0.0
  %2072 = vmatpush1.msra.mxu0 0.0
  %2073 = vmatprep.subr.mxu0 0.0
  %2074 = vmatpush1.msra.mxu0 0.0
  %2075 = vmatprep.subr.mxu0 0.0
  %2076 = vmatpush1.msra.mxu0 0.0
  %2077 = vmatprep.subr.mxu0 0.0
  %2078 = vmatpush1.msra.mxu0 0.0
  %2079 = vmatprep.subr.mxu0 0.0
  %2080 = vmatpush1.msra.mxu0 0.0
  %2081 = vmatprep.subr.mxu0 0.0
  %2082 = vmatpush1.msra.mxu0 0.0
  %2083 = vmatprep.subr.mxu0 0.0
  %2084 = vmatpush1.msra.mxu0 0.0
  %2085 = vmatprep.subr.mxu0 0.0
  %2086 = vmatpush1.msra.mxu0 0.0
  %2087 = vmatprep.subr.mxu0 0.0
  %2088 = vmatpush1.msra.mxu0 0.0
  %2089 = vmatprep.subr.mxu0 0.0
  %2090 = vmatpush1.msra.mxu0 0.0
  %2091 = vmatprep.subr.mxu0 0.0
  %2092 = vmatpush1.msra.mxu0 0.0
  %2093 = vmatprep.subr.mxu0 0.0
  %2094 = vmatpush1.msra.mxu0 0.0
  %2095 = vmatprep.subr.mxu0 0.0
  %2096 = vmatpush1.msra.mxu0 0.0
  %2097 = vmatprep.subr.mxu0 0.0
  %2098 = vmatpush1.msra.mxu0 0.0
  %2099 = vmatprep.subr.mxu0 0.0
  %2100 = vmatpush1.msra.mxu0 0.0
  %2101 = vmatprep.subr.mxu0 0.0
  %2102 = vmatpush1.msra.mxu0 0.0
  %2103 = vmatprep.subr.mxu0 0.0
  %2104 = vmatpush1.msra.mxu0 0.0
  %2105 = vmatprep.subr.mxu0 0.0
  %2106 = vmatpush1.msra.mxu0 0.0
  %2107 = vmatprep.subr.mxu0 0.0
  %2108 = vmatpush1.msra.mxu0 0.0
  %2109 = vmatprep.mubr.f32.mxu0 0.0
  %2110 = vmatmul.mubr.f32.gmra.mrb[0].mxu0 %v2043
  %v2111 = vpop.f32.mrb[0].mxu0
  %v2112 = vadd.f32 0.0, %v2111
  %v2113 = vpop.f32.mrb[0].mxu0
  %2114 = vdwg.mxu0
  %v2115 = vadd.f32 %v1626, %v2112
  %v2116 = vadd.f32 %v149, %v2115
  %vm2117 = vcmask 254976
  %v2118 = vsel %vm2117, %v2116, 0.0
  %2119 = vadd.xlane.f32.xlu0 %v2118
  %v2120 = vpop.xlane.xlu0 %2119
  %v2121 = vrcp.pop 32.0
  %v2122 = vmul.f32 %v2120, %v2121
  %v2123 = vsub.f32 %v2116, %v2122
  %v2124 = vmul.f32 %v2123, %v2123
  %v2125 = vsel %vm2117, %v2124, 0.0
  %2126 = vadd.xlane.f32.xlu0 %v2125
  %v2127 = vpop.xlane.xlu0 %2126
  %v2128 = vmul.f32 %v2127, %v2121
  %v2129 = vadd.f32 %v2128, 1e-05
  %v2130 = vrsqrt.pop %v2129
  %v2131 = vmul.f32 %v2123, %v2130
  %v2132 = vld [vmem:[%s11] sm:$0x1]
  %v2134 = vlaneseq
  %v2135 = vshrl.u32 %v2134, 7
  %v2136 = vsub.s32 0, %v2135
  %v2137 = vrot.slane %v2132, %v2136
  %v2139 = vmul.f32 %v2131, %v2137
  %v2140 = vld [vmem:[%s12] sm:$0x1]
  %v2142 = vlaneseq
  %v2143 = vshrl.u32 %v2142, 7
  %v2144 = vsub.s32 0, %v2143
  %v2145 = vrot.slane %v2140, %v2144
  %v2147 = vadd.f32 %v2139, %v2145
  %v2148 = vld [vmem:[%s13] sm:$0xff]
  %v2149 = vld [vmem:[%s13 + $0x8] sm:$0xff]
  %v2150 = vld [vmem:[%s13 + $0x10] sm:$0xff]
  %v2151 = vld [vmem:[%s13 + $0x18] sm:$0xff]
  %v2152 = vld [vmem:[%s14] sm:$0x1]
  %v2154 = vlaneseq
  %v2155 = vshrl.u32 %v2154, 7
  %v2156 = vsub.s32 0, %v2155
  %v2157 = vrot.slane %v2152, %v2156
  %v2160 = vsel %vm164, %v2147, 0
  %2162 = vmatprep.subr.mxu0 0.0
  %2163 = vmatpush1.msra.mxu0 %v2148
  %2164 = vmatprep.subr.mxu0 0.0
  %2165 = vmatpush1.msra.mxu0 %v2149
  %2166 = vmatprep.subr.mxu0 0.0
  %2167 = vmatpush1.msra.mxu0 %v2150
  %2168 = vmatprep.subr.mxu0 0.0
  %2169 = vmatpush1.msra.mxu0 %v2151
  %2170 = vmatprep.subr.mxu0 0.0
  %2171 = vmatpush1.msra.mxu0 0.0
  %2172 = vmatprep.subr.mxu0 0.0
  %2173 = vmatpush1.msra.mxu0 0.0
  %2174 = vmatprep.subr.mxu0 0.0
  %2175 = vmatpush1.msra.mxu0 0.0
  %2176 = vmatprep.subr.mxu0 0.0
  %2177 = vmatpush1.msra.mxu0 0.0
  %2178 = vmatprep.subr.mxu0 0.0
  %2179 = vmatpush1.msra.mxu0 0.0
  %2180 = vmatprep.subr.mxu0 0.0
  %2181 = vmatpush1.msra.mxu0 0.0
  %2182 = vmatprep.subr.mxu0 0.0
  %2183 = vmatpush1.msra.mxu0 0.0
  %2184 = vmatprep.subr.mxu0 0.0
  %2185 = vmatpush1.msra.mxu0 0.0
  %2186 = vmatprep.subr.mxu0 0.0
  %2187 = vmatpush1.msra.mxu0 0.0
  %2188 = vmatprep.subr.mxu0 0.0
  %2189 = vmatpush1.msra.mxu0 0.0
  %2190 = vmatprep.subr.mxu0 0.0
  %2191 = vmatpush1.msra.mxu0 0.0
  %2192 = vmatprep.subr.mxu0 0.0
  %2193 = vmatpush1.msra.mxu0 0.0
  %2194 = vmatprep.subr.mxu0 0.0
  %2195 = vmatpush1.msra.mxu0 0.0
  %2196 = vmatprep.subr.mxu0 0.0
  %2197 = vmatpush1.msra.mxu0 0.0
  %2198 = vmatprep.subr.mxu0 0.0
  %2199 = vmatpush1.msra.mxu0 0.0
  %2200 = vmatprep.subr.mxu0 0.0
  %2201 = vmatpush1.msra.mxu0 0.0
  %2202 = vmatprep.subr.mxu0 0.0
  %2203 = vmatpush1.msra.mxu0 0.0
  %2204 = vmatprep.subr.mxu0 0.0
  %2205 = vmatpush1.msra.mxu0 0.0
  %2206 = vmatprep.subr.mxu0 0.0
  %2207 = vmatpush1.msra.mxu0 0.0
  %2208 = vmatprep.subr.mxu0 0.0
  %2209 = vmatpush1.msra.mxu0 0.0
  %2210 = vmatprep.subr.mxu0 0.0
  %2211 = vmatpush1.msra.mxu0 0.0
  %2212 = vmatprep.subr.mxu0 0.0
  %2213 = vmatpush1.msra.mxu0 0.0
  %2214 = vmatprep.subr.mxu0 0.0
  %2215 = vmatpush1.msra.mxu0 0.0
  %2216 = vmatprep.subr.mxu0 0.0
  %2217 = vmatpush1.msra.mxu0 0.0
  %2218 = vmatprep.subr.mxu0 0.0
  %2219 = vmatpush1.msra.mxu0 0.0
  %2220 = vmatprep.subr.mxu0 0.0
  %2221 = vmatpush1.msra.mxu0 0.0
  %2222 = vmatprep.subr.mxu0 0.0
  %2223 = vmatpush1.msra.mxu0 0.0
  %2224 = vmatprep.subr.mxu0 0.0
  %2225 = vmatpush1.msra.mxu0 0.0
  %2226 = vmatprep.mubr.f32.mxu0 0.0
  %2227 = vmatmul.mubr.f32.gmra.mrb[0].mxu0 %v2160
  %v2228 = vpop.f32.mrb[0].mxu0
  %v2229 = vadd.f32 %v2157, %v2228
  %v2230 = vpop.f32.mrb[0].mxu0
  %2231 = vdwg.mxu0
  %v2232 = vmax.f32 %v2229, 0.0
  %v2233 = vld [vmem:[%s15] sm:$0xff]
  %v2234 = vld [vmem:[%s15 + $0x8] sm:$0xff]
  %v2235 = vld [vmem:[%s15 + $0x10] sm:$0xff]
  %v2236 = vld [vmem:[%s15 + $0x18] sm:$0xff]
  %v2237 = vld [vmem:[%s15 + $0x20] sm:$0xff]
  %v2238 = vld [vmem:[%s15 + $0x28] sm:$0xff]
  %v2239 = vld [vmem:[%s15 + $0x30] sm:$0xff]
  %v2240 = vld [vmem:[%s15 + $0x38] sm:$0xff]
  %v2241 = vld [vmem:[%s16] sm:$0x1]
  %v2243 = vlaneseq
  %v2244 = vshrl.u32 %v2243, 7
  %v2245 = vsub.s32 0, %v2244
  %v2246 = vrot.slane %v2241, %v2245
  %vm2248 = vcmask 523264
  %v2250 = vsel %vm2248, %v2232, 0
  %2252 = vmatprep.subr.mxu0 0.0
  %2253 = vmatpush1.msra.mxu0 %v2233
  %2254 = vmatprep.subr.mxu0 0.0
  %2255 = vmatpush1.msra.mxu0 %v2234
  %2256 = vmatprep.subr.mxu0 0.0
  %2257 = vmatpush1.msra.mxu0 %v2235
  %2258 = vmatprep.subr.mxu0 0.0
  %2259 = vmatpush1.msra.mxu0 %v2236
  %2260 = vmatprep.subr.mxu0 0.0
  %2261 = vmatpush1.msra.mxu0 %v2237
  %2262 = vmatprep.subr.mxu0 0.0
  %2263 = vmatpush1.msra.mxu0 %v2238
  %2264 = vmatprep.subr.mxu0 0.0
  %2265 = vmatpush1.msra.mxu0 %v2239
  %2266 = vmatprep.subr.mxu0 0.0
  %2267 = vmatpush1.msra.mxu0 %v2240
  %2268 = vmatprep.subr.mxu0 0.0
  %2269 = vmatpush1.msra.mxu0 0.0
  %2270 = vmatprep.subr.mxu0 0.0
  %2271 = vmatpush1.msra.mxu0 0.0
  %2272 = vmatprep.subr.mxu0 0.0
  %2273 = vmatpush1.msra.mxu0 0.0
  %2274 = vmatprep.subr.mxu0 0.0
  %2275 = vmatpush1.msra.mxu0 0.0
  %2276 = vmatprep.subr.mxu0 0.0
  %2277 = vmatpush1.msra.mxu0 0.0
  %2278 = vmatprep.subr.mxu0 0.0
  %2279 = vmatpush1.msra.mxu0 0.0
  %2280 = vmatprep.subr.mxu0 0.0
  %2281 = vmatpush1.msra.mxu0 0.0
  %2282 = vmatprep.subr.mxu0 0.0
  %2283 = vmatpush1.msra.mxu0 0.0
  %2284 = vmatprep.subr.mxu0 0.0
  %2285 = vmatpush1.msra.mxu0 0.0
  %2286 = vmatprep.subr.mxu0 0.0
  %2287 = vmatpush1.msra.mxu0 0.0
  %2288 = vmatprep.subr.mxu0 0.0
  %2289 = vmatpush1.msra.mxu0 0.0
  %2290 = vmatprep.subr.mxu0 0.0
  %2291 = vmatpush1.msra.mxu0 0.0
  %2292 = vmatprep.subr.mxu0 0.0
  %2293 = vmatpush1.msra.mxu0 0.0
  %2294 = vmatprep.subr.mxu0 0.0
  %2295 = vmatpush1.msra.mxu0 0.0
  %2296 = vmatprep.subr.mxu0 0.0
  %2297 = vmatpush1.msra.mxu0 0.0
  %2298 = vmatprep.subr.mxu0 0.0
  %2299 = vmatpush1.msra.mxu0 0.0
  %2300 = vmatprep.subr.mxu0 0.0
  %2301 = vmatpush1.msra.mxu0 0.0
  %2302 = vmatprep.subr.mxu0 0.0
  %2303 = vmatpush1.msra.mxu0 0.0
  %2304 = vmatprep.subr.mxu0 0.0
  %2305 = vmatpush1.msra.mxu0 0.0
  %2306 = vmatprep.subr.mxu0 0.0
  %2307 = vmatpush1.msra.mxu0 0.0
  %2308 = vmatprep.subr.mxu0 0.0
  %2309 = vmatpush1.msra.mxu0 0.0
  %2310 = vmatprep.subr.mxu0 0.0
  %2311 = vmatpush1.msra.mxu0 0.0
  %2312 = vmatprep.subr.mxu0 0.0
  %2313 = vmatpush1.msra.mxu0 0.0
  %2314 = vmatprep.subr.mxu0 0.0
  %2315 = vmatpush1.msra.mxu0 0.0
  %2316 = vmatprep.mubr.f32.mxu0 0.0
  %2317 = vmatmul.mubr.f32.gmra.mrb[0].mxu0 %v2250
  %v2318 = vpop.f32.mrb[0].mxu0
  %v2319 = vadd.f32 %v2246, %v2318
  %v2320 = vpop.f32.mrb[0].mxu0
  %2321 = vdwg.mxu0
  %v2322 = vadd.f32 %v2147, %v2319
  %v2323 = vsel %vm2117, %v2322, 0.0
  %2324 = vadd.xlane.f32.xlu0 %v2323
  %v2325 = vpop.xlane.xlu0 %2324
  %v2326 = vmul.f32 %v2325, %v2121
  %v2327 = vsub.f32 %v2322, %v2326
  %v2328 = vmul.f32 %v2327, %v2327
  %v2329 = vsel %vm2117, %v2328, 0.0
  %2330 = vadd.xlane.f32.xlu0 %v2329
  %v2331 = vpop.xlane.xlu0 %2330
  %v2332 = vmul.f32 %v2331, %v2121
  %v2333 = vadd.f32 %v2332, 1e-05
  %v2334 = vrsqrt.pop %v2333
  %v2335 = vmul.f32 %v2327, %v2334
  %v2336 = vld [vmem:[%s17] sm:$0x1]
  %v2338 = vlaneseq
  %v2339 = vshrl.u32 %v2338, 7
  %v2340 = vsub.s32 0, %v2339
  %v2341 = vrot.slane %v2336, %v2340
  %v2343 = vmul.f32 %v2335, %v2341
  %v2344 = vld [vmem:[%s18] sm:$0x1]
  %v2346 = vlaneseq
  %v2347 = vshrl.u32 %v2346, 7
  %v2348 = vsub.s32 0, %v2347
  %v2349 = vrot.slane %v2344, %v2348
  %v2351 = vadd.f32 %v2343, %v2349
  %s2352 = scalar_lea.vmem %s10, 1
  %v2353 = vld [vmem:[%s2352] sm:$0x1]
  %s2354 = scalar_lea.vmem %s3, 128
  %v2355 = vld [vmem:[%s2354] sm:$0xff]
  %v2356 = vld [vmem:[%s2354 + $0x8] sm:$0xff]
  %v2357 = vld [vmem:[%s2354 + $0x10] sm:$0xff]
  %v2358 = vld [vmem:[%s2354 + $0x18] sm:$0xff]
  %s2359 = scalar_lea.vmem %s4, 4
  %v2360 = vld [vmem:[%s2359] sm:$0x1]
  %v2362 = vlaneseq
  %v2363 = vshrl.u32 %v2362, 7
  %v2364 = vsub.s32 0, %v2363
  %v2365 = vrot.slane %v2360, %v2364
  %v2368 = vsel %vm164, %v2351, 0
  %2370 = vmatprep.subr.mxu0 0.0
  %2371 = vmatpush1.msra.mxu0 %v2355
  %2372 = vmatprep.subr.mxu0 0.0
  %2373 = vmatpush1.msra.mxu0 %v2356
  %2374 = vmatprep.subr.mxu0 0.0
  %2375 = vmatpush1.msra.mxu0 %v2357
  %2376 = vmatprep.subr.mxu0 0.0
  %2377 = vmatpush1.msra.mxu0 %v2358
  %2378 = vmatprep.subr.mxu0 0.0
  %2379 = vmatpush1.msra.mxu0 0.0
  %2380 = vmatprep.subr.mxu0 0.0
  %2381 = vmatpush1.msra.mxu0 0.0
  %2382 = vmatprep.subr.mxu0 0.0
  %2383 = vmatpush1.msra.mxu0 0.0
  %2384 = vmatprep.subr.mxu0 0.0
  %2385 = vmatpush1.msra.mxu0 0.0
  %2386 = vmatprep.subr.mxu0 0.0
  %2387 = vmatpush1.msra.mxu0 0.0
  %2388 = vmatprep.subr.mxu0 0.0
  %2389 = vmatpush1.msra.mxu0 0.0
  %2390 = vmatprep.subr.mxu0 0.0
  %2391 = vmatpush1.msra.mxu0 0.0
  %2392 = vmatprep.subr.mxu0 0.0
  %2393 = vmatpush1.msra.mxu0 0.0
  %2394 = vmatprep.subr.mxu0 0.0
  %2395 = vmatpush1.msra.mxu0 0.0
  %2396 = vmatprep.subr.mxu0 0.0
  %2397 = vmatpush1.msra.mxu0 0.0
  %2398 = vmatprep.subr.mxu0 0.0
  %2399 = vmatpush1.msra.mxu0 0.0
  %2400 = vmatprep.subr.mxu0 0.0
  %2401 = vmatpush1.msra.mxu0 0.0
  %2402 = vmatprep.subr.mxu0 0.0
  %2403 = vmatpush1.msra.mxu0 0.0
  %2404 = vmatprep.subr.mxu0 0.0
  %2405 = vmatpush1.msra.mxu0 0.0
  %2406 = vmatprep.subr.mxu0 0.0
  %2407 = vmatpush1.msra.mxu0 0.0
  %2408 = vmatprep.subr.mxu0 0.0
  %2409 = vmatpush1.msra.mxu0 0.0
  %2410 = vmatprep.subr.mxu0 0.0
  %2411 = vmatpush1.msra.mxu0 0.0
  %2412 = vmatprep.subr.mxu0 0.0
  %2413 = vmatpush1.msra.mxu0 0.0
  %2414 = vmatprep.subr.mxu0 0.0
  %2415 = vmatpush1.msra.mxu0 0.0
  %2416 = vmatprep.subr.mxu0 0.0
  %2417 = vmatpush1.msra.mxu0 0.0
  %2418 = vmatprep.subr.mxu0 0.0
  %2419 = vmatpush1.msra.mxu0 0.0
  %2420 = vmatprep.subr.mxu0 0.0
  %2421 = vmatpush1.msra.mxu0 0.0
  %2422 = vmatprep.subr.mxu0 0.0
  %2423 = vmatpush1.msra.mxu0 0.0
  %2424 = vmatprep.subr.mxu0 0.0
  %2425 = vmatpush1.msra.mxu0 0.0
  %2426 = vmatprep.subr.mxu0 0.0
  %2427 = vmatpush1.msra.mxu0 0.0
  %2428 = vmatprep.subr.mxu0 0.0
  %2429 = vmatpush1.msra.mxu0 0.0
  %2430 = vmatprep.subr.mxu0 0.0
  %2431 = vmatpush1.msra.mxu0 0.0
  %2432 = vmatprep.subr.mxu0 0.0
  %2433 = vmatpush1.msra.mxu0 0.0
  %2434 = vmatprep.mubr.f32.mxu0 0.0
  %2435 = vmatmul.mubr.f32.gmra.mrb[0].mxu0 %v2368
  %v2436 = vpop.f32.mrb[0].mxu0
  %v2437 = vadd.f32 %v2365, %v2436
  %v2438 = vpop.f32.mrb[0].mxu0
  %2439 = vdwg.mxu0
  %v2440 = vmul.f32 %v2437, 0.35355338
  %s2441 = scalar_lea.vmem %s5, 128
  %v2442 = vld [vmem:[%s2441] sm:$0xff]
  %v2443 = vld [vmem:[%s2441 + $0x8] sm:$0xff]
  %v2444 = vld [vmem:[%s2441 + $0x10] sm:$0xff]
  %v2445 = vld [vmem:[%s2441 + $0x18] sm:$0xff]
  %s2446 = scalar_lea.vmem %s6, 4
  %v2447 = vld [vmem:[%s2446] sm:$0x1]
  %v2449 = vlaneseq
  %v2450 = vshrl.u32 %v2449, 7
  %v2451 = vsub.s32 0, %v2450
  %v2452 = vrot.slane %v2447, %v2451
  %2454 = vmatprep.subr.mxu0 0.0
  %2455 = vmatpush1.msra.mxu0 %v2442
  %2456 = vmatprep.subr.mxu0 0.0
  %2457 = vmatpush1.msra.mxu0 %v2443
  %2458 = vmatprep.subr.mxu0 0.0
  %2459 = vmatpush1.msra.mxu0 %v2444
  %2460 = vmatprep.subr.mxu0 0.0
  %2461 = vmatpush1.msra.mxu0 %v2445
  %2462 = vmatprep.subr.mxu0 0.0
  %2463 = vmatpush1.msra.mxu0 0.0
  %2464 = vmatprep.subr.mxu0 0.0
  %2465 = vmatpush1.msra.mxu0 0.0
  %2466 = vmatprep.subr.mxu0 0.0
  %2467 = vmatpush1.msra.mxu0 0.0
  %2468 = vmatprep.subr.mxu0 0.0
  %2469 = vmatpush1.msra.mxu0 0.0
  %2470 = vmatprep.subr.mxu0 0.0
  %2471 = vmatpush1.msra.mxu0 0.0
  %2472 = vmatprep.subr.mxu0 0.0
  %2473 = vmatpush1.msra.mxu0 0.0
  %2474 = vmatprep.subr.mxu0 0.0
  %2475 = vmatpush1.msra.mxu0 0.0
  %2476 = vmatprep.subr.mxu0 0.0
  %2477 = vmatpush1.msra.mxu0 0.0
  %2478 = vmatprep.subr.mxu0 0.0
  %2479 = vmatpush1.msra.mxu0 0.0
  %2480 = vmatprep.subr.mxu0 0.0
  %2481 = vmatpush1.msra.mxu0 0.0
  %2482 = vmatprep.subr.mxu0 0.0
  %2483 = vmatpush1.msra.mxu0 0.0
  %2484 = vmatprep.subr.mxu0 0.0
  %2485 = vmatpush1.msra.mxu0 0.0
  %2486 = vmatprep.subr.mxu0 0.0
  %2487 = vmatpush1.msra.mxu0 0.0
  %2488 = vmatprep.subr.mxu0 0.0
  %2489 = vmatpush1.msra.mxu0 0.0
  %2490 = vmatprep.subr.mxu0 0.0
  %2491 = vmatpush1.msra.mxu0 0.0
  %2492 = vmatprep.subr.mxu0 0.0
  %2493 = vmatpush1.msra.mxu0 0.0
  %2494 = vmatprep.subr.mxu0 0.0
  %2495 = vmatpush1.msra.mxu0 0.0
  %2496 = vmatprep.subr.mxu0 0.0
  %2497 = vmatpush1.msra.mxu0 0.0
  %2498 = vmatprep.subr.mxu0 0.0
  %2499 = vmatpush1.msra.mxu0 0.0
  %2500 = vmatprep.subr.mxu0 0.0
  %2501 = vmatpush1.msra.mxu0 0.0
  %2502 = vmatprep.subr.mxu0 0.0
  %2503 = vmatpush1.msra.mxu0 0.0
  %2504 = vmatprep.subr.mxu0 0.0
  %2505 = vmatpush1.msra.mxu0 0.0
  %2506 = vmatprep.subr.mxu0 0.0
  %2507 = vmatpush1.msra.mxu0 0.0
  %2508 = vmatprep.subr.mxu0 0.0
  %2509 = vmatpush1.msra.mxu0 0.0
  %2510 = vmatprep.subr.mxu0 0.0
  %2511 = vmatpush1.msra.mxu0 0.0
  %2512 = vmatprep.subr.mxu0 0.0
  %2513 = vmatpush1.msra.mxu0 0.0
  %2514 = vmatprep.subr.mxu0 0.0
  %2515 = vmatpush1.msra.mxu0 0.0
  %2516 = vmatprep.subr.mxu0 0.0
  %2517 = vmatpush1.msra.mxu0 0.0
  %2518 = vmatprep.mubr.f32.mxu0 0.0
  %2519 = vmatmul.mubr.f32.gmra.mrb[0].mxu0 %v2368
  %v2520 = vpop.f32.mrb[0].mxu0
  %v2521 = vadd.f32 %v2452, %v2520
  %v2522 = vpop.f32.mrb[0].mxu0
  %2523 = vdwg.mxu0
  %s2524 = scalar_lea.vmem %s7, 128
  %v2525 = vld [vmem:[%s2524] sm:$0xff]
  %v2526 = vld [vmem:[%s2524 + $0x8] sm:$0xff]
  %v2527 = vld [vmem:[%s2524 + $0x10] sm:$0xff]
  %v2528 = vld [vmem:[%s2524 + $0x18] sm:$0xff]
  %s2529 = scalar_lea.vmem %s8, 4
  %v2530 = vld [vmem:[%s2529] sm:$0x1]
  %v2532 = vlaneseq
  %v2533 = vshrl.u32 %v2532, 7
  %v2534 = vsub.s32 0, %v2533
  %v2535 = vrot.slane %v2530, %v2534
  %2537 = vmatprep.subr.mxu0 0.0
  %2538 = vmatpush1.msra.mxu0 %v2525
  %2539 = vmatprep.subr.mxu0 0.0
  %2540 = vmatpush1.msra.mxu0 %v2526
  %2541 = vmatprep.subr.mxu0 0.0
  %2542 = vmatpush1.msra.mxu0 %v2527
  %2543 = vmatprep.subr.mxu0 0.0
  %2544 = vmatpush1.msra.mxu0 %v2528
  %2545 = vmatprep.subr.mxu0 0.0
  %2546 = vmatpush1.msra.mxu0 0.0
  %2547 = vmatprep.subr.mxu0 0.0
  %2548 = vmatpush1.msra.mxu0 0.0
  %2549 = vmatprep.subr.mxu0 0.0
  %2550 = vmatpush1.msra.mxu0 0.0
  %2551 = vmatprep.subr.mxu0 0.0
  %2552 = vmatpush1.msra.mxu0 0.0
  %2553 = vmatprep.subr.mxu0 0.0
  %2554 = vmatpush1.msra.mxu0 0.0
  %2555 = vmatprep.subr.mxu0 0.0
  %2556 = vmatpush1.msra.mxu0 0.0
  %2557 = vmatprep.subr.mxu0 0.0
  %2558 = vmatpush1.msra.mxu0 0.0
  %2559 = vmatprep.subr.mxu0 0.0
  %2560 = vmatpush1.msra.mxu0 0.0
  %2561 = vmatprep.subr.mxu0 0.0
  %2562 = vmatpush1.msra.mxu0 0.0
  %2563 = vmatprep.subr.mxu0 0.0
  %2564 = vmatpush1.msra.mxu0 0.0
  %2565 = vmatprep.subr.mxu0 0.0
  %2566 = vmatpush1.msra.mxu0 0.0
  %2567 = vmatprep.subr.mxu0 0.0
  %2568 = vmatpush1.msra.mxu0 0.0
  %2569 = vmatprep.subr.mxu0 0.0
  %2570 = vmatpush1.msra.mxu0 0.0
  %2571 = vmatprep.subr.mxu0 0.0
  %2572 = vmatpush1.msra.mxu0 0.0
  %2573 = vmatprep.subr.mxu0 0.0
  %2574 = vmatpush1.msra.mxu0 0.0
  %2575 = vmatprep.subr.mxu0 0.0
  %2576 = vmatpush1.msra.mxu0 0.0
  %2577 = vmatprep.subr.mxu0 0.0
  %2578 = vmatpush1.msra.mxu0 0.0
  %2579 = vmatprep.subr.mxu0 0.0
  %2580 = vmatpush1.msra.mxu0 0.0
  %2581 = vmatprep.subr.mxu0 0.0
  %2582 = vmatpush1.msra.mxu0 0.0
  %2583 = vmatprep.subr.mxu0 0.0
  %2584 = vmatpush1.msra.mxu0 0.0
  %2585 = vmatprep.subr.mxu0 0.0
  %2586 = vmatpush1.msra.mxu0 0.0
  %2587 = vmatprep.subr.mxu0 0.0
  %2588 = vmatpush1.msra.mxu0 0.0
  %2589 = vmatprep.subr.mxu0 0.0
  %2590 = vmatpush1.msra.mxu0 0.0
  %2591 = vmatprep.subr.mxu0 0.0
  %2592 = vmatpush1.msra.mxu0 0.0
  %2593 = vmatprep.subr.mxu0 0.0
  %2594 = vmatpush1.msra.mxu0 0.0
  %2595 = vmatprep.subr.mxu0 0.0
  %2596 = vmatpush1.msra.mxu0 0.0
  %2597 = vmatprep.subr.mxu0 0.0
  %2598 = vmatpush1.msra.mxu0 0.0
  %2599 = vmatprep.subr.mxu0 0.0
  %2600 = vmatpush1.msra.mxu0 0.0
  %2601 = vmatprep.mubr.f32.mxu0 0.0
  %2602 = vmatmul.mubr.f32.gmra.mrb[0].mxu0 %v2368
  %v2603 = vpop.f32.mrb[0].mxu0
  %v2604 = vadd.f32 %v2535, %v2603
  %v2605 = vpop.f32.mrb[0].mxu0
  %2606 = vdwg.mxu0
  %v2608 = vsel %vm401, %v2440, 0
  %v2611 = vsel %vm401, %v2521, 0
  %2613 = vmatprep.subr.mxu0 0.0
  %2614 = vmatpush1.xpose.msra.mxu0 %v2611
  %2615 = vmatprep.subr.mxu0 0.0
  %2616 = vmatpush1.xpose.msra.mxu0 0.0
  %2617 = vmatprep.subr.mxu0 0.0
  %2618 = vmatpush1.xpose.msra.mxu0 0.0
  %2619 = vmatprep.subr.mxu0 0.0
  %2620 = vmatpush1.xpose.msra.mxu0 0.0
  %2621 = vmatprep.subr.mxu0 0.0
  %2622 = vmatpush1.xpose.msra.mxu0 0.0
  %2623 = vmatprep.subr.mxu0 0.0
  %2624 = vmatpush1.xpose.msra.mxu0 0.0
  %2625 = vmatprep.subr.mxu0 0.0
  %2626 = vmatpush1.xpose.msra.mxu0 0.0
  %2627 = vmatprep.subr.mxu0 0.0
  %2628 = vmatpush1.xpose.msra.mxu0 0.0
  %2629 = vmatprep.subr.mxu0 0.0
  %2630 = vmatpush1.xpose.msra.mxu0 0.0
  %2631 = vmatprep.subr.mxu0 0.0
  %2632 = vmatpush1.xpose.msra.mxu0 0.0
  %2633 = vmatprep.subr.mxu0 0.0
  %2634 = vmatpush1.xpose.msra.mxu0 0.0
  %2635 = vmatprep.subr.mxu0 0.0
  %2636 = vmatpush1.xpose.msra.mxu0 0.0
  %2637 = vmatprep.subr.mxu0 0.0
  %2638 = vmatpush1.xpose.msra.mxu0 0.0
  %2639 = vmatprep.subr.mxu0 0.0
  %2640 = vmatpush1.xpose.msra.mxu0 0.0
  %2641 = vmatprep.subr.mxu0 0.0
  %2642 = vmatpush1.xpose.msra.mxu0 0.0
  %2643 = vmatprep.subr.mxu0 0.0
  %2644 = vmatpush1.xpose.msra.mxu0 0.0
  %2645 = vmatprep.subr.mxu0 0.0
  %2646 = vmatpush1.xpose.msra.mxu0 0.0
  %2647 = vmatprep.subr.mxu0 0.0
  %2648 = vmatpush1.xpose.msra.mxu0 0.0
  %2649 = vmatprep.subr.mxu0 0.0
  %2650 = vmatpush1.xpose.msra.mxu0 0.0
  %2651 = vmatprep.subr.mxu0 0.0
  %2652 = vmatpush1.xpose.msra.mxu0 0.0
  %2653 = vmatprep.subr.mxu0 0.0
  %2654 = vmatpush1.xpose.msra.mxu0 0.0
  %2655 = vmatprep.subr.mxu0 0.0
  %2656 = vmatpush1.xpose.msra.mxu0 0.0
  %2657 = vmatprep.subr.mxu0 0.0
  %2658 = vmatpush1.xpose.msra.mxu0 0.0
  %2659 = vmatprep.subr.mxu0 0.0
  %2660 = vmatpush1.xpose.msra.mxu0 0.0
  %2661 = vmatprep.subr.mxu0 0.0
  %2662 = vmatpush1.xpose.msra.mxu0 0.0
  %2663 = vmatprep.subr.mxu0 0.0
  %2664 = vmatpush1.xpose.msra.mxu0 0.0
  %2665 = vmatprep.subr.mxu0 0.0
  %2666 = vmatpush1.xpose.msra.mxu0 0.0
  %2667 = vmatprep.subr.mxu0 0.0
  %2668 = vmatpush1.xpose.msra.mxu0 0.0
  %2669 = vmatprep.subr.mxu0 0.0
  %2670 = vmatpush1.xpose.msra.mxu0 0.0
  %2671 = vmatprep.subr.mxu0 0.0
  %2672 = vmatpush1.xpose.msra.mxu0 0.0
  %2673 = vmatprep.subr.mxu0 0.0
  %2674 = vmatpush1.xpose.msra.mxu0 0.0
  %2675 = vmatprep.subr.mxu0 0.0
  %2676 = vmatpush1.xpose.msra.mxu0 0.0
  %2677 = vmatprep.mubr.f32.mxu0 0.0
  %2678 = vmatmul.mubr.f32.gmra.mrb[0].mxu0 %v2608
  %v2679 = vpop.f32.mrb[0].mxu0
  %v2680 = vadd.f32 0.0, %v2679
  %v2681 = vpop.f32.mrb[0].mxu0
  %2682 = vdwg.mxu0
  %v2683 = vsel %vm478, %v2680, -inf
  %2684 = vmax.xlane.f32.xlu0 %v2683
  %v2685 = vpop.xlane.xlu0 %2684
  %v2686 = vsub.f32 %v2680, %v2685
  %v2687 = vmul.f32 %v2686, 1.442695
  %v2688 = vpow.pop %v2687
  %v2689 = vsel %vm478, %v2688, 0.0
  %2690 = vadd.xlane.f32.xlu0 %v2689
  %v2691 = vpop.xlane.xlu0 %2690
  %v2692 = vrcp.pop %v2691
  %v2693 = vmul.f32 %v2688, %v2692
  %v2695 = vsel %vm490, %v2693, 0
  %v2698 = vsel %vm494, %v2604, 0
  %2700 = vmatprep.subr.mxu0 0.0
  %2701 = vmatpush1.msra.mxu0 %v2698
  %2702 = vmatprep.subr.mxu0 0.0
  %2703 = vmatpush1.msra.mxu0 0.0
  %2704 = vmatprep.subr.mxu0 0.0
  %2705 = vmatpush1.msra.mxu0 0.0
  %2706 = vmatprep.subr.mxu0 0.0
  %2707 = vmatpush1.msra.mxu0 0.0
  %2708 = vmatprep.subr.mxu0 0.0
  %2709 = vmatpush1.msra.mxu0 0.0
  %2710 = vmatprep.subr.mxu0 0.0
  %2711 = vmatpush1.msra.mxu0 0.0
  %2712 = vmatprep.subr.mxu0 0.0
  %2713 = vmatpush1.msra.mxu0 0.0
  %2714 = vmatprep.subr.mxu0 0.0
  %2715 = vmatpush1.msra.mxu0 0.0
  %2716 = vmatprep.subr.mxu0 0.0
  %2717 = vmatpush1.msra.mxu0 0.0
  %2718 = vmatprep.subr.mxu0 0.0
  %2719 = vmatpush1.msra.mxu0 0.0
  %2720 = vmatprep.subr.mxu0 0.0
  %2721 = vmatpush1.msra.mxu0 0.0
  %2722 = vmatprep.subr.mxu0 0.0
  %2723 = vmatpush1.msra.mxu0 0.0
  %2724 = vmatprep.subr.mxu0 0.0
  %2725 = vmatpush1.msra.mxu0 0.0
  %2726 = vmatprep.subr.mxu0 0.0
  %2727 = vmatpush1.msra.mxu0 0.0
  %2728 = vmatprep.subr.mxu0 0.0
  %2729 = vmatpush1.msra.mxu0 0.0
  %2730 = vmatprep.subr.mxu0 0.0
  %2731 = vmatpush1.msra.mxu0 0.0
  %2732 = vmatprep.subr.mxu0 0.0
  %2733 = vmatpush1.msra.mxu0 0.0
  %2734 = vmatprep.subr.mxu0 0.0
  %2735 = vmatpush1.msra.mxu0 0.0
  %2736 = vmatprep.subr.mxu0 0.0
  %2737 = vmatpush1.msra.mxu0 0.0
  %2738 = vmatprep.subr.mxu0 0.0
  %2739 = vmatpush1.msra.mxu0 0.0
  %2740 = vmatprep.subr.mxu0 0.0
  %2741 = vmatpush1.msra.mxu0 0.0
  %2742 = vmatprep.subr.mxu0 0.0
  %2743 = vmatpush1.msra.mxu0 0.0
  %2744 = vmatprep.subr.mxu0 0.0
  %2745 = vmatpush1.msra.mxu0 0.0
  %2746 = vmatprep.subr.mxu0 0.0
  %2747 = vmatpush1.msra.mxu0 0.0
  %2748 = vmatprep.subr.mxu0 0.0
  %2749 = vmatpush1.msra.mxu0 0.0
  %2750 = vmatprep.subr.mxu0 0.0
  %2751 = vmatpush1.msra.mxu0 0.0
  %2752 = vmatprep.subr.mxu0 0.0
  %2753 = vmatpush1.msra.mxu0 0.0
  %2754 = vmatprep.subr.mxu0 0.0
  %2755 = vmatpush1.msra.mxu0 0.0
  %2756 = vmatprep.subr.mxu0 0.0
  %2757 = vmatpush1.msra.mxu0 0.0
  %2758 = vmatprep.subr.mxu0 0.0
  %2759 = vmatpush1.msra.mxu0 0.0
  %2760 = vmatprep.subr.mxu0 0.0
  %2761 = vmatpush1.msra.mxu0 0.0
  %2762 = vmatprep.subr.mxu0 0.0
  %2763 = vmatpush1.msra.mxu0 0.0
  %2764 = vmatprep.mubr.f32.mxu0 0.0
  %2765 = vmatmul.mubr.f32.gmra.mrb[0].mxu0 %v2695
  %v2766 = vpop.f32.mrb[0].mxu0
  %v2767 = vadd.f32 0.0, %v2766
  %v2768 = vpop.f32.mrb[0].mxu0
  %2769 = vdwg.mxu0
  %s2770 = scalar_lea.vmem %s9, 32
  %v2771 = vld [vmem:[%s2770] sm:$0xff]
  %v2773 = vsel %vm401, %v2767, 0
  %2775 = vmatprep.subr.mxu0 0.0
  %2776 = vmatpush1.msra.mxu0 %v2771
  %2777 = vmatprep.subr.mxu0 0.0
  %2778 = vmatpush1.msra.mxu0 0.0
  %2779 = vmatprep.subr.mxu0 0.0
  %2780 = vmatpush1.msra.mxu0 0.0
  %2781 = vmatprep.subr.mxu0 0.0
  %2782 = vmatpush1.msra.mxu0 0.0
  %2783 = vmatprep.subr.mxu0 0.0
  %2784 = vmatpush1.msra.mxu0 0.0
  %2785 = vmatprep.subr.mxu0 0.0
  %2786 = vmatpush1.msra.mxu0 0.0
  %2787 = vmatprep.subr.mxu0 0.0
  %2788 = vmatpush1.msra.mxu0 0.0
  %2789 = vmatprep.subr.mxu0 0.0
  %2790 = vmatpush1.msra.mxu0 0.0
  %2791 = vmatprep.subr.mxu0 0.0
  %2792 = vmatpush1.msra.mxu0 0.0
  %2793 = vmatprep.subr.mxu0 0.0
  %2794 = vmatpush1.msra.mxu0 0.0
  %2795 = vmatprep.subr.mxu0 0.0
  %2796 = vmatpush1.msra.mxu0 0.0
  %2797 = vmatprep.subr.mxu0 0.0
  %2798 = vmatpush1.msra.mxu0 0.0
  %2799 = vmatprep.subr.mxu0 0.0
  %2800 = vmatpush1.msra.mxu0 0.0
  %2801 = vmatprep.subr.mxu0 0.0
  %2802 = vmatpush1.msra.mxu0 0.0
  %2803 = vmatprep.subr.mxu0 0.0
  %2804 = vmatpush1.msra.mxu0 0.0
  %2805 = vmatprep.subr.mxu0 0.0
  %2806 = vmatpush1.msra.mxu0 0.0
  %2807 = vmatprep.subr.mxu0 0.0
  %2808 = vmatpush1.msra.mxu0 0.0
  %2809 = vmatprep.subr.mxu0 0.0
  %2810 = vmatpush1.msra.mxu0 0.0
  %2811 = vmatprep.subr.mxu0 0.0
  %2812 = vmatpush1.msra.mxu0 0.0
  %2813 = vmatprep.subr.mxu0 0.0
  %2814 = vmatpush1.msra.mxu0 0.0
  %2815 = vmatprep.subr.mxu0 0.0
  %2816 = vmatpush1.msra.mxu0 0.0
  %2817 = vmatprep.subr.mxu0 0.0
  %2818 = vmatpush1.msra.mxu0 0.0
  %2819 = vmatprep.subr.mxu0 0.0
  %2820 = vmatpush1.msra.mxu0 0.0
  %2821 = vmatprep.subr.mxu0 0.0
  %2822 = vmatpush1.msra.mxu0 0.0
  %2823 = vmatprep.subr.mxu0 0.0
  %2824 = vmatpush1.msra.mxu0 0.0
  %2825 = vmatprep.subr.mxu0 0.0
  %2826 = vmatpush1.msra.mxu0 0.0
  %2827 = vmatprep.subr.mxu0 0.0
  %2828 = vmatpush1.msra.mxu0 0.0
  %2829 = vmatprep.subr.mxu0 0.0
  %2830 = vmatpush1.msra.mxu0 0.0
  %2831 = vmatprep.subr.mxu0 0.0
  %2832 = vmatpush1.msra.mxu0 0.0
  %2833 = vmatprep.subr.mxu0 0.0
  %2834 = vmatpush1.msra.mxu0 0.0
  %2835 = vmatprep.subr.mxu0 0.0
  %2836 = vmatpush1.msra.mxu0 0.0
  %2837 = vmatprep.subr.mxu0 0.0
  %2838 = vmatpush1.msra.mxu0 0.0
  %2839 = vmatprep.mubr.f32.mxu0 0.0
  %2840 = vmatmul.mubr.f32.gmra.mrb[0].mxu0 %v2773
  %v2841 = vpop.f32.mrb[0].mxu0
  %v2842 = vadd.f32 0.0, %v2841
  %v2843 = vpop.f32.mrb[0].mxu0
  %2844 = vdwg.mxu0
  %v2846 = vlaneseq
  %v2847 = vshrl.u32 %v2846, 7
  %v2848 = vsub.s32 0, %v2847
  %v2849 = vrot.slane %v2353, %v2848
  %v2851 = vadd.f32 %v2849, %v2842
  %s2852 = scalar_lea.vmem %s3, 160
  %v2853 = vld [vmem:[%s2852] sm:$0xff]
  %v2854 = vld [vmem:[%s2852 + $0x8] sm:$0xff]
  %v2855 = vld [vmem:[%s2852 + $0x10] sm:$0xff]
  %v2856 = vld [vmem:[%s2852 + $0x18] sm:$0xff]
  %s2857 = scalar_lea.vmem %s4, 5
  %v2858 = vld [vmem:[%s2857] sm:$0x1]
  %v2860 = vlaneseq
  %v2861 = vshrl.u32 %v2860, 7
  %v2862 = vsub.s32 0, %v2861
  %v2863 = vrot.slane %v2858, %v2862
  %2865 = vmatprep.subr.mxu0 0.0
  %2866 = vmatpush1.msra.mxu0 %v2853
  %2867 = vmatprep.subr.mxu0 0.0
  %2868 = vmatpush1.msra.mxu0 %v2854
  %2869 = vmatprep.subr.mxu0 0.0
  %2870 = vmatpush1.msra.mxu0 %v2855
  %2871 = vmatprep.subr.mxu0 0.0
  %2872 = vmatpush1.msra.mxu0 %v2856
  %2873 = vmatprep.subr.mxu0 0.0
  %2874 = vmatpush1.msra.mxu0 0.0
  %2875 = vmatprep.subr.mxu0 0.0
  %2876 = vmatpush1.msra.mxu0 0.0
  %2877 = vmatprep.subr.mxu0 0.0
  %2878 = vmatpush1.msra.mxu0 0.0
  %2879 = vmatprep.subr.mxu0 0.0
  %2880 = vmatpush1.msra.mxu0 0.0
  %2881 = vmatprep.subr.mxu0 0.0
  %2882 = vmatpush1.msra.mxu0 0.0
  %2883 = vmatprep.subr.mxu0 0.0
  %2884 = vmatpush1.msra.mxu0 0.0
  %2885 = vmatprep.subr.mxu0 0.0
  %2886 = vmatpush1.msra.mxu0 0.0
  %2887 = vmatprep.subr.mxu0 0.0
  %2888 = vmatpush1.msra.mxu0 0.0
  %2889 = vmatprep.subr.mxu0 0.0
  %2890 = vmatpush1.msra.mxu0 0.0
  %2891 = vmatprep.subr.mxu0 0.0
  %2892 = vmatpush1.msra.mxu0 0.0
  %2893 = vmatprep.subr.mxu0 0.0
  %2894 = vmatpush1.msra.mxu0 0.0
  %2895 = vmatprep.subr.mxu0 0.0
  %2896 = vmatpush1.msra.mxu0 0.0
  %2897 = vmatprep.subr.mxu0 0.0
  %2898 = vmatpush1.msra.mxu0 0.0
  %2899 = vmatprep.subr.mxu0 0.0
  %2900 = vmatpush1.msra.mxu0 0.0
  %2901 = vmatprep.subr.mxu0 0.0
  %2902 = vmatpush1.msra.mxu0 0.0
  %2903 = vmatprep.subr.mxu0 0.0
  %2904 = vmatpush1.msra.mxu0 0.0
  %2905 = vmatprep.subr.mxu0 0.0
  %2906 = vmatpush1.msra.mxu0 0.0
  %2907 = vmatprep.subr.mxu0 0.0
  %2908 = vmatpush1.msra.mxu0 0.0
  %2909 = vmatprep.subr.mxu0 0.0
  %2910 = vmatpush1.msra.mxu0 0.0
  %2911 = vmatprep.subr.mxu0 0.0
  %2912 = vmatpush1.msra.mxu0 0.0
  %2913 = vmatprep.subr.mxu0 0.0
  %2914 = vmatpush1.msra.mxu0 0.0
  %2915 = vmatprep.subr.mxu0 0.0
  %2916 = vmatpush1.msra.mxu0 0.0
  %2917 = vmatprep.subr.mxu0 0.0
  %2918 = vmatpush1.msra.mxu0 0.0
  %2919 = vmatprep.subr.mxu0 0.0
  %2920 = vmatpush1.msra.mxu0 0.0
  %2921 = vmatprep.subr.mxu0 0.0
  %2922 = vmatpush1.msra.mxu0 0.0
  %2923 = vmatprep.subr.mxu0 0.0
  %2924 = vmatpush1.msra.mxu0 0.0
  %2925 = vmatprep.subr.mxu0 0.0
  %2926 = vmatpush1.msra.mxu0 0.0
  %2927 = vmatprep.subr.mxu0 0.0
  %2928 = vmatpush1.msra.mxu0 0.0
  %2929 = vmatprep.mubr.f32.mxu0 0.0
  %2930 = vmatmul.mubr.f32.gmra.mrb[0].mxu0 %v2368
  %v2931 = vpop.f32.mrb[0].mxu0
  %v2932 = vadd.f32 %v2863, %v2931
  %v2933 = vpop.f32.mrb[0].mxu0
  %2934 = vdwg.mxu0
  %v2935 = vmul.f32 %v2932, 0.35355338
  %s2936 = scalar_lea.vmem %s5, 160
  %v2937 = vld [vmem:[%s2936] sm:$0xff]
  %v2938 = vld [vmem:[%s2936 + $0x8] sm:$0xff]
  %v2939 = vld [vmem:[%s2936 + $0x10] sm:$0xff]
  %v2940 = vld [vmem:[%s2936 + $0x18] sm:$0xff]
  %s2941 = scalar_lea.vmem %s6, 5
  %v2942 = vld [vmem:[%s2941] sm:$0x1]
  %v2944 = vlaneseq
  %v2945 = vshrl.u32 %v2944, 7
  %v2946 = vsub.s32 0, %v2945
  %v2947 = vrot.slane %v2942, %v2946
  %2949 = vmatprep.subr.mxu0 0.0
  %2950 = vmatpush1.msra.mxu0 %v2937
  %2951 = vmatprep.subr.mxu0 0.0
  %2952 = vmatpush1.msra.mxu0 %v2938
  %2953 = vmatprep.subr.mxu0 0.0
  %2954 = vmatpush1.msra.mxu0 %v2939
  %2955 = vmatprep.subr.mxu0 0.0
  %2956 = vmatpush1.msra.mxu0 %v2940
  %2957 = vmatprep.subr.mxu0 0.0
  %2958 = vmatpush1.msra.mxu0 0.0
  %2959 = vmatprep.subr.mxu0 0.0
  %2960 = vmatpush1.msra.mxu0 0.0
  %2961 = vmatprep.subr.mxu0 0.0
  %2962 = vmatpush1.msra.mxu0 0.0
  %2963 = vmatprep.subr.mxu0 0.0
  %2964 = vmatpush1.msra.mxu0 0.0
  %2965 = vmatprep.subr.mxu0 0.0
  %2966 = vmatpush1.msra.mxu0 0.0
  %2967 = vmatprep.subr.mxu0 0.0
  %2968 = vmatpush1.msra.mxu0 0.0
  %2969 = vmatprep.subr.mxu0 0.0
  %2970 = vmatpush1.msra.mxu0 0.0
  %2971 = vmatprep.subr.mxu0 0.0
  %2972 = vmatpush1.msra.mxu0 0.0
  %2973 = vmatprep.subr.mxu0 0.0
  %2974 = vmatpush1.msra.mxu0 0.0
  %2975 = vmatprep.subr.mxu0 0.0
  %2976 = vmatpush1.msra.mxu0 0.0
  %2977 = vmatprep.subr.mxu0 0.0
  %2978 = vmatpush1.msra.mxu0 0.0
  %2979 = vmatprep.subr.mxu0 0.0
  %2980 = vmatpush1.msra.mxu0 0.0
  %2981 = vmatprep.subr.mxu0 0.0
  %2982 = vmatpush1.msra.mxu0 0.0
  %2983 = vmatprep.subr.mxu0 0.0
  %2984 = vmatpush1.msra.mxu0 0.0
  %2985 = vmatprep.subr.mxu0 0.0
  %2986 = vmatpush1.msra.mxu0 0.0
  %2987 = vmatprep.subr.mxu0 0.0
  %2988 = vmatpush1.msra.mxu0 0.0
  %2989 = vmatprep.subr.mxu0 0.0
  %2990 = vmatpush1.msra.mxu0 0.0
  %2991 = vmatprep.subr.mxu0 0.0
  %2992 = vmatpush1.msra.mxu0 0.0
  %2993 = vmatprep.subr.mxu0 0.0
  %2994 = vmatpush1.msra.mxu0 0.0
  %2995 = vmatprep.subr.mxu0 0.0
  %2996 = vmatpush1.msra.mxu0 0.0
  %2997 = vmatprep.subr.mxu0 0.0
  %2998 = vmatpush1.msra.mxu0 0.0
  %2999 = vmatprep.subr.mxu0 0.0
  %3000 = vmatpush1.msra.mxu0 0.0
  %3001 = vmatprep.subr.mxu0 0.0
  %3002 = vmatpush1.msra.mxu0 0.0
  %3003 = vmatprep.subr.mxu0 0.0
  %3004 = vmatpush1.msra.mxu0 0.0
  %3005 = vmatprep.subr.mxu0 0.0
  %3006 = vmatpush1.msra.mxu0 0.0
  %3007 = vmatprep.subr.mxu0 0.0
  %3008 = vmatpush1.msra.mxu0 0.0
  %3009 = vmatprep.subr.mxu0 0.0
  %3010 = vmatpush1.msra.mxu0 0.0
  %3011 = vmatprep.subr.mxu0 0.0
  %3012 = vmatpush1.msra.mxu0 0.0
  %3013 = vmatprep.mubr.f32.mxu0 0.0
  %3014 = vmatmul.mubr.f32.gmra.mrb[0].mxu0 %v2368
  %v3015 = vpop.f32.mrb[0].mxu0
  %v3016 = vadd.f32 %v2947, %v3015
  %v3017 = vpop.f32.mrb[0].mxu0
  %3018 = vdwg.mxu0
  %s3019 = scalar_lea.vmem %s7, 160
  %v3020 = vld [vmem:[%s3019] sm:$0xff]
  %v3021 = vld [vmem:[%s3019 + $0x8] sm:$0xff]
  %v3022 = vld [vmem:[%s3019 + $0x10] sm:$0xff]
  %v3023 = vld [vmem:[%s3019 + $0x18] sm:$0xff]
  %s3024 = scalar_lea.vmem %s8, 5
  %v3025 = vld [vmem:[%s3024] sm:$0x1]
  %v3027 = vlaneseq
  %v3028 = vshrl.u32 %v3027, 7
  %v3029 = vsub.s32 0, %v3028
  %v3030 = vrot.slane %v3025, %v3029
  %3032 = vmatprep.subr.mxu0 0.0
  %3033 = vmatpush1.msra.mxu0 %v3020
  %3034 = vmatprep.subr.mxu0 0.0
  %3035 = vmatpush1.msra.mxu0 %v3021
  %3036 = vmatprep.subr.mxu0 0.0
  %3037 = vmatpush1.msra.mxu0 %v3022
  %3038 = vmatprep.subr.mxu0 0.0
  %3039 = vmatpush1.msra.mxu0 %v3023
  %3040 = vmatprep.subr.mxu0 0.0
  %3041 = vmatpush1.msra.mxu0 0.0
  %3042 = vmatprep.subr.mxu0 0.0
  %3043 = vmatpush1.msra.mxu0 0.0
  %3044 = vmatprep.subr.mxu0 0.0
  %3045 = vmatpush1.msra.mxu0 0.0
  %3046 = vmatprep.subr.mxu0 0.0
  %3047 = vmatpush1.msra.mxu0 0.0
  %3048 = vmatprep.subr.mxu0 0.0
  %3049 = vmatpush1.msra.mxu0 0.0
  %3050 = vmatprep.subr.mxu0 0.0
  %3051 = vmatpush1.msra.mxu0 0.0
  %3052 = vmatprep.subr.mxu0 0.0
  %3053 = vmatpush1.msra.mxu0 0.0
  %3054 = vmatprep.subr.mxu0 0.0
  %3055 = vmatpush1.msra.mxu0 0.0
  %3056 = vmatprep.subr.mxu0 0.0
  %3057 = vmatpush1.msra.mxu0 0.0
  %3058 = vmatprep.subr.mxu0 0.0
  %3059 = vmatpush1.msra.mxu0 0.0
  %3060 = vmatprep.subr.mxu0 0.0
  %3061 = vmatpush1.msra.mxu0 0.0
  %3062 = vmatprep.subr.mxu0 0.0
  %3063 = vmatpush1.msra.mxu0 0.0
  %3064 = vmatprep.subr.mxu0 0.0
  %3065 = vmatpush1.msra.mxu0 0.0
  %3066 = vmatprep.subr.mxu0 0.0
  %3067 = vmatpush1.msra.mxu0 0.0
  %3068 = vmatprep.subr.mxu0 0.0
  %3069 = vmatpush1.msra.mxu0 0.0
  %3070 = vmatprep.subr.mxu0 0.0
  %3071 = vmatpush1.msra.mxu0 0.0
  %3072 = vmatprep.subr.mxu0 0.0
  %3073 = vmatpush1.msra.mxu0 0.0
  %3074 = vmatprep.subr.mxu0 0.0
  %3075 = vmatpush1.msra.mxu0 0.0
  %3076 = vmatprep.subr.mxu0 0.0
  %3077 = vmatpush1.msra.mxu0 0.0
  %3078 = vmatprep.subr.mxu0 0.0
  %3079 = vmatpush1.msra.mxu0 0.0
  %3080 = vmatprep.subr.mxu0 0.0
  %3081 = vmatpush1.msra.mxu0 0.0
  %3082 = vmatprep.subr.mxu0 0.0
  %3083 = vmatpush1.msra.mxu0 0.0
  %3084 = vmatprep.subr.mxu0 0.0
  %3085 = vmatpush1.msra.mxu0 0.0
  %3086 = vmatprep.subr.mxu0 0.0
  %3087 = vmatpush1.msra.mxu0 0.0
  %3088 = vmatprep.subr.mxu0 0.0
  %3089 = vmatpush1.msra.mxu0 0.0
  %3090 = vmatprep.subr.mxu0 0.0
  %3091 = vmatpush1.msra.mxu0 0.0
  %3092 = vmatprep.subr.mxu0 0.0
  %3093 = vmatpush1.msra.mxu0 0.0
  %3094 = vmatprep.subr.mxu0 0.0
  %3095 = vmatpush1.msra.mxu0 0.0
  %3096 = vmatprep.mubr.f32.mxu0 0.0
  %3097 = vmatmul.mubr.f32.gmra.mrb[0].mxu0 %v2368
  %v3098 = vpop.f32.mrb[0].mxu0
  %v3099 = vadd.f32 %v3030, %v3098
  %v3100 = vpop.f32.mrb[0].mxu0
  %3101 = vdwg.mxu0
  %v3103 = vsel %vm401, %v2935, 0
  %v3106 = vsel %vm401, %v3016, 0
  %3108 = vmatprep.subr.mxu0 0.0
  %3109 = vmatpush1.xpose.msra.mxu0 %v3106
  %3110 = vmatprep.subr.mxu0 0.0
  %3111 = vmatpush1.xpose.msra.mxu0 0.0
  %3112 = vmatprep.subr.mxu0 0.0
  %3113 = vmatpush1.xpose.msra.mxu0 0.0
  %3114 = vmatprep.subr.mxu0 0.0
  %3115 = vmatpush1.xpose.msra.mxu0 0.0
  %3116 = vmatprep.subr.mxu0 0.0
  %3117 = vmatpush1.xpose.msra.mxu0 0.0
  %3118 = vmatprep.subr.mxu0 0.0
  %3119 = vmatpush1.xpose.msra.mxu0 0.0
  %3120 = vmatprep.subr.mxu0 0.0
  %3121 = vmatpush1.xpose.msra.mxu0 0.0
  %3122 = vmatprep.subr.mxu0 0.0
  %3123 = vmatpush1.xpose.msra.mxu0 0.0
  %3124 = vmatprep.subr.mxu0 0.0
  %3125 = vmatpush1.xpose.msra.mxu0 0.0
  %3126 = vmatprep.subr.mxu0 0.0
  %3127 = vmatpush1.xpose.msra.mxu0 0.0
  %3128 = vmatprep.subr.mxu0 0.0
  %3129 = vmatpush1.xpose.msra.mxu0 0.0
  %3130 = vmatprep.subr.mxu0 0.0
  %3131 = vmatpush1.xpose.msra.mxu0 0.0
  %3132 = vmatprep.subr.mxu0 0.0
  %3133 = vmatpush1.xpose.msra.mxu0 0.0
  %3134 = vmatprep.subr.mxu0 0.0
  %3135 = vmatpush1.xpose.msra.mxu0 0.0
  %3136 = vmatprep.subr.mxu0 0.0
  %3137 = vmatpush1.xpose.msra.mxu0 0.0
  %3138 = vmatprep.subr.mxu0 0.0
  %3139 = vmatpush1.xpose.msra.mxu0 0.0
  %3140 = vmatprep.subr.mxu0 0.0
  %3141 = vmatpush1.xpose.msra.mxu0 0.0
  %3142 = vmatprep.subr.mxu0 0.0
  %3143 = vmatpush1.xpose.msra.mxu0 0.0
  %3144 = vmatprep.subr.mxu0 0.0
  %3145 = vmatpush1.xpose.msra.mxu0 0.0
  %3146 = vmatprep.subr.mxu0 0.0
  %3147 = vmatpush1.xpose.msra.mxu0 0.0
  %3148 = vmatprep.subr.mxu0 0.0
  %3149 = vmatpush1.xpose.msra.mxu0 0.0
  %3150 = vmatprep.subr.mxu0 0.0
  %3151 = vmatpush1.xpose.msra.mxu0 0.0
  %3152 = vmatprep.subr.mxu0 0.0
  %3153 = vmatpush1.xpose.msra.mxu0 0.0
  %3154 = vmatprep.subr.mxu0 0.0
  %3155 = vmatpush1.xpose.msra.mxu0 0.0
  %3156 = vmatprep.subr.mxu0 0.0
  %3157 = vmatpush1.xpose.msra.mxu0 0.0
  %3158 = vmatprep.subr.mxu0 0.0
  %3159 = vmatpush1.xpose.msra.mxu0 0.0
  %3160 = vmatprep.subr.mxu0 0.0
  %3161 = vmatpush1.xpose.msra.mxu0 0.0
  %3162 = vmatprep.subr.mxu0 0.0
  %3163 = vmatpush1.xpose.msra.mxu0 0.0
  %3164 = vmatprep.subr.mxu0 0.0
  %3165 = vmatpush1.xpose.msra.mxu0 0.0
  %3166 = vmatprep.subr.mxu0 0.0
  %3167 = vmatpush1.xpose.msra.mxu0 0.0
  %3168 = vmatprep.subr.mxu0 0.0
  %3169 = vmatpush1.xpose.msra.mxu0 0.0
  %3170 = vmatprep.subr.mxu0 0.0
  %3171 = vmatpush1.xpose.msra.mxu0 0.0
  %3172 = vmatprep.mubr.f32.mxu0 0.0
  %3173 = vmatmul.mubr.f32.gmra.mrb[0].mxu0 %v3103
  %v3174 = vpop.f32.mrb[0].mxu0
  %v3175 = vadd.f32 0.0, %v3174
  %v3176 = vpop.f32.mrb[0].mxu0
  %3177 = vdwg.mxu0
  %v3178 = vsel %vm478, %v3175, -inf
  %3179 = vmax.xlane.f32.xlu0 %v3178
  %v3180 = vpop.xlane.xlu0 %3179
  %v3181 = vsub.f32 %v3175, %v3180
  %v3182 = vmul.f32 %v3181, 1.442695
  %v3183 = vpow.pop %v3182
  %v3184 = vsel %vm478, %v3183, 0.0
  %3185 = vadd.xlane.f32.xlu0 %v3184
  %v3186 = vpop.xlane.xlu0 %3185
  %v3187 = vrcp.pop %v3186
  %v3188 = vmul.f32 %v3183, %v3187
  %v3190 = vsel %vm490, %v3188, 0
  %v3193 = vsel %vm494, %v3099, 0
  %3195 = vmatprep.subr.mxu0 0.0
  %3196 = vmatpush1.msra.mxu0 %v3193
  %3197 = vmatprep.subr.mxu0 0.0
  %3198 = vmatpush1.msra.mxu0 0.0
  %3199 = vmatprep.subr.mxu0 0.0
  %3200 = vmatpush1.msra.mxu0 0.0
  %3201 = vmatprep.subr.mxu0 0.0
  %3202 = vmatpush1.msra.mxu0 0.0
  %3203 = vmatprep.subr.mxu0 0.0
  %3204 = vmatpush1.msra.mxu0 0.0
  %3205 = vmatprep.subr.mxu0 0.0
  %3206 = vmatpush1.msra.mxu0 0.0
  %3207 = vmatprep.subr.mxu0 0.0
  %3208 = vmatpush1.msra.mxu0 0.0
  %3209 = vmatprep.subr.mxu0 0.0
  %3210 = vmatpush1.msra.mxu0 0.0
  %3211 = vmatprep.subr.mxu0 0.0
  %3212 = vmatpush1.msra.mxu0 0.0
  %3213 = vmatprep.subr.mxu0 0.0
  %3214 = vmatpush1.msra.mxu0 0.0
  %3215 = vmatprep.subr.mxu0 0.0
  %3216 = vmatpush1.msra.mxu0 0.0
  %3217 = vmatprep.subr.mxu0 0.0
  %3218 = vmatpush1.msra.mxu0 0.0
  %3219 = vmatprep.subr.mxu0 0.0
  %3220 = vmatpush1.msra.mxu0 0.0
  %3221 = vmatprep.subr.mxu0 0.0
  %3222 = vmatpush1.msra.mxu0 0.0
  %3223 = vmatprep.subr.mxu0 0.0
  %3224 = vmatpush1.msra.mxu0 0.0
  %3225 = vmatprep.subr.mxu0 0.0
  %3226 = vmatpush1.msra.mxu0 0.0
  %3227 = vmatprep.subr.mxu0 0.0
  %3228 = vmatpush1.msra.mxu0 0.0
  %3229 = vmatprep.subr.mxu0 0.0
  %3230 = vmatpush1.msra.mxu0 0.0
  %3231 = vmatprep.subr.mxu0 0.0
  %3232 = vmatpush1.msra.mxu0 0.0
  %3233 = vmatprep.subr.mxu0 0.0
  %3234 = vmatpush1.msra.mxu0 0.0
  %3235 = vmatprep.subr.mxu0 0.0
  %3236 = vmatpush1.msra.mxu0 0.0
  %3237 = vmatprep.subr.mxu0 0.0
  %3238 = vmatpush1.msra.mxu0 0.0
  %3239 = vmatprep.subr.mxu0 0.0
  %3240 = vmatpush1.msra.mxu0 0.0
  %3241 = vmatprep.subr.mxu0 0.0
  %3242 = vmatpush1.msra.mxu0 0.0
  %3243 = vmatprep.subr.mxu0 0.0
  %3244 = vmatpush1.msra.mxu0 0.0
  %3245 = vmatprep.subr.mxu0 0.0
  %3246 = vmatpush1.msra.mxu0 0.0
  %3247 = vmatprep.subr.mxu0 0.0
  %3248 = vmatpush1.msra.mxu0 0.0
  %3249 = vmatprep.subr.mxu0 0.0
  %3250 = vmatpush1.msra.mxu0 0.0
  %3251 = vmatprep.subr.mxu0 0.0
  %3252 = vmatpush1.msra.mxu0 0.0
  %3253 = vmatprep.subr.mxu0 0.0
  %3254 = vmatpush1.msra.mxu0 0.0
  %3255 = vmatprep.subr.mxu0 0.0
  %3256 = vmatpush1.msra.mxu0 0.0
  %3257 = vmatprep.subr.mxu0 0.0
  %3258 = vmatpush1.msra.mxu0 0.0
  %3259 = vmatprep.mubr.f32.mxu0 0.0
  %3260 = vmatmul.mubr.f32.gmra.mrb[0].mxu0 %v3190
  %v3261 = vpop.f32.mrb[0].mxu0
  %v3262 = vadd.f32 0.0, %v3261
  %v3263 = vpop.f32.mrb[0].mxu0
  %3264 = vdwg.mxu0
  %s3265 = scalar_lea.vmem %s9, 40
  %v3266 = vld [vmem:[%s3265] sm:$0xff]
  %v3268 = vsel %vm401, %v3262, 0
  %3270 = vmatprep.subr.mxu0 0.0
  %3271 = vmatpush1.msra.mxu0 %v3266
  %3272 = vmatprep.subr.mxu0 0.0
  %3273 = vmatpush1.msra.mxu0 0.0
  %3274 = vmatprep.subr.mxu0 0.0
  %3275 = vmatpush1.msra.mxu0 0.0
  %3276 = vmatprep.subr.mxu0 0.0
  %3277 = vmatpush1.msra.mxu0 0.0
  %3278 = vmatprep.subr.mxu0 0.0
  %3279 = vmatpush1.msra.mxu0 0.0
  %3280 = vmatprep.subr.mxu0 0.0
  %3281 = vmatpush1.msra.mxu0 0.0
  %3282 = vmatprep.subr.mxu0 0.0
  %3283 = vmatpush1.msra.mxu0 0.0
  %3284 = vmatprep.subr.mxu0 0.0
  %3285 = vmatpush1.msra.mxu0 0.0
  %3286 = vmatprep.subr.mxu0 0.0
  %3287 = vmatpush1.msra.mxu0 0.0
  %3288 = vmatprep.subr.mxu0 0.0
  %3289 = vmatpush1.msra.mxu0 0.0
  %3290 = vmatprep.subr.mxu0 0.0
  %3291 = vmatpush1.msra.mxu0 0.0
  %3292 = vmatprep.subr.mxu0 0.0
  %3293 = vmatpush1.msra.mxu0 0.0
  %3294 = vmatprep.subr.mxu0 0.0
  %3295 = vmatpush1.msra.mxu0 0.0
  %3296 = vmatprep.subr.mxu0 0.0
  %3297 = vmatpush1.msra.mxu0 0.0
  %3298 = vmatprep.subr.mxu0 0.0
  %3299 = vmatpush1.msra.mxu0 0.0
  %3300 = vmatprep.subr.mxu0 0.0
  %3301 = vmatpush1.msra.mxu0 0.0
  %3302 = vmatprep.subr.mxu0 0.0
  %3303 = vmatpush1.msra.mxu0 0.0
  %3304 = vmatprep.subr.mxu0 0.0
  %3305 = vmatpush1.msra.mxu0 0.0
  %3306 = vmatprep.subr.mxu0 0.0
  %3307 = vmatpush1.msra.mxu0 0.0
  %3308 = vmatprep.subr.mxu0 0.0
  %3309 = vmatpush1.msra.mxu0 0.0
  %3310 = vmatprep.subr.mxu0 0.0
  %3311 = vmatpush1.msra.mxu0 0.0
  %3312 = vmatprep.subr.mxu0 0.0
  %3313 = vmatpush1.msra.mxu0 0.0
  %3314 = vmatprep.subr.mxu0 0.0
  %3315 = vmatpush1.msra.mxu0 0.0
  %3316 = vmatprep.subr.mxu0 0.0
  %3317 = vmatpush1.msra.mxu0 0.0
  %3318 = vmatprep.subr.mxu0 0.0
  %3319 = vmatpush1.msra.mxu0 0.0
  %3320 = vmatprep.subr.mxu0 0.0
  %3321 = vmatpush1.msra.mxu0 0.0
  %3322 = vmatprep.subr.mxu0 0.0
  %3323 = vmatpush1.msra.mxu0 0.0
  %3324 = vmatprep.subr.mxu0 0.0
  %3325 = vmatpush1.msra.mxu0 0.0
  %3326 = vmatprep.subr.mxu0 0.0
  %3327 = vmatpush1.msra.mxu0 0.0
  %3328 = vmatprep.subr.mxu0 0.0
  %3329 = vmatpush1.msra.mxu0 0.0
  %3330 = vmatprep.subr.mxu0 0.0
  %3331 = vmatpush1.msra.mxu0 0.0
  %3332 = vmatprep.subr.mxu0 0.0
  %3333 = vmatpush1.msra.mxu0 0.0
  %3334 = vmatprep.mubr.f32.mxu0 0.0
  %3335 = vmatmul.mubr.f32.gmra.mrb[0].mxu0 %v3268
  %v3336 = vpop.f32.mrb[0].mxu0
  %v3337 = vadd.f32 0.0, %v3336
  %v3338 = vpop.f32.mrb[0].mxu0
  %3339 = vdwg.mxu0
  %v3340 = vadd.f32 %v2851, %v3337
  %s3341 = scalar_lea.vmem %s3, 192
  %v3342 = vld [vmem:[%s3341] sm:$0xff]
  %v3343 = vld [vmem:[%s3341 + $0x8] sm:$0xff]
  %v3344 = vld [vmem:[%s3341 + $0x10] sm:$0xff]
  %v3345 = vld [vmem:[%s3341 + $0x18] sm:$0xff]
  %s3346 = scalar_lea.vmem %s4, 6
  %v3347 = vld [vmem:[%s3346] sm:$0x1]
  %v3349 = vlaneseq
  %v3350 = vshrl.u32 %v3349, 7
  %v3351 = vsub.s32 0, %v3350
  %v3352 = vrot.slane %v3347, %v3351
  %3354 = vmatprep.subr.mxu0 0.0
  %3355 = vmatpush1.msra.mxu0 %v3342
  %3356 = vmatprep.subr.mxu0 0.0
  %3357 = vmatpush1.msra.mxu0 %v3343
  %3358 = vmatprep.subr.mxu0 0.0
  %3359 = vmatpush1.msra.mxu0 %v3344
  %3360 = vmatprep.subr.mxu0 0.0
  %3361 = vmatpush1.msra.mxu0 %v3345
  %3362 = vmatprep.subr.mxu0 0.0
  %3363 = vmatpush1.msra.mxu0 0.0
  %3364 = vmatprep.subr.mxu0 0.0
  %3365 = vmatpush1.msra.mxu0 0.0
  %3366 = vmatprep.subr.mxu0 0.0
  %3367 = vmatpush1.msra.mxu0 0.0
  %3368 = vmatprep.subr.mxu0 0.0
  %3369 = vmatpush1.msra.mxu0 0.0
  %3370 = vmatprep.subr.mxu0 0.0
  %3371 = vmatpush1.msra.mxu0 0.0
  %3372 = vmatprep.subr.mxu0 0.0
  %3373 = vmatpush1.msra.mxu0 0.0
  %3374 = vmatprep.subr.mxu0 0.0
  %3375 = vmatpush1.msra.mxu0 0.0
  %3376 = vmatprep.subr.mxu0 0.0
  %3377 = vmatpush1.msra.mxu0 0.0
  %3378 = vmatprep.subr.mxu0 0.0
  %3379 = vmatpush1.msra.mxu0 0.0
  %3380 = vmatprep.subr.mxu0 0.0
  %3381 = vmatpush1.msra.mxu0 0.0
  %3382 = vmatprep.subr.mxu0 0.0
  %3383 = vmatpush1.msra.mxu0 0.0
  %3384 = vmatprep.subr.mxu0 0.0
  %3385 = vmatpush1.msra.mxu0 0.0
  %3386 = vmatprep.subr.mxu0 0.0
  %3387 = vmatpush1.msra.mxu0 0.0
  %3388 = vmatprep.subr.mxu0 0.0
  %3389 = vmatpush1.msra.mxu0 0.0
  %3390 = vmatprep.subr.mxu0 0.0
  %3391 = vmatpush1.msra.mxu0 0.0
  %3392 = vmatprep.subr.mxu0 0.0
  %3393 = vmatpush1.msra.mxu0 0.0
  %3394 = vmatprep.subr.mxu0 0.0
  %3395 = vmatpush1.msra.mxu0 0.0
  %3396 = vmatprep.subr.mxu0 0.0
  %3397 = vmatpush1.msra.mxu0 0.0
  %3398 = vmatprep.subr.mxu0 0.0
  %3399 = vmatpush1.msra.mxu0 0.0
  %3400 = vmatprep.subr.mxu0 0.0
  %3401 = vmatpush1.msra.mxu0 0.0
  %3402 = vmatprep.subr.mxu0 0.0
  %3403 = vmatpush1.msra.mxu0 0.0
  %3404 = vmatprep.subr.mxu0 0.0
  %3405 = vmatpush1.msra.mxu0 0.0
  %3406 = vmatprep.subr.mxu0 0.0
  %3407 = vmatpush1.msra.mxu0 0.0
  %3408 = vmatprep.subr.mxu0 0.0
  %3409 = vmatpush1.msra.mxu0 0.0
  %3410 = vmatprep.subr.mxu0 0.0
  %3411 = vmatpush1.msra.mxu0 0.0
  %3412 = vmatprep.subr.mxu0 0.0
  %3413 = vmatpush1.msra.mxu0 0.0
  %3414 = vmatprep.subr.mxu0 0.0
  %3415 = vmatpush1.msra.mxu0 0.0
  %3416 = vmatprep.subr.mxu0 0.0
  %3417 = vmatpush1.msra.mxu0 0.0
  %3418 = vmatprep.mubr.f32.mxu0 0.0
  %3419 = vmatmul.mubr.f32.gmra.mrb[0].mxu0 %v2368
  %v3420 = vpop.f32.mrb[0].mxu0
  %v3421 = vadd.f32 %v3352, %v3420
  %v3422 = vpop.f32.mrb[0].mxu0
  %3423 = vdwg.mxu0
  %v3424 = vmul.f32 %v3421, 0.35355338
  %s3425 = scalar_lea.vmem %s5, 192
  %v3426 = vld [vmem:[%s3425] sm:$0xff]
  %v3427 = vld [vmem:[%s3425 + $0x8] sm:$0xff]
  %v3428 = vld [vmem:[%s3425 + $0x10] sm:$0xff]
  %v3429 = vld [vmem:[%s3425 + $0x18] sm:$0xff]
  %s3430 = scalar_lea.vmem %s6, 6
  %v3431 = vld [vmem:[%s3430] sm:$0x1]
  %v3433 = vlaneseq
  %v3434 = vshrl.u32 %v3433, 7
  %v3435 = vsub.s32 0, %v3434
  %v3436 = vrot.slane %v3431, %v3435
  %3438 = vmatprep.subr.mxu0 0.0
  %3439 = vmatpush1.msra.mxu0 %v3426
  %3440 = vmatprep.subr.mxu0 0.0
  %3441 = vmatpush1.msra.mxu0 %v3427
  %3442 = vmatprep.subr.mxu0 0.0
  %3443 = vmatpush1.msra.mxu0 %v3428
  %3444 = vmatprep.subr.mxu0 0.0
  %3445 = vmatpush1.msra.mxu0 %v3429
  %3446 = vmatprep.subr.mxu0 0.0
  %3447 = vmatpush1.msra.mxu0 0.0
  %3448 = vmatprep.subr.mxu0 0.0
  %3449 = vmatpush1.msra.mxu0 0.0
  %3450 = vmatprep.subr.mxu0 0.0
  %3451 = vmatpush1.msra.mxu0 0.0
  %3452 = vmatprep.subr.mxu0 0.0
  %3453 = vmatpush1.msra.mxu0 0.0
  %3454 = vmatprep.subr.mxu0 0.0
  %3455 = vmatpush1.msra.mxu0 0.0
  %3456 = vmatprep.subr.mxu0 0.0
  %3457 = vmatpush1.msra.mxu0 0.0
  %3458 = vmatprep.subr.mxu0 0.0
  %3459 = vmatpush1.msra.mxu0 0.0
  %3460 = vmatprep.subr.mxu0 0.0
  %3461 = vmatpush1.msra.mxu0 0.0
  %3462 = vmatprep.subr.mxu0 0.0
  %3463 = vmatpush1.msra.mxu0 0.0
  %3464 = vmatprep.subr.mxu0 0.0
  %3465 = vmatpush1.msra.mxu0 0.0
  %3466 = vmatprep.subr.mxu0 0.0
  %3467 = vmatpush1.msra.mxu0 0.0
  %3468 = vmatprep.subr.mxu0 0.0
  %3469 = vmatpush1.msra.mxu0 0.0
  %3470 = vmatprep.subr.mxu0 0.0
  %3471 = vmatpush1.msra.mxu0 0.0
  %3472 = vmatprep.subr.mxu0 0.0
  %3473 = vmatpush1.msra.mxu0 0.0
  %3474 = vmatprep.subr.mxu0 0.0
  %3475 = vmatpush1.msra.mxu0 0.0
  %3476 = vmatprep.subr.mxu0 0.0
  %3477 = vmatpush1.msra.mxu0 0.0
  %3478 = vmatprep.subr.mxu0 0.0
  %3479 = vmatpush1.msra.mxu0 0.0
  %3480 = vmatprep.subr.mxu0 0.0
  %3481 = vmatpush1.msra.mxu0 0.0
  %3482 = vmatprep.subr.mxu0 0.0
  %3483 = vmatpush1.msra.mxu0 0.0
  %3484 = vmatprep.subr.mxu0 0.0
  %3485 = vmatpush1.msra.mxu0 0.0
  %3486 = vmatprep.subr.mxu0 0.0
  %3487 = vmatpush1.msra.mxu0 0.0
  %3488 = vmatprep.subr.mxu0 0.0
  %3489 = vmatpush1.msra.mxu0 0.0
  %3490 = vmatprep.subr.mxu0 0.0
  %3491 = vmatpush1.msra.mxu0 0.0
  %3492 = vmatprep.subr.mxu0 0.0
  %3493 = vmatpush1.msra.mxu0 0.0
  %3494 = vmatprep.subr.mxu0 0.0
  %3495 = vmatpush1.msra.mxu0 0.0
  %3496 = vmatprep.subr.mxu0 0.0
  %3497 = vmatpush1.msra.mxu0 0.0
  %3498 = vmatprep.subr.mxu0 0.0
  %3499 = vmatpush1.msra.mxu0 0.0
  %3500 = vmatprep.subr.mxu0 0.0
  %3501 = vmatpush1.msra.mxu0 0.0
  %3502 = vmatprep.mubr.f32.mxu0 0.0
  %3503 = vmatmul.mubr.f32.gmra.mrb[0].mxu0 %v2368
  %v3504 = vpop.f32.mrb[0].mxu0
  %v3505 = vadd.f32 %v3436, %v3504
  %v3506 = vpop.f32.mrb[0].mxu0
  %3507 = vdwg.mxu0
  %s3508 = scalar_lea.vmem %s7, 192
  %v3509 = vld [vmem:[%s3508] sm:$0xff]
  %v3510 = vld [vmem:[%s3508 + $0x8] sm:$0xff]
  %v3511 = vld [vmem:[%s3508 + $0x10] sm:$0xff]
  %v3512 = vld [vmem:[%s3508 + $0x18] sm:$0xff]
  %s3513 = scalar_lea.vmem %s8, 6
  %v3514 = vld [vmem:[%s3513] sm:$0x1]
  %v3516 = vlaneseq
  %v3517 = vshrl.u32 %v3516, 7
  %v3518 = vsub.s32 0, %v3517
  %v3519 = vrot.slane %v3514, %v3518
  %3521 = vmatprep.subr.mxu0 0.0
  %3522 = vmatpush1.msra.mxu0 %v3509
  %3523 = vmatprep.subr.mxu0 0.0
  %3524 = vmatpush1.msra.mxu0 %v3510
  %3525 = vmatprep.subr.mxu0 0.0
  %3526 = vmatpush1.msra.mxu0 %v3511
  %3527 = vmatprep.subr.mxu0 0.0
  %3528 = vmatpush1.msra.mxu0 %v3512
  %3529 = vmatprep.subr.mxu0 0.0
  %3530 = vmatpush1.msra.mxu0 0.0
  %3531 = vmatprep.subr.mxu0 0.0
  %3532 = vmatpush1.msra.mxu0 0.0
  %3533 = vmatprep.subr.mxu0 0.0
  %3534 = vmatpush1.msra.mxu0 0.0
  %3535 = vmatprep.subr.mxu0 0.0
  %3536 = vmatpush1.msra.mxu0 0.0
  %3537 = vmatprep.subr.mxu0 0.0
  %3538 = vmatpush1.msra.mxu0 0.0
  %3539 = vmatprep.subr.mxu0 0.0
  %3540 = vmatpush1.msra.mxu0 0.0
  %3541 = vmatprep.subr.mxu0 0.0
  %3542 = vmatpush1.msra.mxu0 0.0
  %3543 = vmatprep.subr.mxu0 0.0
  %3544 = vmatpush1.msra.mxu0 0.0
  %3545 = vmatprep.subr.mxu0 0.0
  %3546 = vmatpush1.msra.mxu0 0.0
  %3547 = vmatprep.subr.mxu0 0.0
  %3548 = vmatpush1.msra.mxu0 0.0
  %3549 = vmatprep.subr.mxu0 0.0
  %3550 = vmatpush1.msra.mxu0 0.0
  %3551 = vmatprep.subr.mxu0 0.0
  %3552 = vmatpush1.msra.mxu0 0.0
  %3553 = vmatprep.subr.mxu0 0.0
  %3554 = vmatpush1.msra.mxu0 0.0
  %3555 = vmatprep.subr.mxu0 0.0
  %3556 = vmatpush1.msra.mxu0 0.0
  %3557 = vmatprep.subr.mxu0 0.0
  %3558 = vmatpush1.msra.mxu0 0.0
  %3559 = vmatprep.subr.mxu0 0.0
  %3560 = vmatpush1.msra.mxu0 0.0
  %3561 = vmatprep.subr.mxu0 0.0
  %3562 = vmatpush1.msra.mxu0 0.0
  %3563 = vmatprep.subr.mxu0 0.0
  %3564 = vmatpush1.msra.mxu0 0.0
  %3565 = vmatprep.subr.mxu0 0.0
  %3566 = vmatpush1.msra.mxu0 0.0
  %3567 = vmatprep.subr.mxu0 0.0
  %3568 = vmatpush1.msra.mxu0 0.0
  %3569 = vmatprep.subr.mxu0 0.0
  %3570 = vmatpush1.msra.mxu0 0.0
  %3571 = vmatprep.subr.mxu0 0.0
  %3572 = vmatpush1.msra.mxu0 0.0
  %3573 = vmatprep.subr.mxu0 0.0
  %3574 = vmatpush1.msra.mxu0 0.0
  %3575 = vmatprep.subr.mxu0 0.0
  %3576 = vmatpush1.msra.mxu0 0.0
  %3577 = vmatprep.subr.mxu0 0.0
  %3578 = vmatpush1.msra.mxu0 0.0
  %3579 = vmatprep.subr.mxu0 0.0
  %3580 = vmatpush1.msra.mxu0 0.0
  %3581 = vmatprep.subr.mxu0 0.0
  %3582 = vmatpush1.msra.mxu0 0.0
  %3583 = vmatprep.subr.mxu0 0.0
  %3584 = vmatpush1.msra.mxu0 0.0
  %3585 = vmatprep.mubr.f32.mxu0 0.0
  %3586 = vmatmul.mubr.f32.gmra.mrb[0].mxu0 %v2368
  %v3587 = vpop.f32.mrb[0].mxu0
  %v3588 = vadd.f32 %v3519, %v3587
  %v3589 = vpop.f32.mrb[0].mxu0
  %3590 = vdwg.mxu0
  %v3592 = vsel %vm401, %v3424, 0
  %v3595 = vsel %vm401, %v3505, 0
  %3597 = vmatprep.subr.mxu0 0.0
  %3598 = vmatpush1.xpose.msra.mxu0 %v3595
  %3599 = vmatprep.subr.mxu0 0.0
  %3600 = vmatpush1.xpose.msra.mxu0 0.0
  %3601 = vmatprep.subr.mxu0 0.0
  %3602 = vmatpush1.xpose.msra.mxu0 0.0
  %3603 = vmatprep.subr.mxu0 0.0
  %3604 = vmatpush1.xpose.msra.mxu0 0.0
  %3605 = vmatprep.subr.mxu0 0.0
  %3606 = vmatpush1.xpose.msra.mxu0 0.0
  %3607 = vmatprep.subr.mxu0 0.0
  %3608 = vmatpush1.xpose.msra.mxu0 0.0
  %3609 = vmatprep.subr.mxu0 0.0
  %3610 = vmatpush1.xpose.msra.mxu0 0.0
  %3611 = vmatprep.subr.mxu0 0.0
  %3612 = vmatpush1.xpose.msra.mxu0 0.0
  %3613 = vmatprep.subr.mxu0 0.0
  %3614 = vmatpush1.xpose.msra.mxu0 0.0
  %3615 = vmatprep.subr.mxu0 0.0
  %3616 = vmatpush1.xpose.msra.mxu0 0.0
  %3617 = vmatprep.subr.mxu0 0.0
  %3618 = vmatpush1.xpose.msra.mxu0 0.0
  %3619 = vmatprep.subr.mxu0 0.0
  %3620 = vmatpush1.xpose.msra.mxu0 0.0
  %3621 = vmatprep.subr.mxu0 0.0
  %3622 = vmatpush1.xpose.msra.mxu0 0.0
  %3623 = vmatprep.subr.mxu0 0.0
  %3624 = vmatpush1.xpose.msra.mxu0 0.0
  %3625 = vmatprep.subr.mxu0 0.0
  %3626 = vmatpush1.xpose.msra.mxu0 0.0
  %3627 = vmatprep.subr.mxu0 0.0
  %3628 = vmatpush1.xpose.msra.mxu0 0.0
  %3629 = vmatprep.subr.mxu0 0.0
  %3630 = vmatpush1.xpose.msra.mxu0 0.0
  %3631 = vmatprep.subr.mxu0 0.0
  %3632 = vmatpush1.xpose.msra.mxu0 0.0
  %3633 = vmatprep.subr.mxu0 0.0
  %3634 = vmatpush1.xpose.msra.mxu0 0.0
  %3635 = vmatprep.subr.mxu0 0.0
  %3636 = vmatpush1.xpose.msra.mxu0 0.0
  %3637 = vmatprep.subr.mxu0 0.0
  %3638 = vmatpush1.xpose.msra.mxu0 0.0
  %3639 = vmatprep.subr.mxu0 0.0
  %3640 = vmatpush1.xpose.msra.mxu0 0.0
  %3641 = vmatprep.subr.mxu0 0.0
  %3642 = vmatpush1.xpose.msra.mxu0 0.0
  %3643 = vmatprep.subr.mxu0 0.0
  %3644 = vmatpush1.xpose.msra.mxu0 0.0
  %3645 = vmatprep.subr.mxu0 0.0
  %3646 = vmatpush1.xpose.msra.mxu0 0.0
  %3647 = vmatprep.subr.mxu0 0.0
  %3648 = vmatpush1.xpose.msra.mxu0 0.0
  %3649 = vmatprep.subr.mxu0 0.0
  %3650 = vmatpush1.xpose.msra.mxu0 0.0
  %3651 = vmatprep.subr.mxu0 0.0
  %3652 = vmatpush1.xpose.msra.mxu0 0.0
  %3653 = vmatprep.subr.mxu0 0.0
  %3654 = vmatpush1.xpose.msra.mxu0 0.0
  %3655 = vmatprep.subr.mxu0 0.0
  %3656 = vmatpush1.xpose.msra.mxu0 0.0
  %3657 = vmatprep.subr.mxu0 0.0
  %3658 = vmatpush1.xpose.msra.mxu0 0.0
  %3659 = vmatprep.subr.mxu0 0.0
  %3660 = vmatpush1.xpose.msra.mxu0 0.0
  %3661 = vmatprep.mubr.f32.mxu0 0.0
  %3662 = vmatmul.mubr.f32.gmra.mrb[0].mxu0 %v3592
  %v3663 = vpop.f32.mrb[0].mxu0
  %v3664 = vadd.f32 0.0, %v3663
  %v3665 = vpop.f32.mrb[0].mxu0
  %3666 = vdwg.mxu0
  %v3667 = vsel %vm478, %v3664, -inf
  %3668 = vmax.xlane.f32.xlu0 %v3667
  %v3669 = vpop.xlane.xlu0 %3668
  %v3670 = vsub.f32 %v3664, %v3669
  %v3671 = vmul.f32 %v3670, 1.442695
  %v3672 = vpow.pop %v3671
  %v3673 = vsel %vm478, %v3672, 0.0
  %3674 = vadd.xlane.f32.xlu0 %v3673
  %v3675 = vpop.xlane.xlu0 %3674
  %v3676 = vrcp.pop %v3675
  %v3677 = vmul.f32 %v3672, %v3676
  %v3679 = vsel %vm490, %v3677, 0
  %v3682 = vsel %vm494, %v3588, 0
  %3684 = vmatprep.subr.mxu0 0.0
  %3685 = vmatpush1.msra.mxu0 %v3682
  %3686 = vmatprep.subr.mxu0 0.0
  %3687 = vmatpush1.msra.mxu0 0.0
  %3688 = vmatprep.subr.mxu0 0.0
  %3689 = vmatpush1.msra.mxu0 0.0
  %3690 = vmatprep.subr.mxu0 0.0
  %3691 = vmatpush1.msra.mxu0 0.0
  %3692 = vmatprep.subr.mxu0 0.0
  %3693 = vmatpush1.msra.mxu0 0.0
  %3694 = vmatprep.subr.mxu0 0.0
  %3695 = vmatpush1.msra.mxu0 0.0
  %3696 = vmatprep.subr.mxu0 0.0
  %3697 = vmatpush1.msra.mxu0 0.0
  %3698 = vmatprep.subr.mxu0 0.0
  %3699 = vmatpush1.msra.mxu0 0.0
  %3700 = vmatprep.subr.mxu0 0.0
  %3701 = vmatpush1.msra.mxu0 0.0
  %3702 = vmatprep.subr.mxu0 0.0
  %3703 = vmatpush1.msra.mxu0 0.0
  %3704 = vmatprep.subr.mxu0 0.0
  %3705 = vmatpush1.msra.mxu0 0.0
  %3706 = vmatprep.subr.mxu0 0.0
  %3707 = vmatpush1.msra.mxu0 0.0
  %3708 = vmatprep.subr.mxu0 0.0
  %3709 = vmatpush1.msra.mxu0 0.0
  %3710 = vmatprep.subr.mxu0 0.0
  %3711 = vmatpush1.msra.mxu0 0.0
  %3712 = vmatprep.subr.mxu0 0.0
  %3713 = vmatpush1.msra.mxu0 0.0
  %3714 = vmatprep.subr.mxu0 0.0
  %3715 = vmatpush1.msra.mxu0 0.0
  %3716 = vmatprep.subr.mxu0 0.0
  %3717 = vmatpush1.msra.mxu0 0.0
  %3718 = vmatprep.subr.mxu0 0.0
  %3719 = vmatpush1.msra.mxu0 0.0
  %3720 = vmatprep.subr.mxu0 0.0
  %3721 = vmatpush1.msra.mxu0 0.0
  %3722 = vmatprep.subr.mxu0 0.0
  %3723 = vmatpush1.msra.mxu0 0.0
  %3724 = vmatprep.subr.mxu0 0.0
  %3725 = vmatpush1.msra.mxu0 0.0
  %3726 = vmatprep.subr.mxu0 0.0
  %3727 = vmatpush1.msra.mxu0 0.0
  %3728 = vmatprep.subr.mxu0 0.0
  %3729 = vmatpush1.msra.mxu0 0.0
  %3730 = vmatprep.subr.mxu0 0.0
  %3731 = vmatpush1.msra.mxu0 0.0
  %3732 = vmatprep.subr.mxu0 0.0
  %3733 = vmatpush1.msra.mxu0 0.0
  %3734 = vmatprep.subr.mxu0 0.0
  %3735 = vmatpush1.msra.mxu0 0.0
  %3736 = vmatprep.subr.mxu0 0.0
  %3737 = vmatpush1.msra.mxu0 0.0
  %3738 = vmatprep.subr.mxu0 0.0
  %3739 = vmatpush1.msra.mxu0 0.0
  %3740 = vmatprep.subr.mxu0 0.0
  %3741 = vmatpush1.msra.mxu0 0.0
  %3742 = vmatprep.subr.mxu0 0.0
  %3743 = vmatpush1.msra.mxu0 0.0
  %3744 = vmatprep.subr.mxu0 0.0
  %3745 = vmatpush1.msra.mxu0 0.0
  %3746 = vmatprep.subr.mxu0 0.0
  %3747 = vmatpush1.msra.mxu0 0.0
  %3748 = vmatprep.mubr.f32.mxu0 0.0
  %3749 = vmatmul.mubr.f32.gmra.mrb[0].mxu0 %v3679
  %v3750 = vpop.f32.mrb[0].mxu0
  %v3751 = vadd.f32 0.0, %v3750
  %v3752 = vpop.f32.mrb[0].mxu0
  %3753 = vdwg.mxu0
  %s3754 = scalar_lea.vmem %s9, 48
  %v3755 = vld [vmem:[%s3754] sm:$0xff]
  %v3757 = vsel %vm401, %v3751, 0
  %3759 = vmatprep.subr.mxu0 0.0
  %3760 = vmatpush1.msra.mxu0 %v3755
  %3761 = vmatprep.subr.mxu0 0.0
  %3762 = vmatpush1.msra.mxu0 0.0
  %3763 = vmatprep.subr.mxu0 0.0
  %3764 = vmatpush1.msra.mxu0 0.0
  %3765 = vmatprep.subr.mxu0 0.0
  %3766 = vmatpush1.msra.mxu0 0.0
  %3767 = vmatprep.subr.mxu0 0.0
  %3768 = vmatpush1.msra.mxu0 0.0
  %3769 = vmatprep.subr.mxu0 0.0
  %3770 = vmatpush1.msra.mxu0 0.0
  %3771 = vmatprep.subr.mxu0 0.0
  %3772 = vmatpush1.msra.mxu0 0.0
  %3773 = vmatprep.subr.mxu0 0.0
  %3774 = vmatpush1.msra.mxu0 0.0
  %3775 = vmatprep.subr.mxu0 0.0
  %3776 = vmatpush1.msra.mxu0 0.0
  %3777 = vmatprep.subr.mxu0 0.0
  %3778 = vmatpush1.msra.mxu0 0.0
  %3779 = vmatprep.subr.mxu0 0.0
  %3780 = vmatpush1.msra.mxu0 0.0
  %3781 = vmatprep.subr.mxu0 0.0
  %3782 = vmatpush1.msra.mxu0 0.0
  %3783 = vmatprep.subr.mxu0 0.0
  %3784 = vmatpush1.msra.mxu0 0.0
  %3785 = vmatprep.subr.mxu0 0.0
  %3786 = vmatpush1.msra.mxu0 0.0
  %3787 = vmatprep.subr.mxu0 0.0
  %3788 = vmatpush1.msra.mxu0 0.0
  %3789 = vmatprep.subr.mxu0 0.0
  %3790 = vmatpush1.msra.mxu0 0.0
  %3791 = vmatprep.subr.mxu0 0.0
  %3792 = vmatpush1.msra.mxu0 0.0
  %3793 = vmatprep.subr.mxu0 0.0
  %3794 = vmatpush1.msra.mxu0 0.0
  %3795 = vmatprep.subr.mxu0 0.0
  %3796 = vmatpush1.msra.mxu0 0.0
  %3797 = vmatprep.subr.mxu0 0.0
  %3798 = vmatpush1.msra.mxu0 0.0
  %3799 = vmatprep.subr.mxu0 0.0
  %3800 = vmatpush1.msra.mxu0 0.0
  %3801 = vmatprep.subr.mxu0 0.0
  %3802 = vmatpush1.msra.mxu0 0.0
  %3803 = vmatprep.subr.mxu0 0.0
  %3804 = vmatpush1.msra.mxu0 0.0
  %3805 = vmatprep.subr.mxu0 0.0
  %3806 = vmatpush1.msra.mxu0 0.0
  %3807 = vmatprep.subr.mxu0 0.0
  %3808 = vmatpush1.msra.mxu0 0.0
  %3809 = vmatprep.subr.mxu0 0.0
  %3810 = vmatpush1.msra.mxu0 0.0
  %3811 = vmatprep.subr.mxu0 0.0
  %3812 = vmatpush1.msra.mxu0 0.0
  %3813 = vmatprep.subr.mxu0 0.0
  %3814 = vmatpush1.msra.mxu0 0.0
  %3815 = vmatprep.subr.mxu0 0.0
  %3816 = vmatpush1.msra.mxu0 0.0
  %3817 = vmatprep.subr.mxu0 0.0
  %3818 = vmatpush1.msra.mxu0 0.0
  %3819 = vmatprep.subr.mxu0 0.0
  %3820 = vmatpush1.msra.mxu0 0.0
  %3821 = vmatprep.subr.mxu0 0.0
  %3822 = vmatpush1.msra.mxu0 0.0
  %3823 = vmatprep.mubr.f32.mxu0 0.0
  %3824 = vmatmul.mubr.f32.gmra.mrb[0].mxu0 %v3757
  %v3825 = vpop.f32.mrb[0].mxu0
  %v3826 = vadd.f32 0.0, %v3825
  %v3827 = vpop.f32.mrb[0].mxu0
  %3828 = vdwg.mxu0
  %v3829 = vadd.f32 %v3340, %v3826
  %s3830 = scalar_lea.vmem %s3, 224
  %v3831 = vld [vmem:[%s3830] sm:$0xff]
  %v3832 = vld [vmem:[%s3830 + $0x8] sm:$0xff]
  %v3833 = vld [vmem:[%s3830 + $0x10] sm:$0xff]
  %v3834 = vld [vmem:[%s3830 + $0x18] sm:$0xff]
  %s3835 = scalar_lea.vmem %s4, 7
  %v3836 = vld [vmem:[%s3835] sm:$0x1]
  %v3838 = vlaneseq
  %v3839 = vshrl.u32 %v3838, 7
  %v3840 = vsub.s32 0, %v3839
  %v3841 = vrot.slane %v3836, %v3840
  %3843 = vmatprep.subr.mxu0 0.0
  %3844 = vmatpush1.msra.mxu0 %v3831
  %3845 = vmatprep.subr.mxu0 0.0
  %3846 = vmatpush1.msra.mxu0 %v3832
  %3847 = vmatprep.subr.mxu0 0.0
  %3848 = vmatpush1.msra.mxu0 %v3833
  %3849 = vmatprep.subr.mxu0 0.0
  %3850 = vmatpush1.msra.mxu0 %v3834
  %3851 = vmatprep.subr.mxu0 0.0
  %3852 = vmatpush1.msra.mxu0 0.0
  %3853 = vmatprep.subr.mxu0 0.0
  %3854 = vmatpush1.msra.mxu0 0.0
  %3855 = vmatprep.subr.mxu0 0.0
  %3856 = vmatpush1.msra.mxu0 0.0
  %3857 = vmatprep.subr.mxu0 0.0
  %3858 = vmatpush1.msra.mxu0 0.0
  %3859 = vmatprep.subr.mxu0 0.0
  %3860 = vmatpush1.msra.mxu0 0.0
  %3861 = vmatprep.subr.mxu0 0.0
  %3862 = vmatpush1.msra.mxu0 0.0
  %3863 = vmatprep.subr.mxu0 0.0
  %3864 = vmatpush1.msra.mxu0 0.0
  %3865 = vmatprep.subr.mxu0 0.0
  %3866 = vmatpush1.msra.mxu0 0.0
  %3867 = vmatprep.subr.mxu0 0.0
  %3868 = vmatpush1.msra.mxu0 0.0
  %3869 = vmatprep.subr.mxu0 0.0
  %3870 = vmatpush1.msra.mxu0 0.0
  %3871 = vmatprep.subr.mxu0 0.0
  %3872 = vmatpush1.msra.mxu0 0.0
  %3873 = vmatprep.subr.mxu0 0.0
  %3874 = vmatpush1.msra.mxu0 0.0
  %3875 = vmatprep.subr.mxu0 0.0
  %3876 = vmatpush1.msra.mxu0 0.0
  %3877 = vmatprep.subr.mxu0 0.0
  %3878 = vmatpush1.msra.mxu0 0.0
  %3879 = vmatprep.subr.mxu0 0.0
  %3880 = vmatpush1.msra.mxu0 0.0
  %3881 = vmatprep.subr.mxu0 0.0
  %3882 = vmatpush1.msra.mxu0 0.0
  %3883 = vmatprep.subr.mxu0 0.0
  %3884 = vmatpush1.msra.mxu0 0.0
  %3885 = vmatprep.subr.mxu0 0.0
  %3886 = vmatpush1.msra.mxu0 0.0
  %3887 = vmatprep.subr.mxu0 0.0
  %3888 = vmatpush1.msra.mxu0 0.0
  %3889 = vmatprep.subr.mxu0 0.0
  %3890 = vmatpush1.msra.mxu0 0.0
  %3891 = vmatprep.subr.mxu0 0.0
  %3892 = vmatpush1.msra.mxu0 0.0
  %3893 = vmatprep.subr.mxu0 0.0
  %3894 = vmatpush1.msra.mxu0 0.0
  %3895 = vmatprep.subr.mxu0 0.0
  %3896 = vmatpush1.msra.mxu0 0.0
  %3897 = vmatprep.subr.mxu0 0.0
  %3898 = vmatpush1.msra.mxu0 0.0
  %3899 = vmatprep.subr.mxu0 0.0
  %3900 = vmatpush1.msra.mxu0 0.0
  %3901 = vmatprep.subr.mxu0 0.0
  %3902 = vmatpush1.msra.mxu0 0.0
  %3903 = vmatprep.subr.mxu0 0.0
  %3904 = vmatpush1.msra.mxu0 0.0
  %3905 = vmatprep.subr.mxu0 0.0
  %3906 = vmatpush1.msra.mxu0 0.0
  %3907 = vmatprep.mubr.f32.mxu0 0.0
  %3908 = vmatmul.mubr.f32.gmra.mrb[0].mxu0 %v2368
  %v3909 = vpop.f32.mrb[0].mxu0
  %v3910 = vadd.f32 %v3841, %v3909
  %v3911 = vpop.f32.mrb[0].mxu0
  %3912 = vdwg.mxu0
  %v3913 = vmul.f32 %v3910, 0.35355338
  %s3914 = scalar_lea.vmem %s5, 224
  %v3915 = vld [vmem:[%s3914] sm:$0xff]
  %v3916 = vld [vmem:[%s3914 + $0x8] sm:$0xff]
  %v3917 = vld [vmem:[%s3914 + $0x10] sm:$0xff]
  %v3918 = vld [vmem:[%s3914 + $0x18] sm:$0xff]
  %s3919 = scalar_lea.vmem %s6, 7
  %v3920 = vld [vmem:[%s3919] sm:$0x1]
  %v3922 = vlaneseq
  %v3923 = vshrl.u32 %v3922, 7
  %v3924 = vsub.s32 0, %v3923
  %v3925 = vrot.slane %v3920, %v3924
  %3927 = vmatprep.subr.mxu0 0.0
  %3928 = vmatpush1.msra.mxu0 %v3915
  %3929 = vmatprep.subr.mxu0 0.0
  %3930 = vmatpush1.msra.mxu0 %v3916
  %3931 = vmatprep.subr.mxu0 0.0
  %3932 = vmatpush1.msra.mxu0 %v3917
  %3933 = vmatprep.subr.mxu0 0.0
  %3934 = vmatpush1.msra.mxu0 %v3918
  %3935 = vmatprep.subr.mxu0 0.0
  %3936 = vmatpush1.msra.mxu0 0.0
  %3937 = vmatprep.subr.mxu0 0.0
  %3938 = vmatpush1.msra.mxu0 0.0
  %3939 = vmatprep.subr.mxu0 0.0
  %3940 = vmatpush1.msra.mxu0 0.0
  %3941 = vmatprep.subr.mxu0 0.0
  %3942 = vmatpush1.msra.mxu0 0.0
  %3943 = vmatprep.subr.mxu0 0.0
  %3944 = vmatpush1.msra.mxu0 0.0
  %3945 = vmatprep.subr.mxu0 0.0
  %3946 = vmatpush1.msra.mxu0 0.0
  %3947 = vmatprep.subr.mxu0 0.0
  %3948 = vmatpush1.msra.mxu0 0.0
  %3949 = vmatprep.subr.mxu0 0.0
  %3950 = vmatpush1.msra.mxu0 0.0
  %3951 = vmatprep.subr.mxu0 0.0
  %3952 = vmatpush1.msra.mxu0 0.0
  %3953 = vmatprep.subr.mxu0 0.0
  %3954 = vmatpush1.msra.mxu0 0.0
  %3955 = vmatprep.subr.mxu0 0.0
  %3956 = vmatpush1.msra.mxu0 0.0
  %3957 = vmatprep.subr.mxu0 0.0
  %3958 = vmatpush1.msra.mxu0 0.0
  %3959 = vmatprep.subr.mxu0 0.0
  %3960 = vmatpush1.msra.mxu0 0.0
  %3961 = vmatprep.subr.mxu0 0.0
  %3962 = vmatpush1.msra.mxu0 0.0
  %3963 = vmatprep.subr.mxu0 0.0
  %3964 = vmatpush1.msra.mxu0 0.0
  %3965 = vmatprep.subr.mxu0 0.0
  %3966 = vmatpush1.msra.mxu0 0.0
  %3967 = vmatprep.subr.mxu0 0.0
  %3968 = vmatpush1.msra.mxu0 0.0
  %3969 = vmatprep.subr.mxu0 0.0
  %3970 = vmatpush1.msra.mxu0 0.0
  %3971 = vmatprep.subr.mxu0 0.0
  %3972 = vmatpush1.msra.mxu0 0.0
  %3973 = vmatprep.subr.mxu0 0.0
  %3974 = vmatpush1.msra.mxu0 0.0
  %3975 = vmatprep.subr.mxu0 0.0
  %3976 = vmatpush1.msra.mxu0 0.0
  %3977 = vmatprep.subr.mxu0 0.0
  %3978 = vmatpush1.msra.mxu0 0.0
  %3979 = vmatprep.subr.mxu0 0.0
  %3980 = vmatpush1.msra.mxu0 0.0
  %3981 = vmatprep.subr.mxu0 0.0
  %3982 = vmatpush1.msra.mxu0 0.0
  %3983 = vmatprep.subr.mxu0 0.0
  %3984 = vmatpush1.msra.mxu0 0.0
  %3985 = vmatprep.subr.mxu0 0.0
  %3986 = vmatpush1.msra.mxu0 0.0
  %3987 = vmatprep.subr.mxu0 0.0
  %3988 = vmatpush1.msra.mxu0 0.0
  %3989 = vmatprep.subr.mxu0 0.0
  %3990 = vmatpush1.msra.mxu0 0.0
  %3991 = vmatprep.mubr.f32.mxu0 0.0
  %3992 = vmatmul.mubr.f32.gmra.mrb[0].mxu0 %v2368
  %v3993 = vpop.f32.mrb[0].mxu0
  %v3994 = vadd.f32 %v3925, %v3993
  %v3995 = vpop.f32.mrb[0].mxu0
  %3996 = vdwg.mxu0
  %s3997 = scalar_lea.vmem %s7, 224
  %v3998 = vld [vmem:[%s3997] sm:$0xff]
  %v3999 = vld [vmem:[%s3997 + $0x8] sm:$0xff]
  %v4000 = vld [vmem:[%s3997 + $0x10] sm:$0xff]
  %v4001 = vld [vmem:[%s3997 + $0x18] sm:$0xff]
  %s4002 = scalar_lea.vmem %s8, 7
  %v4003 = vld [vmem:[%s4002] sm:$0x1]
  %v4005 = vlaneseq
  %v4006 = vshrl.u32 %v4005, 7
  %v4007 = vsub.s32 0, %v4006
  %v4008 = vrot.slane %v4003, %v4007
  %4010 = vmatprep.subr.mxu0 0.0
  %4011 = vmatpush1.msra.mxu0 %v3998
  %4012 = vmatprep.subr.mxu0 0.0
  %4013 = vmatpush1.msra.mxu0 %v3999
  %4014 = vmatprep.subr.mxu0 0.0
  %4015 = vmatpush1.msra.mxu0 %v4000
  %4016 = vmatprep.subr.mxu0 0.0
  %4017 = vmatpush1.msra.mxu0 %v4001
  %4018 = vmatprep.subr.mxu0 0.0
  %4019 = vmatpush1.msra.mxu0 0.0
  %4020 = vmatprep.subr.mxu0 0.0
  %4021 = vmatpush1.msra.mxu0 0.0
  %4022 = vmatprep.subr.mxu0 0.0
  %4023 = vmatpush1.msra.mxu0 0.0
  %4024 = vmatprep.subr.mxu0 0.0
  %4025 = vmatpush1.msra.mxu0 0.0
  %4026 = vmatprep.subr.mxu0 0.0
  %4027 = vmatpush1.msra.mxu0 0.0
  %4028 = vmatprep.subr.mxu0 0.0
  %4029 = vmatpush1.msra.mxu0 0.0
  %4030 = vmatprep.subr.mxu0 0.0
  %4031 = vmatpush1.msra.mxu0 0.0
  %4032 = vmatprep.subr.mxu0 0.0
  %4033 = vmatpush1.msra.mxu0 0.0
  %4034 = vmatprep.subr.mxu0 0.0
  %4035 = vmatpush1.msra.mxu0 0.0
  %4036 = vmatprep.subr.mxu0 0.0
  %4037 = vmatpush1.msra.mxu0 0.0
  %4038 = vmatprep.subr.mxu0 0.0
  %4039 = vmatpush1.msra.mxu0 0.0
  %4040 = vmatprep.subr.mxu0 0.0
  %4041 = vmatpush1.msra.mxu0 0.0
  %4042 = vmatprep.subr.mxu0 0.0
  %4043 = vmatpush1.msra.mxu0 0.0
  %4044 = vmatprep.subr.mxu0 0.0
  %4045 = vmatpush1.msra.mxu0 0.0
  %4046 = vmatprep.subr.mxu0 0.0
  %4047 = vmatpush1.msra.mxu0 0.0
  %4048 = vmatprep.subr.mxu0 0.0
  %4049 = vmatpush1.msra.mxu0 0.0
  %4050 = vmatprep.subr.mxu0 0.0
  %4051 = vmatpush1.msra.mxu0 0.0
  %4052 = vmatprep.subr.mxu0 0.0
  %4053 = vmatpush1.msra.mxu0 0.0
  %4054 = vmatprep.subr.mxu0 0.0
  %4055 = vmatpush1.msra.mxu0 0.0
  %4056 = vmatprep.subr.mxu0 0.0
  %4057 = vmatpush1.msra.mxu0 0.0
  %4058 = vmatprep.subr.mxu0 0.0
  %4059 = vmatpush1.msra.mxu0 0.0
  %4060 = vmatprep.subr.mxu0 0.0
  %4061 = vmatpush1.msra.mxu0 0.0
  %4062 = vmatprep.subr.mxu0 0.0
  %4063 = vmatpush1.msra.mxu0 0.0
  %4064 = vmatprep.subr.mxu0 0.0
  %4065 = vmatpush1.msra.mxu0 0.0
  %4066 = vmatprep.subr.mxu0 0.0
  %4067 = vmatpush1.msra.mxu0 0.0
  %4068 = vmatprep.subr.mxu0 0.0
  %4069 = vmatpush1.msra.mxu0 0.0
  %4070 = vmatprep.subr.mxu0 0.0
  %4071 = vmatpush1.msra.mxu0 0.0
  %4072 = vmatprep.subr.mxu0 0.0
  %4073 = vmatpush1.msra.mxu0 0.0
  %4074 = vmatprep.mubr.f32.mxu0 0.0
  %4075 = vmatmul.mubr.f32.gmra.mrb[0].mxu0 %v2368
  %v4076 = vpop.f32.mrb[0].mxu0
  %v4077 = vadd.f32 %v4008, %v4076
  %v4078 = vpop.f32.mrb[0].mxu0
  %4079 = vdwg.mxu0
  %v4081 = vsel %vm401, %v3913, 0
  %v4084 = vsel %vm401, %v3994, 0
  %4086 = vmatprep.subr.mxu0 0.0
  %4087 = vmatpush1.xpose.msra.mxu0 %v4084
  %4088 = vmatprep.subr.mxu0 0.0
  %4089 = vmatpush1.xpose.msra.mxu0 0.0
  %4090 = vmatprep.subr.mxu0 0.0
  %4091 = vmatpush1.xpose.msra.mxu0 0.0
  %4092 = vmatprep.subr.mxu0 0.0
  %4093 = vmatpush1.xpose.msra.mxu0 0.0
  %4094 = vmatprep.subr.mxu0 0.0
  %4095 = vmatpush1.xpose.msra.mxu0 0.0
  %4096 = vmatprep.subr.mxu0 0.0
  %4097 = vmatpush1.xpose.msra.mxu0 0.0
  %4098 = vmatprep.subr.mxu0 0.0
  %4099 = vmatpush1.xpose.msra.mxu0 0.0
  %4100 = vmatprep.subr.mxu0 0.0
  %4101 = vmatpush1.xpose.msra.mxu0 0.0
  %4102 = vmatprep.subr.mxu0 0.0
  %4103 = vmatpush1.xpose.msra.mxu0 0.0
  %4104 = vmatprep.subr.mxu0 0.0
  %4105 = vmatpush1.xpose.msra.mxu0 0.0
  %4106 = vmatprep.subr.mxu0 0.0
  %4107 = vmatpush1.xpose.msra.mxu0 0.0
  %4108 = vmatprep.subr.mxu0 0.0
  %4109 = vmatpush1.xpose.msra.mxu0 0.0
  %4110 = vmatprep.subr.mxu0 0.0
  %4111 = vmatpush1.xpose.msra.mxu0 0.0
  %4112 = vmatprep.subr.mxu0 0.0
  %4113 = vmatpush1.xpose.msra.mxu0 0.0
  %4114 = vmatprep.subr.mxu0 0.0
  %4115 = vmatpush1.xpose.msra.mxu0 0.0
  %4116 = vmatprep.subr.mxu0 0.0
  %4117 = vmatpush1.xpose.msra.mxu0 0.0
  %4118 = vmatprep.subr.mxu0 0.0
  %4119 = vmatpush1.xpose.msra.mxu0 0.0
  %4120 = vmatprep.subr.mxu0 0.0
  %4121 = vmatpush1.xpose.msra.mxu0 0.0
  %4122 = vmatprep.subr.mxu0 0.0
  %4123 = vmatpush1.xpose.msra.mxu0 0.0
  %4124 = vmatprep.subr.mxu0 0.0
  %4125 = vmatpush1.xpose.msra.mxu0 0.0
  %4126 = vmatprep.subr.mxu0 0.0
  %4127 = vmatpush1.xpose.msra.mxu0 0.0
  %4128 = vmatprep.subr.mxu0 0.0
  %4129 = vmatpush1.xpose.msra.mxu0 0.0
  %4130 = vmatprep.subr.mxu0 0.0
  %4131 = vmatpush1.xpose.msra.mxu0 0.0
  %4132 = vmatprep.subr.mxu0 0.0
  %4133 = vmatpush1.xpose.msra.mxu0 0.0
  %4134 = vmatprep.subr.mxu0 0.0
  %4135 = vmatpush1.xpose.msra.mxu0 0.0
  %4136 = vmatprep.subr.mxu0 0.0
  %4137 = vmatpush1.xpose.msra.mxu0 0.0
  %4138 = vmatprep.subr.mxu0 0.0
  %4139 = vmatpush1.xpose.msra.mxu0 0.0
  %4140 = vmatprep.subr.mxu0 0.0
  %4141 = vmatpush1.xpose.msra.mxu0 0.0
  %4142 = vmatprep.subr.mxu0 0.0
  %4143 = vmatpush1.xpose.msra.mxu0 0.0
  %4144 = vmatprep.subr.mxu0 0.0
  %4145 = vmatpush1.xpose.msra.mxu0 0.0
  %4146 = vmatprep.subr.mxu0 0.0
  %4147 = vmatpush1.xpose.msra.mxu0 0.0
  %4148 = vmatprep.subr.mxu0 0.0
  %4149 = vmatpush1.xpose.msra.mxu0 0.0
  %4150 = vmatprep.mubr.f32.mxu0 0.0
  %4151 = vmatmul.mubr.f32.gmra.mrb[0].mxu0 %v4081
  %v4152 = vpop.f32.mrb[0].mxu0
  %v4153 = vadd.f32 0.0, %v4152
  %v4154 = vpop.f32.mrb[0].mxu0
  %4155 = vdwg.mxu0
  %v4156 = vsel %vm478, %v4153, -inf
  %4157 = vmax.xlane.f32.xlu0 %v4156
  %v4158 = vpop.xlane.xlu0 %4157
  %v4159 = vsub.f32 %v4153, %v4158
  %v4160 = vmul.f32 %v4159, 1.442695
  %v4161 = vpow.pop %v4160
  %v4162 = vsel %vm478, %v4161, 0.0
  %4163 = vadd.xlane.f32.xlu0 %v4162
  %v4164 = vpop.xlane.xlu0 %4163
  %v4165 = vrcp.pop %v4164
  %v4166 = vmul.f32 %v4161, %v4165
  %v4168 = vsel %vm490, %v4166, 0
  %v4171 = vsel %vm494, %v4077, 0
  %4173 = vmatprep.subr.mxu0 0.0
  %4174 = vmatpush1.msra.mxu0 %v4171
  %4175 = vmatprep.subr.mxu0 0.0
  %4176 = vmatpush1.msra.mxu0 0.0
  %4177 = vmatprep.subr.mxu0 0.0
  %4178 = vmatpush1.msra.mxu0 0.0
  %4179 = vmatprep.subr.mxu0 0.0
  %4180 = vmatpush1.msra.mxu0 0.0
  %4181 = vmatprep.subr.mxu0 0.0
  %4182 = vmatpush1.msra.mxu0 0.0
  %4183 = vmatprep.subr.mxu0 0.0
  %4184 = vmatpush1.msra.mxu0 0.0
  %4185 = vmatprep.subr.mxu0 0.0
  %4186 = vmatpush1.msra.mxu0 0.0
  %4187 = vmatprep.subr.mxu0 0.0
  %4188 = vmatpush1.msra.mxu0 0.0
  %4189 = vmatprep.subr.mxu0 0.0
  %4190 = vmatpush1.msra.mxu0 0.0
  %4191 = vmatprep.subr.mxu0 0.0
  %4192 = vmatpush1.msra.mxu0 0.0
  %4193 = vmatprep.subr.mxu0 0.0
  %4194 = vmatpush1.msra.mxu0 0.0
  %4195 = vmatprep.subr.mxu0 0.0
  %4196 = vmatpush1.msra.mxu0 0.0
  %4197 = vmatprep.subr.mxu0 0.0
  %4198 = vmatpush1.msra.mxu0 0.0
  %4199 = vmatprep.subr.mxu0 0.0
  %4200 = vmatpush1.msra.mxu0 0.0
  %4201 = vmatprep.subr.mxu0 0.0
  %4202 = vmatpush1.msra.mxu0 0.0
  %4203 = vmatprep.subr.mxu0 0.0
  %4204 = vmatpush1.msra.mxu0 0.0
  %4205 = vmatprep.subr.mxu0 0.0
  %4206 = vmatpush1.msra.mxu0 0.0
  %4207 = vmatprep.subr.mxu0 0.0
  %4208 = vmatpush1.msra.mxu0 0.0
  %4209 = vmatprep.subr.mxu0 0.0
  %4210 = vmatpush1.msra.mxu0 0.0
  %4211 = vmatprep.subr.mxu0 0.0
  %4212 = vmatpush1.msra.mxu0 0.0
  %4213 = vmatprep.subr.mxu0 0.0
  %4214 = vmatpush1.msra.mxu0 0.0
  %4215 = vmatprep.subr.mxu0 0.0
  %4216 = vmatpush1.msra.mxu0 0.0
  %4217 = vmatprep.subr.mxu0 0.0
  %4218 = vmatpush1.msra.mxu0 0.0
  %4219 = vmatprep.subr.mxu0 0.0
  %4220 = vmatpush1.msra.mxu0 0.0
  %4221 = vmatprep.subr.mxu0 0.0
  %4222 = vmatpush1.msra.mxu0 0.0
  %4223 = vmatprep.subr.mxu0 0.0
  %4224 = vmatpush1.msra.mxu0 0.0
  %4225 = vmatprep.subr.mxu0 0.0
  %4226 = vmatpush1.msra.mxu0 0.0
  %4227 = vmatprep.subr.mxu0 0.0
  %4228 = vmatpush1.msra.mxu0 0.0
  %4229 = vmatprep.subr.mxu0 0.0
  %4230 = vmatpush1.msra.mxu0 0.0
  %4231 = vmatprep.subr.mxu0 0.0
  %4232 = vmatpush1.msra.mxu0 0.0
  %4233 = vmatprep.subr.mxu0 0.0
  %4234 = vmatpush1.msra.mxu0 0.0
  %4235 = vmatprep.subr.mxu0 0.0
  %4236 = vmatpush1.msra.mxu0 0.0
  %4237 = vmatprep.mubr.f32.mxu0 0.0
  %4238 = vmatmul.mubr.f32.gmra.mrb[0].mxu0 %v4168
  %v4239 = vpop.f32.mrb[0].mxu0
  %v4240 = vadd.f32 0.0, %v4239
  %v4241 = vpop.f32.mrb[0].mxu0
  %4242 = vdwg.mxu0
  %s4243 = scalar_lea.vmem %s9, 56
  %v4244 = vld [vmem:[%s4243] sm:$0xff]
  %v4246 = vsel %vm401, %v4240, 0
  %4248 = vmatprep.subr.mxu0 0.0
  %4249 = vmatpush1.msra.mxu0 %v4244
  %4250 = vmatprep.subr.mxu0 0.0
  %4251 = vmatpush1.msra.mxu0 0.0
  %4252 = vmatprep.subr.mxu0 0.0
  %4253 = vmatpush1.msra.mxu0 0.0
  %4254 = vmatprep.subr.mxu0 0.0
  %4255 = vmatpush1.msra.mxu0 0.0
  %4256 = vmatprep.subr.mxu0 0.0
  %4257 = vmatpush1.msra.mxu0 0.0
  %4258 = vmatprep.subr.mxu0 0.0
  %4259 = vmatpush1.msra.mxu0 0.0
  %4260 = vmatprep.subr.mxu0 0.0
  %4261 = vmatpush1.msra.mxu0 0.0
  %4262 = vmatprep.subr.mxu0 0.0
  %4263 = vmatpush1.msra.mxu0 0.0
  %4264 = vmatprep.subr.mxu0 0.0
  %4265 = vmatpush1.msra.mxu0 0.0
  %4266 = vmatprep.subr.mxu0 0.0
  %4267 = vmatpush1.msra.mxu0 0.0
  %4268 = vmatprep.subr.mxu0 0.0
  %4269 = vmatpush1.msra.mxu0 0.0
  %4270 = vmatprep.subr.mxu0 0.0
  %4271 = vmatpush1.msra.mxu0 0.0
  %4272 = vmatprep.subr.mxu0 0.0
  %4273 = vmatpush1.msra.mxu0 0.0
  %4274 = vmatprep.subr.mxu0 0.0
  %4275 = vmatpush1.msra.mxu0 0.0
  %4276 = vmatprep.subr.mxu0 0.0
  %4277 = vmatpush1.msra.mxu0 0.0
  %4278 = vmatprep.subr.mxu0 0.0
  %4279 = vmatpush1.msra.mxu0 0.0
  %4280 = vmatprep.subr.mxu0 0.0
  %4281 = vmatpush1.msra.mxu0 0.0
  %4282 = vmatprep.subr.mxu0 0.0
  %4283 = vmatpush1.msra.mxu0 0.0
  %4284 = vmatprep.subr.mxu0 0.0
  %4285 = vmatpush1.msra.mxu0 0.0
  %4286 = vmatprep.subr.mxu0 0.0
  %4287 = vmatpush1.msra.mxu0 0.0
  %4288 = vmatprep.subr.mxu0 0.0
  %4289 = vmatpush1.msra.mxu0 0.0
  %4290 = vmatprep.subr.mxu0 0.0
  %4291 = vmatpush1.msra.mxu0 0.0
  %4292 = vmatprep.subr.mxu0 0.0
  %4293 = vmatpush1.msra.mxu0 0.0
  %4294 = vmatprep.subr.mxu0 0.0
  %4295 = vmatpush1.msra.mxu0 0.0
  %4296 = vmatprep.subr.mxu0 0.0
  %4297 = vmatpush1.msra.mxu0 0.0
  %4298 = vmatprep.subr.mxu0 0.0
  %4299 = vmatpush1.msra.mxu0 0.0
  %4300 = vmatprep.subr.mxu0 0.0
  %4301 = vmatpush1.msra.mxu0 0.0
  %4302 = vmatprep.subr.mxu0 0.0
  %4303 = vmatpush1.msra.mxu0 0.0
  %4304 = vmatprep.subr.mxu0 0.0
  %4305 = vmatpush1.msra.mxu0 0.0
  %4306 = vmatprep.subr.mxu0 0.0
  %4307 = vmatpush1.msra.mxu0 0.0
  %4308 = vmatprep.subr.mxu0 0.0
  %4309 = vmatpush1.msra.mxu0 0.0
  %4310 = vmatprep.subr.mxu0 0.0
  %4311 = vmatpush1.msra.mxu0 0.0
  %4312 = vmatprep.mubr.f32.mxu0 0.0
  %4313 = vmatmul.mubr.f32.gmra.mrb[0].mxu0 %v4246
  %v4314 = vpop.f32.mrb[0].mxu0
  %v4315 = vadd.f32 0.0, %v4314
  %v4316 = vpop.f32.mrb[0].mxu0
  %4317 = vdwg.mxu0
  %v4318 = vadd.f32 %v3829, %v4315
  %v4319 = vadd.f32 %v2351, %v4318
  %v4320 = vsel %vm2117, %v4319, 0.0
  %4321 = vadd.xlane.f32.xlu0 %v4320
  %v4322 = vpop.xlane.xlu0 %4321
  %v4323 = vmul.f32 %v4322, %v2121
  %v4324 = vsub.f32 %v4319, %v4323
  %v4325 = vmul.f32 %v4324, %v4324
  %v4326 = vsel %vm2117, %v4325, 0.0
  %4327 = vadd.xlane.f32.xlu0 %v4326
  %v4328 = vpop.xlane.xlu0 %4327
  %v4329 = vmul.f32 %v4328, %v2121
  %v4330 = vadd.f32 %v4329, 1e-05
  %v4331 = vrsqrt.pop %v4330
  %v4332 = vmul.f32 %v4324, %v4331
  %s4333 = scalar_lea.vmem %s11, 1
  %v4334 = vld [vmem:[%s4333] sm:$0x1]
  %v4336 = vlaneseq
  %v4337 = vshrl.u32 %v4336, 7
  %v4338 = vsub.s32 0, %v4337
  %v4339 = vrot.slane %v4334, %v4338
  %v4341 = vmul.f32 %v4332, %v4339
  %s4342 = scalar_lea.vmem %s12, 1
  %v4343 = vld [vmem:[%s4342] sm:$0x1]
  %v4345 = vlaneseq
  %v4346 = vshrl.u32 %v4345, 7
  %v4347 = vsub.s32 0, %v4346
  %v4348 = vrot.slane %v4343, %v4347
  %v4350 = vadd.f32 %v4341, %v4348
  %s4351 = scalar_lea.vmem %s13, 32
  %v4352 = vld [vmem:[%s4351] sm:$0xff]
  %v4353 = vld [vmem:[%s4351 + $0x8] sm:$0xff]
  %v4354 = vld [vmem:[%s4351 + $0x10] sm:$0xff]
  %v4355 = vld [vmem:[%s4351 + $0x18] sm:$0xff]
  %s4356 = scalar_lea.vmem %s14, 1
  %v4357 = vld [vmem:[%s4356] sm:$0x1]
  %v4359 = vlaneseq
  %v4360 = vshrl.u32 %v4359, 7
  %v4361 = vsub.s32 0, %v4360
  %v4362 = vrot.slane %v4357, %v4361
  %v4365 = vsel %vm164, %v4350, 0
  %4367 = vmatprep.subr.mxu0 0.0
  %4368 = vmatpush1.msra.mxu0 %v4352
  %4369 = vmatprep.subr.mxu0 0.0
  %4370 = vmatpush1.msra.mxu0 %v4353
  %4371 = vmatprep.subr.mxu0 0.0
  %4372 = vmatpush1.msra.mxu0 %v4354
  %4373 = vmatprep.subr.mxu0 0.0
  %4374 = vmatpush1.msra.mxu0 %v4355
  %4375 = vmatprep.subr.mxu0 0.0
  %4376 = vmatpush1.msra.mxu0 0.0
  %4377 = vmatprep.subr.mxu0 0.0
  %4378 = vmatpush1.msra.mxu0 0.0
  %4379 = vmatprep.subr.mxu0 0.0
  %4380 = vmatpush1.msra.mxu0 0.0
  %4381 = vmatprep.subr.mxu0 0.0
  %4382 = vmatpush1.msra.mxu0 0.0
  %4383 = vmatprep.subr.mxu0 0.0
  %4384 = vmatpush1.msra.mxu0 0.0
  %4385 = vmatprep.subr.mxu0 0.0
  %4386 = vmatpush1.msra.mxu0 0.0
  %4387 = vmatprep.subr.mxu0 0.0
  %4388 = vmatpush1.msra.mxu0 0.0
  %4389 = vmatprep.subr.mxu0 0.0
  %4390 = vmatpush1.msra.mxu0 0.0
  %4391 = vmatprep.subr.mxu0 0.0
  %4392 = vmatpush1.msra.mxu0 0.0
  %4393 = vmatprep.subr.mxu0 0.0
  %4394 = vmatpush1.msra.mxu0 0.0
  %4395 = vmatprep.subr.mxu0 0.0
  %4396 = vmatpush1.msra.mxu0 0.0
  %4397 = vmatprep.subr.mxu0 0.0
  %4398 = vmatpush1.msra.mxu0 0.0
  %4399 = vmatprep.subr.mxu0 0.0
  %4400 = vmatpush1.msra.mxu0 0.0
  %4401 = vmatprep.subr.mxu0 0.0
  %4402 = vmatpush1.msra.mxu0 0.0
  %4403 = vmatprep.subr.mxu0 0.0
  %4404 = vmatpush1.msra.mxu0 0.0
  %4405 = vmatprep.subr.mxu0 0.0
  %4406 = vmatpush1.msra.mxu0 0.0
  %4407 = vmatprep.subr.mxu0 0.0
  %4408 = vmatpush1.msra.mxu0 0.0
  %4409 = vmatprep.subr.mxu0 0.0
  %4410 = vmatpush1.msra.mxu0 0.0
  %4411 = vmatprep.subr.mxu0 0.0
  %4412 = vmatpush1.msra.mxu0 0.0
  %4413 = vmatprep.subr.mxu0 0.0
  %4414 = vmatpush1.msra.mxu0 0.0
  %4415 = vmatprep.subr.mxu0 0.0
  %4416 = vmatpush1.msra.mxu0 0.0
  %4417 = vmatprep.subr.mxu0 0.0
  %4418 = vmatpush1.msra.mxu0 0.0
  %4419 = vmatprep.subr.mxu0 0.0
  %4420 = vmatpush1.msra.mxu0 0.0
  %4421 = vmatprep.subr.mxu0 0.0
  %4422 = vmatpush1.msra.mxu0 0.0
  %4423 = vmatprep.subr.mxu0 0.0
  %4424 = vmatpush1.msra.mxu0 0.0
  %4425 = vmatprep.subr.mxu0 0.0
  %4426 = vmatpush1.msra.mxu0 0.0
  %4427 = vmatprep.subr.mxu0 0.0
  %4428 = vmatpush1.msra.mxu0 0.0
  %4429 = vmatprep.subr.mxu0 0.0
  %4430 = vmatpush1.msra.mxu0 0.0
  %4431 = vmatprep.mubr.f32.mxu0 0.0
  %4432 = vmatmul.mubr.f32.gmra.mrb[0].mxu0 %v4365
  %v4433 = vpop.f32.mrb[0].mxu0
  %v4434 = vadd.f32 %v4362, %v4433
  %v4435 = vpop.f32.mrb[0].mxu0
  %4436 = vdwg.mxu0
  %v4437 = vmax.f32 %v4434, 0.0
  %s4438 = scalar_lea.vmem %s15, 64
  %v4439 = vld [vmem:[%s4438] sm:$0xff]
  %v4440 = vld [vmem:[%s4438 + $0x8] sm:$0xff]
  %v4441 = vld [vmem:[%s4438 + $0x10] sm:$0xff]
  %v4442 = vld [vmem:[%s4438 + $0x18] sm:$0xff]
  %v4443 = vld [vmem:[%s4438 + $0x20] sm:$0xff]
  %v4444 = vld [vmem:[%s4438 + $0x28] sm:$0xff]
  %v4445 = vld [vmem:[%s4438 + $0x30] sm:$0xff]
  %v4446 = vld [vmem:[%s4438 + $0x38] sm:$0xff]
  %s4447 = scalar_lea.vmem %s16, 1
  %v4448 = vld [vmem:[%s4447] sm:$0x1]
  %v4450 = vlaneseq
  %v4451 = vshrl.u32 %v4450, 7
  %v4452 = vsub.s32 0, %v4451
  %v4453 = vrot.slane %v4448, %v4452
  %v4456 = vsel %vm2248, %v4437, 0
  %4458 = vmatprep.subr.mxu0 0.0
  %4459 = vmatpush1.msra.mxu0 %v4439
  %4460 = vmatprep.subr.mxu0 0.0
  %4461 = vmatpush1.msra.mxu0 %v4440
  %4462 = vmatprep.subr.mxu0 0.0
  %4463 = vmatpush1.msra.mxu0 %v4441
  %4464 = vmatprep.subr.mxu0 0.0
  %4465 = vmatpush1.msra.mxu0 %v4442
  %4466 = vmatprep.subr.mxu0 0.0
  %4467 = vmatpush1.msra.mxu0 %v4443
  %4468 = vmatprep.subr.mxu0 0.0
  %4469 = vmatpush1.msra.mxu0 %v4444
  %4470 = vmatprep.subr.mxu0 0.0
  %4471 = vmatpush1.msra.mxu0 %v4445
  %4472 = vmatprep.subr.mxu0 0.0
  %4473 = vmatpush1.msra.mxu0 %v4446
  %4474 = vmatprep.subr.mxu0 0.0
  %4475 = vmatpush1.msra.mxu0 0.0
  %4476 = vmatprep.subr.mxu0 0.0
  %4477 = vmatpush1.msra.mxu0 0.0
  %4478 = vmatprep.subr.mxu0 0.0
  %4479 = vmatpush1.msra.mxu0 0.0
  %4480 = vmatprep.subr.mxu0 0.0
  %4481 = vmatpush1.msra.mxu0 0.0
  %4482 = vmatprep.subr.mxu0 0.0
  %4483 = vmatpush1.msra.mxu0 0.0
  %4484 = vmatprep.subr.mxu0 0.0
  %4485 = vmatpush1.msra.mxu0 0.0
  %4486 = vmatprep.subr.mxu0 0.0
  %4487 = vmatpush1.msra.mxu0 0.0
  %4488 = vmatprep.subr.mxu0 0.0
  %4489 = vmatpush1.msra.mxu0 0.0
  %4490 = vmatprep.subr.mxu0 0.0
  %4491 = vmatpush1.msra.mxu0 0.0
  %4492 = vmatprep.subr.mxu0 0.0
  %4493 = vmatpush1.msra.mxu0 0.0
  %4494 = vmatprep.subr.mxu0 0.0
  %4495 = vmatpush1.msra.mxu0 0.0
  %4496 = vmatprep.subr.mxu0 0.0
  %4497 = vmatpush1.msra.mxu0 0.0
  %4498 = vmatprep.subr.mxu0 0.0
  %4499 = vmatpush1.msra.mxu0 0.0
  %4500 = vmatprep.subr.mxu0 0.0
  %4501 = vmatpush1.msra.mxu0 0.0
  %4502 = vmatprep.subr.mxu0 0.0
  %4503 = vmatpush1.msra.mxu0 0.0
  %4504 = vmatprep.subr.mxu0 0.0
  %4505 = vmatpush1.msra.mxu0 0.0
  %4506 = vmatprep.subr.mxu0 0.0
  %4507 = vmatpush1.msra.mxu0 0.0
  %4508 = vmatprep.subr.mxu0 0.0
  %4509 = vmatpush1.msra.mxu0 0.0
  %4510 = vmatprep.subr.mxu0 0.0
  %4511 = vmatpush1.msra.mxu0 0.0
  %4512 = vmatprep.subr.mxu0 0.0
  %4513 = vmatpush1.msra.mxu0 0.0
  %4514 = vmatprep.subr.mxu0 0.0
  %4515 = vmatpush1.msra.mxu0 0.0
  %4516 = vmatprep.subr.mxu0 0.0
  %4517 = vmatpush1.msra.mxu0 0.0
  %4518 = vmatprep.subr.mxu0 0.0
  %4519 = vmatpush1.msra.mxu0 0.0
  %4520 = vmatprep.subr.mxu0 0.0
  %4521 = vmatpush1.msra.mxu0 0.0
  %4522 = vmatprep.mubr.f32.mxu0 0.0
  %4523 = vmatmul.mubr.f32.gmra.mrb[0].mxu0 %v4456
  %v4524 = vpop.f32.mrb[0].mxu0
  %v4525 = vadd.f32 %v4453, %v4524
  %v4526 = vpop.f32.mrb[0].mxu0
  %4527 = vdwg.mxu0
  %v4528 = vadd.f32 %v4350, %v4525
  %v4529 = vsel %vm2117, %v4528, 0.0
  %4530 = vadd.xlane.f32.xlu0 %v4529
  %v4531 = vpop.xlane.xlu0 %4530
  %v4532 = vmul.f32 %v4531, %v2121
  %v4533 = vsub.f32 %v4528, %v4532
  %v4534 = vmul.f32 %v4533, %v4533
  %v4535 = vsel %vm2117, %v4534, 0.0
  %4536 = vadd.xlane.f32.xlu0 %v4535
  %v4537 = vpop.xlane.xlu0 %4536
  %v4538 = vmul.f32 %v4537, %v2121
  %v4539 = vadd.f32 %v4538, 1e-05
  %v4540 = vrsqrt.pop %v4539
  %v4541 = vmul.f32 %v4533, %v4540
  %s4542 = scalar_lea.vmem %s17, 1
  %v4543 = vld [vmem:[%s4542] sm:$0x1]
  %v4545 = vlaneseq
  %v4546 = vshrl.u32 %v4545, 7
  %v4547 = vsub.s32 0, %v4546
  %v4548 = vrot.slane %v4543, %v4547
  %v4550 = vmul.f32 %v4541, %v4548
  %s4551 = scalar_lea.vmem %s18, 1
  %v4552 = vld [vmem:[%s4551] sm:$0x1]
  %v4554 = vlaneseq
  %v4555 = vshrl.u32 %v4554, 7
  %v4556 = vsub.s32 0, %v4555
  %v4557 = vrot.slane %v4552, %v4556
  %v4559 = vadd.f32 %v4550, %v4557
  %v4560 = vld [vmem:[%s19] sm:$0xff]
  %v4561 = vld [vmem:[%s19 + $0x8] sm:$0xff]
  %v4562 = vld [vmem:[%s19 + $0x10] sm:$0xff]
  %v4563 = vld [vmem:[%s19 + $0x18] sm:$0xff]
  %v4564 = vld [vmem:[%s20] sm:$0x1]
  %v4566 = vlaneseq
  %v4567 = vshrl.u32 %v4566, 7
  %v4568 = vsub.s32 0, %v4567
  %v4569 = vrot.slane %v4564, %v4568
  %v4572 = vsel %vm164, %v4559, 0
  %4574 = vmatprep.subr.mxu0 0.0
  %4575 = vmatpush1.msra.mxu0 %v4560
  %4576 = vmatprep.subr.mxu0 0.0
  %4577 = vmatpush1.msra.mxu0 %v4561
  %4578 = vmatprep.subr.mxu0 0.0
  %4579 = vmatpush1.msra.mxu0 %v4562
  %4580 = vmatprep.subr.mxu0 0.0
  %4581 = vmatpush1.msra.mxu0 %v4563
  %4582 = vmatprep.subr.mxu0 0.0
  %4583 = vmatpush1.msra.mxu0 0.0
  %4584 = vmatprep.subr.mxu0 0.0
  %4585 = vmatpush1.msra.mxu0 0.0
  %4586 = vmatprep.subr.mxu0 0.0
  %4587 = vmatpush1.msra.mxu0 0.0
  %4588 = vmatprep.subr.mxu0 0.0
  %4589 = vmatpush1.msra.mxu0 0.0
  %4590 = vmatprep.subr.mxu0 0.0
  %4591 = vmatpush1.msra.mxu0 0.0
  %4592 = vmatprep.subr.mxu0 0.0
  %4593 = vmatpush1.msra.mxu0 0.0
  %4594 = vmatprep.subr.mxu0 0.0
  %4595 = vmatpush1.msra.mxu0 0.0
  %4596 = vmatprep.subr.mxu0 0.0
  %4597 = vmatpush1.msra.mxu0 0.0
  %4598 = vmatprep.subr.mxu0 0.0
  %4599 = vmatpush1.msra.mxu0 0.0
  %4600 = vmatprep.subr.mxu0 0.0
  %4601 = vmatpush1.msra.mxu0 0.0
  %4602 = vmatprep.subr.mxu0 0.0
  %4603 = vmatpush1.msra.mxu0 0.0
  %4604 = vmatprep.subr.mxu0 0.0
  %4605 = vmatpush1.msra.mxu0 0.0
  %4606 = vmatprep.subr.mxu0 0.0
  %4607 = vmatpush1.msra.mxu0 0.0
  %4608 = vmatprep.subr.mxu0 0.0
  %4609 = vmatpush1.msra.mxu0 0.0
  %4610 = vmatprep.subr.mxu0 0.0
  %4611 = vmatpush1.msra.mxu0 0.0
  %4612 = vmatprep.subr.mxu0 0.0
  %4613 = vmatpush1.msra.mxu0 0.0
  %4614 = vmatprep.subr.mxu0 0.0
  %4615 = vmatpush1.msra.mxu0 0.0
  %4616 = vmatprep.subr.mxu0 0.0
  %4617 = vmatpush1.msra.mxu0 0.0
  %4618 = vmatprep.subr.mxu0 0.0
  %4619 = vmatpush1.msra.mxu0 0.0
  %4620 = vmatprep.subr.mxu0 0.0
  %4621 = vmatpush1.msra.mxu0 0.0
  %4622 = vmatprep.subr.mxu0 0.0
  %4623 = vmatpush1.msra.mxu0 0.0
  %4624 = vmatprep.subr.mxu0 0.0
  %4625 = vmatpush1.msra.mxu0 0.0
  %4626 = vmatprep.subr.mxu0 0.0
  %4627 = vmatpush1.msra.mxu0 0.0
  %4628 = vmatprep.subr.mxu0 0.0
  %4629 = vmatpush1.msra.mxu0 0.0
  %4630 = vmatprep.subr.mxu0 0.0
  %4631 = vmatpush1.msra.mxu0 0.0
  %4632 = vmatprep.subr.mxu0 0.0
  %4633 = vmatpush1.msra.mxu0 0.0
  %4634 = vmatprep.subr.mxu0 0.0
  %4635 = vmatpush1.msra.mxu0 0.0
  %4636 = vmatprep.subr.mxu0 0.0
  %4637 = vmatpush1.msra.mxu0 0.0
  %4638 = vmatprep.mubr.f32.mxu0 0.0
  %4639 = vmatmul.mubr.f32.gmra.mrb[0].mxu0 %v4572
  %v4640 = vpop.f32.mrb[0].mxu0
  %v4641 = vadd.f32 %v4569, %v4640
  %v4642 = vpop.f32.mrb[0].mxu0
  %4643 = vdwg.mxu0
  %4644 = vst [vmem:[%s21] sm:$0x3] %v4641
  // Predicated region
  $region86: #{transformer_model_forward.1} parent=0 // pred_check
    _
  $region87: #{transformer_model_forward.1} parent=0 // pred_check_branch
    %4646 = sbr.rel (0) target = $region89
  $region88: #{transformer_model_forward.1} parent=0 // pred_region
    _
  $region89: #{transformer_model_forward.1} parent=0 // pred_fallthru
    _
  // Predicated region
  $region90: #{transformer_model_forward.1} parent=0 // pred_check
    _
  $region91: #{transformer_model_forward.1} parent=0 // pred_check_branch
    %4648 = sbr.rel (0) target = $region93
  $region92: #{transformer_model_forward.1} parent=0 // pred_region
    _
  $region93: #{transformer_model_forward.1} parent=0 // pred_fallthru
    _

</llo_original>
